<compile_context>
chip_gen: v5e
topology: v5e:2x2
jax: 0.10.0
libtpu: 0.0.40
codegen_flags: <defaults>
</compile_context>

<pallas_src>
import functools

import jax
import jax.numpy as jnp
from jax.experimental import pallas as pl
from jax.experimental.pallas import tpu as pltpu


# ----------------------------------------------------------------------------
# Kernel 1: fused fc + deconv1.  deconv1 has a 1x1 spatial input, so it is a
# pure matmul; chain (B,L)@(L,1024) then @(1024, k*k*128) keeping the 1024-wide
# intermediate in registers.  Output is the pre-bias deconv1 activation laid
# out (kh,kw,co)-major (lane-dense); its bias+ReLU are applied by the next
# layer's kernel prologue.
# ----------------------------------------------------------------------------
def _fc_deconv1_kernel(x_ref, fcw_ref, fcb_ref, w1_ref, o_ref):
    h = jnp.dot(x_ref[...], fcw_ref[...], preferred_element_type=jnp.float32)
    h = (h + fcb_ref[...]).astype(jnp.bfloat16)
    o = jnp.dot(h, w1_ref[...], preferred_element_type=jnp.float32)
    o_ref[...] = o.astype(o_ref.dtype)


def fc_deconv1(x, fcw, fcb, w1m):
    """x:(B,L) f32, fcw:(L,1024) bf16, fcb:(1,1024) f32, w1m:(1024,N1) bf16."""
    B, L = x.shape
    _, H = fcw.shape
    _, N1 = w1m.shape
    # N tile: largest divisor of N1 that is a multiple of 128 -> multi-step
    # "parallel" grid (megacore-shardable on v7x).  For N1=3200 -> tn=640.
    tn = N1
    for cand in (1024, 896, 768, 640, 512, 384, 256, 128):
        if N1 % cand == 0:
            tn = cand
            break
    x = x.astype(jnp.bfloat16)
    return pl.pallas_call(
        _fc_deconv1_kernel,
        out_shape=jax.ShapeDtypeStruct((B, N1), jnp.float32),
        grid=(N1 // tn,),
        in_specs=[
            pl.BlockSpec((B, L), lambda j: (0, 0)),
            pl.BlockSpec((L, H), lambda j: (0, 0)),
            pl.BlockSpec((1, H), lambda j: (0, 0)),
            pl.BlockSpec((H, tn), lambda j: (0, j)),
        ],
        out_specs=pl.BlockSpec((B, tn), lambda j: (0, j)),
        compiler_params=pltpu.CompilerParams(
            dimension_semantics=("parallel",)),
    )(x, fcw, fcb, w1m)


# ----------------------------------------------------------------------------
# Kernel 2: fused (previous layer bias + ReLU) -> bf16 -> matmul with the
# (Cin, k*k*Cout) deconv weight.  Output lane dim is k*k*Cout (lane-dense),
# accumulation in f32.
# ----------------------------------------------------------------------------
def _deconv_matmul_kernel(x_ref, b_ref, w_ref, o_ref):
    x = jnp.maximum(x_ref[...] + b_ref[...], 0.0).astype(jnp.bfloat16)
    o = jnp.dot(x, w_ref[...], preferred_element_type=jnp.float32)
    o_ref[...] = o.astype(o_ref.dtype)


def _choose_tm(M):
    """Row-tile size minimizing M padding (small layers: one exact block)."""
    m8 = -(-M // 8) * 8
    if m8 <= 512:
        return m8, m8
    best_tm, best_mp = None, None
    for tm in (512, 384, 256, 128):
        mp = -(-M // tm) * tm
        if best_mp is None or mp < best_mp:
            best_tm, best_mp = tm, mp
    return best_tm, best_mp


def deconv_matmul(x_flat, in_bias, wmat):
    """y = relu(x_flat + in_bias) @ wmat.  x_flat:(M,Cin) f32, wmat:(Cin,Np) bf16."""
    M, Cin = x_flat.shape
    _, Np = wmat.shape
    tm, Mp = _choose_tm(M)
    if Mp != M:
        x_flat = jnp.pad(x_flat, ((0, Mp - M), (0, 0)))
    y = pl.pallas_call(
        _deconv_matmul_kernel,
        out_shape=jax.ShapeDtypeStruct((Mp, Np), jnp.float32),
        grid=(Mp // tm,),
        in_specs=[
            pl.BlockSpec((tm, Cin), lambda i: (i, 0)),
            pl.BlockSpec((1, Cin), lambda i: (0, 0)),
            pl.BlockSpec((Cin, Np), lambda i: (0, 0)),
        ],
        out_specs=pl.BlockSpec((tm, Np), lambda i: (i, 0)),
        compiler_params=pltpu.CompilerParams(
            dimension_semantics=("parallel",)),
    )(x_flat, in_bias, wmat)
    return y[:M]


# ----------------------------------------------------------------------------
# Dense col2im: fold Y:(B*Hin*Win, >= k*k*Cout) back to the spatial output
# (B, Hout, Wout, Cout) summing overlaps (pre-bias, pre-activation).
# Sub-pixel phase interleave: only pads / adds / reshapes on small slabs.
# TODO(synk): could fold this overlap-add into the matmul kernel's output path;
# kept as tiny dense XLA glue (no scatters) since the slab is a few 100 KiB.
# ----------------------------------------------------------------------------
def col2im(y, B, Hin, Win, k, Cout, stride):
    Hout = (Hin - 1) * stride + k
    Wout = (Win - 1) * stride + k
    q = -(-k // stride)          # taps per output phase
    kp = q * stride              # kernel size padded up to a multiple of stride
    Hp = Hin + q - 1
    Wp = Win + q - 1
    y = y[:, :k * k * Cout].reshape(B, Hin, Win, k, k, Cout)
    if kp != k:
        y = jnp.pad(y, ((0, 0), (0, 0), (0, 0), (0, kp - k), (0, kp - k), (0, 0)))
    # kh = stride*qh + r, kw = stride*qw + c
    y = y.reshape(B, Hin, Win, q, stride, q, stride, Cout)
    acc = jnp.zeros((B, Hp, stride, Wp, stride, Cout), jnp.float32)
    for qh in range(q):
        for qw in range(q):
            c = jnp.transpose(y[:, :, :, qh, :, qw, :, :], (0, 1, 3, 2, 4, 5))
            acc = acc + jnp.pad(
                c, ((0, 0), (qh, Hp - Hin - qh), (0, 0),
                    (qw, Wp - Win - qw), (0, 0), (0, 0)))
    out = acc.reshape(B, Hp * stride, Wp * stride, Cout)
    return out[:, :Hout, :Wout, :]


# ----------------------------------------------------------------------------
# Parameter repack (done once, outside jit)
# ----------------------------------------------------------------------------
def _wmat(w):
    """(Cin,Cout,k,k) ConvTranspose2d weight -> (Cin, k*k*Cout) bf16, (kh,kw,co) order."""
    Cin, Cout, k, _ = w.shape
    return jnp.transpose(w, (0, 2, 3, 1)).reshape(Cin, k * k * Cout).astype(jnp.bfloat16)


def prepare_decoder_params(params):
    def pad_lanes(m):
        npad = (-m.shape[1]) % 128
        return jnp.pad(m, ((0, 0), (0, npad))) if npad else m

    prep = {
        "fcw": params["fc_w"].astype(jnp.bfloat16),      # (L, 1024)
        "fcb": params["fc_b"].reshape(1, -1),            # (1, 1024) f32
        "w1": _wmat(params["d1_w"]),                     # (1024, 5*5*128)
        "b1": params["d1_b"].reshape(1, -1),             # consumed by deconv2 prologue
        "w2": pad_lanes(_wmat(params["d2_w"])),          # (128, 1600)
        "b2": params["d2_b"].reshape(1, -1),
        "w3": pad_lanes(_wmat(params["d3_w"])),          # (64, 1152)
        "b3": params["d3_b"].reshape(1, -1),
        "w4": pad_lanes(_wmat(params["d4_w"])),          # (32, 108 -> 128)
        "b4": params["d4_b"],                            # final sigmoid bias
    }
    k1, c1 = params["d1_w"].shape[2], params["d1_w"].shape[1]
    deconv_meta = tuple((params[n].shape[2], params[n].shape[1])
                        for n in ("d2_w", "d3_w", "d4_w"))
    return prep, ((k1, c1), deconv_meta)


# ----------------------------------------------------------------------------
# Decoder forward
# ----------------------------------------------------------------------------
def decoder_forward(prep, x, *, meta, stride=2):
    (k1, c1), deconv_meta = meta
    B = x.shape[0]

    # fc + deconv1 fused -> pre-bias deconv1 activation, NHWC (B,5,5,128).
    h = fc_deconv1(x, prep["fcw"], prep["fcb"], prep["w1"]).reshape(B, k1, k1, c1)

    layers = ((prep["b1"], prep["w2"]),
              (prep["b2"], prep["w3"]),
              (prep["b3"], prep["w4"]))
    for (in_bias, wmat), (k, cout) in zip(layers, deconv_meta):
        Bh, Hin, Win, Cin = h.shape
        y = deconv_matmul(h.reshape(Bh * Hin * Win, Cin), in_bias, wmat)
        h = col2im(y, Bh, Hin, Win, k, cout, stride)     # pre-bias NHWC

    # Final bias + sigmoid + NCHW: tiny elementwise tail, left in XLA on purpose.
    out = jax.nn.sigmoid(h + prep["b4"])
    return jnp.transpose(out, (0, 3, 1, 2))


# ----------------------------------------------------------------------------
# Deterministic synthetic parameters (shapes from Decoder.__init__)
# ----------------------------------------------------------------------------
def init_params(key, latent_dim, image_channels):
    ks = jax.random.split(key, 10)
    s = 0.05
    n = lambda k, shape: jax.random.normal(k, shape, jnp.float32) * s
    return {
        "fc_w": n(ks[0], (latent_dim, 1024)),            # Linear weight (stored transposed)
        "fc_b": n(ks[1], (1024,)),
        "d1_w": n(ks[2], (1024, 128, 5, 5)),             # ConvTranspose2d: (Cin, Cout, k, k)
        "d1_b": n(ks[3], (128,)),
        "d2_w": n(ks[4], (128, 64, 5, 5)),
        "d2_b": n(ks[5], (64,)),
        "d3_w": n(ks[6], (64, 32, 6, 6)),
        "d3_b": n(ks[7], (32,)),
        "d4_w": n(ks[8], (32, image_channels, 6, 6)),
        "d4_b": n(ks[9], (image_channels,)),
    }


# ----------------------------------------------------------------------------
# Independent f32 reference (pure JAX / XLA) for a numerical sanity check
# ----------------------------------------------------------------------------
def _reference_decoder(params, x, stride=2):
    hi = jax.lax.Precision.HIGHEST

    def conv_t(h, w, b):
        B, Hin, Win, Cin = h.shape
        _, Cout, k, _ = w.shape
        Hout = (Hin - 1) * stride + k
        Wout = (Win - 1) * stride + k
        y = jnp.einsum("bhwc,codf->bhwdfo", h, w, precision=hi)  # (B,Hin,Win,k,k,Cout)
        out = jnp.zeros((B, Hout, Wout, Cout), jnp.float32)
        for kh in range(k):
            for kw in range(k):
                out = out.at[:, kh:kh + (Hin - 1) * stride + 1:stride,
                                kw:kw + (Win - 1) * stride + 1:stride, :].add(
                    y[:, :, :, kh, kw, :])
        return out + b

    h = jnp.dot(x, params["fc_w"], precision=hi) + params["fc_b"]
    h = h.reshape(x.shape[0], 1, 1, -1)
    h = jax.nn.relu(conv_t(h, params["d1_w"], params["d1_b"]))
    h = jax.nn.relu(conv_t(h, params["d2_w"], params["d2_b"]))
    h = jax.nn.relu(conv_t(h, params["d3_w"], params["d3_b"]))
    h = jax.nn.sigmoid(conv_t(h, params["d4_w"], params["d4_b"]))
    return jnp.transpose(h, (0, 3, 1, 2))


if __name__ == "__main__":
    LATENT = 32
    IMG_CH = 3
    BATCH = 2

    key = jax.random.PRNGKey(0)
    k_in, k_par = jax.random.split(key)
    x = jax.random.normal(k_in, (BATCH, LATENT), jnp.float32)
    params = init_params(k_par, LATENT, IMG_CH)

    prep, meta = prepare_decoder_params(params)           # one-time weight repack
    fwd = jax.jit(functools.partial(decoder_forward, meta=meta))

    out = jax.block_until_ready(fwd(prep, x))
    assert out.shape == (BATCH, IMG_CH, 64, 64), out.shape
    assert out.dtype == jnp.float32

    ref = jax.block_until_ready(jax.jit(_reference_decoder)(params, x))
    max_diff = float(jnp.max(jnp.abs(out - ref)))
    assert max_diff < 5e-2, f"mismatch vs reference: {max_diff}"

    print("KERNEL_OK")
</pallas_src>

<mosaic_0001>
module attributes {stable_mosaic.version = 11 : i64} {
  func.func @_fc_deconv1_kernel(%arg0: i32, %arg1: memref<2x32xbf16, #tpu.memory_space<vmem>>, %arg2: memref<32x1024xbf16, #tpu.memory_space<vmem>>, %arg3: memref<1x1024xf32, #tpu.memory_space<vmem>>, %arg4: memref<1024x640xbf16, #tpu.memory_space<vmem>>, %arg5: memref<2x640xf32, #tpu.memory_space<vmem>>) attributes {dimension_semantics = [#tpu.dimension_semantics<parallel>], iteration_bounds = array<i64: 5>, scalar_prefetch = 0 : i64, scratch_operands = 0 : i64, tpu.core_type = #tpu.core_type<tc>, window_params = [{pipeline_mode = #tpu.pipeline_mode<synchronous>, transform_indices = @transform_0, window_bounds = array<i64: 2, 32>}, {pipeline_mode = #tpu.pipeline_mode<synchronous>, transform_indices = @transform_1, window_bounds = array<i64: 32, 1024>}, {pipeline_mode = #tpu.pipeline_mode<synchronous>, transform_indices = @transform_2, window_bounds = array<i64: 1, 1024>}, {transform_indices = @transform_3, window_bounds = array<i64: 1024, 640>}, {transform_indices = @transform_4, window_bounds = array<i64: 2, 640>}]} {
    %c0 = arith.constant 0 : index
    %c0_0 = arith.constant 0 : index
    %0 = vector.load %arg1[%c0, %c0_0] : memref<2x32xbf16, #tpu.memory_space<vmem>>, vector<2x32xbf16>
    %c0_1 = arith.constant 0 : index
    %c0_2 = arith.constant 0 : index
    %1 = vector.load %arg2[%c0_1, %c0_2] : memref<32x1024xbf16, #tpu.memory_space<vmem>>, vector<32x1024xbf16>
    %cst = arith.constant dense<0.000000e+00> : vector<2x1024xf32>
    %2 = tpu.matmul %0, %1, %cst {dimension_numbers = #tpu.dot_dimension_numbers<[1], [0], [0], [1], [0, 0, 1, 1], [], []>} : vector<2x32xbf16>, vector<32x1024xbf16>, vector<2x1024xf32> -> vector<2x1024xf32>
    %c0_3 = arith.constant 0 : index
    %c0_4 = arith.constant 0 : index
    %3 = vector.load %arg3[%c0_3, %c0_4] : memref<1x1024xf32, #tpu.memory_space<vmem>>, vector<1x1024xf32>
    %4 = vector.broadcast %3 : vector<1x1024xf32> to vector<2x1024xf32>
    %5 = arith.addf %2, %4 : vector<2x1024xf32>
    %6 = arith.truncf %5 : vector<2x1024xf32> to vector<2x1024xbf16>
    %c0_5 = arith.constant 0 : index
    %c0_6 = arith.constant 0 : index
    %7 = vector.load %arg4[%c0_5, %c0_6] : memref<1024x640xbf16, #tpu.memory_space<vmem>>, vector<1024x640xbf16>
    %cst_7 = arith.constant dense<0.000000e+00> : vector<2x640xf32>
    %8 = tpu.matmul %6, %7, %cst_7 {dimension_numbers = #tpu.dot_dimension_numbers<[1], [0], [0], [1], [0, 0, 1, 1], [], []>} : vector<2x1024xbf16>, vector<1024x640xbf16>, vector<2x640xf32> -> vector<2x640xf32>
    %c0_8 = arith.constant 0 : index
    %c0_9 = arith.constant 0 : index
    %9 = vector.load %arg5[%c0_8, %c0_9] : memref<2x640xf32, #tpu.memory_space<vmem>>, vector<2x640xf32>
    tpu.vector_store %arg5[%c0_8, %c0_9], %8 {strides = array<i32>} : memref<2x640xf32, #tpu.memory_space<vmem>>, vector<2x640xf32>,
    return
  }
  func.func @transform_0(%arg0: i32) -> (i32, i32) {
    %c0_i32 = arith.constant 0 : i32
    %c0_i32_0 = arith.constant 0 : i32
    %c0_i32_1 = arith.constant 0 : i32
    return %c0_i32, %c0_i32_0 : i32, i32
  }
  func.func @transform_1(%arg0: i32) -> (i32, i32) {
    %c0_i32 = arith.constant 0 : i32
    %c0_i32_0 = arith.constant 0 : i32
    %c0_i32_1 = arith.constant 0 : i32
    return %c0_i32, %c0_i32_0 : i32, i32
  }
  func.func @transform_2(%arg0: i32) -> (i32, i32) {
    %c0_i32 = arith.constant 0 : i32
    %c0_i32_0 = arith.constant 0 : i32
    %c0_i32_1 = arith.constant 0 : i32
    return %c0_i32, %c0_i32_0 : i32, i32
  }
  func.func @transform_3(%arg0: i32) -> (i32, i32) {
    %c0_i32 = arith.constant 0 : i32
    %c0_i32_0 = arith.constant 0 : i32
    return %c0_i32, %arg0 : i32, i32
  }
  func.func @transform_4(%arg0: i32) -> (i32, i32) {
    %c0_i32 = arith.constant 0 : i32
    %c0_i32_0 = arith.constant 0 : i32
    return %c0_i32, %arg0 : i32, i32
  }
}

module attributes {stable_mosaic.version = 11 : i64} {
  func.func @_deconv_matmul_kernel(%arg0: i32, %arg1: memref<56x128xf32, #tpu.memory_space<vmem>>, %arg2: memref<1x128xf32, #tpu.memory_space<vmem>>, %arg3: memref<128x1664xbf16, #tpu.memory_space<vmem>>, %arg4: memref<56x1664xf32, #tpu.memory_space<vmem>>) attributes {dimension_semantics = [#tpu.dimension_semantics<parallel>], iteration_bounds = array<i64: 1>, scalar_prefetch = 0 : i64, scratch_operands = 0 : i64, tpu.core_type = #tpu.core_type<tc>, window_params = [{transform_indices = @transform_0, window_bounds = array<i64: 56, 128>}, {pipeline_mode = #tpu.pipeline_mode<synchronous>, transform_indices = @transform_1, window_bounds = array<i64: 1, 128>}, {pipeline_mode = #tpu.pipeline_mode<synchronous>, transform_indices = @transform_2, window_bounds = array<i64: 128, 1664>}, {transform_indices = @transform_3, window_bounds = array<i64: 56, 1664>}]} {
    %c0 = arith.constant 0 : index
    %c0_0 = arith.constant 0 : index
    %0 = vector.load %arg1[%c0, %c0_0] : memref<56x128xf32, #tpu.memory_space<vmem>>, vector<56x128xf32>
    %c0_1 = arith.constant 0 : index
    %c0_2 = arith.constant 0 : index
    %1 = vector.load %arg2[%c0_1, %c0_2] : memref<1x128xf32, #tpu.memory_space<vmem>>, vector<1x128xf32>
    %2 = vector.broadcast %1 : vector<1x128xf32> to vector<56x128xf32>
    %3 = arith.addf %0, %2 : vector<56x128xf32>
    %cst = arith.constant 0.000000e+00 : f32
    %4 = vector.broadcast %cst : f32 to vector<56x128xf32>
    %5 = arith.maximumf %3, %4 : vector<56x128xf32>
    %6 = arith.truncf %5 : vector<56x128xf32> to vector<56x128xbf16>
    %c0_3 = arith.constant 0 : index
    %c0_4 = arith.constant 0 : index
    %7 = vector.load %arg3[%c0_3, %c0_4] : memref<128x1664xbf16, #tpu.memory_space<vmem>>, vector<128x1664xbf16>
    %cst_5 = arith.constant dense<0.000000e+00> : vector<56x1664xf32>
    %8 = tpu.matmul %6, %7, %cst_5 {dimension_numbers = #tpu.dot_dimension_numbers<[1], [0], [0], [1], [0, 0, 1, 1], [], []>} : vector<56x128xbf16>, vector<128x1664xbf16>, vector<56x1664xf32> -> vector<56x1664xf32>
    %c0_6 = arith.constant 0 : index
    %c0_7 = arith.constant 0 : index
    %9 = vector.load %arg4[%c0_6, %c0_7] : memref<56x1664xf32, #tpu.memory_space<vmem>>, vector<56x1664xf32>
    tpu.vector_store %arg4[%c0_6, %c0_7], %8 {strides = array<i32>} : memref<56x1664xf32, #tpu.memory_space<vmem>>, vector<56x1664xf32>,
    return
  }
  func.func @transform_0(%arg0: i32) -> (i32, i32) {
    %c0_i32 = arith.constant 0 : i32
    %c0_i32_0 = arith.constant 0 : i32
    return %arg0, %c0_i32 : i32, i32
  }
  func.func @transform_1(%arg0: i32) -> (i32, i32) {
    %c0_i32 = arith.constant 0 : i32
    %c0_i32_0 = arith.constant 0 : i32
    %c0_i32_1 = arith.constant 0 : i32
    return %c0_i32, %c0_i32_0 : i32, i32
  }
  func.func @transform_2(%arg0: i32) -> (i32, i32) {
    %c0_i32 = arith.constant 0 : i32
    %c0_i32_0 = arith.constant 0 : i32
    %c0_i32_1 = arith.constant 0 : i32
    return %c0_i32, %c0_i32_0 : i32, i32
  }
  func.func @transform_3(%arg0: i32) -> (i32, i32) {
    %c0_i32 = arith.constant 0 : i32
    %c0_i32_0 = arith.constant 0 : i32
    return %arg0, %c0_i32 : i32, i32
  }
}

module attributes {stable_mosaic.version = 11 : i64} {
  func.func @_deconv_matmul_kernel(%arg0: i32, %arg1: memref<344x64xf32, #tpu.memory_space<vmem>>, %arg2: memref<1x64xf32, #tpu.memory_space<vmem>>, %arg3: memref<64x1152xbf16, #tpu.memory_space<vmem>>, %arg4: memref<344x1152xf32, #tpu.memory_space<vmem>>) attributes {dimension_semantics = [#tpu.dimension_semantics<parallel>], iteration_bounds = array<i64: 1>, scalar_prefetch = 0 : i64, scratch_operands = 0 : i64, tpu.core_type = #tpu.core_type<tc>, window_params = [{transform_indices = @transform_0, window_bounds = array<i64: 344, 64>}, {pipeline_mode = #tpu.pipeline_mode<synchronous>, transform_indices = @transform_1, window_bounds = array<i64: 1, 64>}, {pipeline_mode = #tpu.pipeline_mode<synchronous>, transform_indices = @transform_2, window_bounds = array<i64: 64, 1152>}, {transform_indices = @transform_3, window_bounds = array<i64: 344, 1152>}]} {
    %c0 = arith.constant 0 : index
    %c0_0 = arith.constant 0 : index
    %0 = vector.load %arg1[%c0, %c0_0] : memref<344x64xf32, #tpu.memory_space<vmem>>, vector<344x64xf32>
    %c0_1 = arith.constant 0 : index
    %c0_2 = arith.constant 0 : index
    %1 = vector.load %arg2[%c0_1, %c0_2] : memref<1x64xf32, #tpu.memory_space<vmem>>, vector<1x64xf32>
    %2 = vector.broadcast %1 : vector<1x64xf32> to vector<344x64xf32>
    %3 = arith.addf %0, %2 : vector<344x64xf32>
    %cst = arith.constant 0.000000e+00 : f32
    %4 = vector.broadcast %cst : f32 to vector<344x64xf32>
    %5 = arith.maximumf %3, %4 : vector<344x64xf32>
    %6 = arith.truncf %5 : vector<344x64xf32> to vector<344x64xbf16>
    %c0_3 = arith.constant 0 : index
    %c0_4 = arith.constant 0 : index
    %7 = vector.load %arg3[%c0_3, %c0_4] : memref<64x1152xbf16, #tpu.memory_space<vmem>>, vector<64x1152xbf16>
    %cst_5 = arith.constant dense<0.000000e+00> : vector<344x1152xf32>
    %8 = tpu.matmul %6, %7, %cst_5 {dimension_numbers = #tpu.dot_dimension_numbers<[1], [0], [0], [1], [0, 0, 1, 1], [], []>} : vector<344x64xbf16>, vector<64x1152xbf16>, vector<344x1152xf32> -> vector<344x1152xf32>
    %c0_6 = arith.constant 0 : index
    %c0_7 = arith.constant 0 : index
    %9 = vector.load %arg4[%c0_6, %c0_7] : memref<344x1152xf32, #tpu.memory_space<vmem>>, vector<344x1152xf32>
    tpu.vector_store %arg4[%c0_6, %c0_7], %8 {strides = array<i32>} : memref<344x1152xf32, #tpu.memory_space<vmem>>, vector<344x1152xf32>,
    return
  }
  func.func @transform_0(%arg0: i32) -> (i32, i32) {
    %c0_i32 = arith.constant 0 : i32
    %c0_i32_0 = arith.constant 0 : i32
    return %arg0, %c0_i32 : i32, i32
  }
  func.func @transform_1(%arg0: i32) -> (i32, i32) {
    %c0_i32 = arith.constant 0 : i32
    %c0_i32_0 = arith.constant 0 : i32
    %c0_i32_1 = arith.constant 0 : i32
    return %c0_i32, %c0_i32_0 : i32, i32
  }
  func.func @transform_2(%arg0: i32) -> (i32, i32) {
    %c0_i32 = arith.constant 0 : i32
    %c0_i32_0 = arith.constant 0 : i32
    %c0_i32_1 = arith.constant 0 : i32
    return %c0_i32, %c0_i32_0 : i32, i32
  }
  func.func @transform_3(%arg0: i32) -> (i32, i32) {
    %c0_i32 = arith.constant 0 : i32
    %c0_i32_0 = arith.constant 0 : i32
    return %arg0, %c0_i32 : i32, i32
  }
}

module attributes {stable_mosaic.version = 11 : i64} {
  func.func @_deconv_matmul_kernel(%arg0: i32, %arg1: memref<384x32xf32, #tpu.memory_space<vmem>>, %arg2: memref<1x32xf32, #tpu.memory_space<vmem>>, %arg3: memref<32x128xbf16, #tpu.memory_space<vmem>>, %arg4: memref<384x128xf32, #tpu.memory_space<vmem>>) attributes {dimension_semantics = [#tpu.dimension_semantics<parallel>], iteration_bounds = array<i64: 5>, scalar_prefetch = 0 : i64, scratch_operands = 0 : i64, tpu.core_type = #tpu.core_type<tc>, window_params = [{transform_indices = @transform_0, window_bounds = array<i64: 384, 32>}, {pipeline_mode = #tpu.pipeline_mode<synchronous>, transform_indices = @transform_1, window_bounds = array<i64: 1, 32>}, {pipeline_mode = #tpu.pipeline_mode<synchronous>, transform_indices = @transform_2, window_bounds = array<i64: 32, 128>}, {transform_indices = @transform_3, window_bounds = array<i64: 384, 128>}]} {
    %c0 = arith.constant 0 : index
    %c0_0 = arith.constant 0 : index
    %0 = vector.load %arg1[%c0, %c0_0] : memref<384x32xf32, #tpu.memory_space<vmem>>, vector<384x32xf32>
    %c0_1 = arith.constant 0 : index
    %c0_2 = arith.constant 0 : index
    %1 = vector.load %arg2[%c0_1, %c0_2] : memref<1x32xf32, #tpu.memory_space<vmem>>, vector<1x32xf32>
    %2 = vector.broadcast %1 : vector<1x32xf32> to vector<384x32xf32>
    %3 = arith.addf %0, %2 : vector<384x32xf32>
    %cst = arith.constant 0.000000e+00 : f32
    %4 = vector.broadcast %cst : f32 to vector<384x32xf32>
    %5 = arith.maximumf %3, %4 : vector<384x32xf32>
    %6 = arith.truncf %5 : vector<384x32xf32> to vector<384x32xbf16>
    %c0_3 = arith.constant 0 : index
    %c0_4 = arith.constant 0 : index
    %7 = vector.load %arg3[%c0_3, %c0_4] : memref<32x128xbf16, #tpu.memory_space<vmem>>, vector<32x128xbf16>
    %cst_5 = arith.constant dense<0.000000e+00> : vector<384x128xf32>
    %8 = tpu.matmul %6, %7, %cst_5 {dimension_numbers = #tpu.dot_dimension_numbers<[1], [0], [0], [1], [0, 0, 1, 1], [], []>} : vector<384x32xbf16>, vector<32x128xbf16>, vector<384x128xf32> -> vector<384x128xf32>
    %c0_6 = arith.constant 0 : index
    %c0_7 = arith.constant 0 : index
    %9 = vector.load %arg4[%c0_6, %c0_7] : memref<384x128xf32, #tpu.memory_space<vmem>>, vector<384x128xf32>
    tpu.vector_store %arg4[%c0_6, %c0_7], %8 {strides = array<i32>} : memref<384x128xf32, #tpu.memory_space<vmem>>, vector<384x128xf32>,
    return
  }
  func.func @transform_0(%arg0: i32) -> (i32, i32) {
    %c0_i32 = arith.constant 0 : i32
    %c0_i32_0 = arith.constant 0 : i32
    return %arg0, %c0_i32 : i32, i32
  }
  func.func @transform_1(%arg0: i32) -> (i32, i32) {
    %c0_i32 = arith.constant 0 : i32
    %c0_i32_0 = arith.constant 0 : i32
    %c0_i32_1 = arith.constant 0 : i32
    return %c0_i32, %c0_i32_0 : i32, i32
  }
  func.func @transform_2(%arg0: i32) -> (i32, i32) {
    %c0_i32 = arith.constant 0 : i32
    %c0_i32_0 = arith.constant 0 : i32
    %c0_i32_1 = arith.constant 0 : i32
    return %c0_i32, %c0_i32_0 : i32, i32
  }
  func.func @transform_3(%arg0: i32) -> (i32, i32) {
    %c0_i32 = arith.constant 0 : i32
    %c0_i32_0 = arith.constant 0 : i32
    return %arg0, %c0_i32 : i32, i32
  }
}

</mosaic_0001>

<llo_original>
// kernel: decoder_forward.5
$region0: #{decoder_forward.5}
  #allocation0 [shape = 'u32[]', space=smem, size = 0x4, offset = 0x4, fixed_abs, tag = 'smem constant byte address 0x4 - core index']
  #allocation1 [shape = 'u32[72,128]{1,0:T(1,128)}', space=vmem, size = 0x9000, scoped, tag = 'internal scratch']
  %s0 = inlined_call_operand.vmem [shape: f32[56,128], index: 0, kind: input, shape index: {}]
  %s1 = inlined_call_operand.hbm [shape: f32[1,128], index: 1, kind: input, shape index: {}]
  %s2 = inlined_call_operand.hbm [shape: bf16[128,1664], index: 2, kind: input, shape index: {}]
  %s3 = inlined_call_operand.vmem [shape: f32[56,1664], index: 3, kind: output, shape index: {}]
  %s4 = sld [smem:[#allocation0]]
  $region30: #{decoder_forward.5} parent=0
    _
  %s6 = ssub.s32 1, %s4
  %s7 = scalar_select 0, %s6, %s4
  $region1: #{decoder_forward.5} parent=0
    #allocation2 [shape = 'u8[512]{0}', space=vmem, size = 0x400, scoped, tag = 'input window, operand 1, single buffered']
    #allocation3 [shape = 's32[1]{0}', space=sflag, size = 0x4, scoped, tag = 'scoped memory for decoder_forward.5']
    #allocation4 [shape = 'u8[425984]{0}', space=vmem, size = 0x68000, scoped, tag = 'input window, operand 2, single buffered']
    #allocation5 [shape = 's32[1]{0}', space=sflag, size = 0x4, scoped, tag = 'scoped memory for decoder_forward.5']
    %8 = vsyncpa [#allocation3], 0
    %9 = vsyncpa [#allocation5], 0
    // Predicated region
    $region2: #{decoder_forward.5} parent=1 // pred_check
      _
    $region3: #{decoder_forward.5} parent=1 // pred_check_branch
      %11 = sbr.rel (0) target = $region5
    $region4: #{decoder_forward.5} parent=1 // pred_region
      _
    $region5: #{decoder_forward.5} parent=1 // pred_fallthru
      _
    // Predicated region
    $region6: #{decoder_forward.5} parent=1 // pred_check
      _
    $region7: #{decoder_forward.5} parent=1 // pred_check_branch
      %13 = sbr.rel (0) target = $region9
    $region8: #{decoder_forward.5} parent=1 // pred_region
      %15 = vsyncadd [#allocation3], 0
      %s17 = sshll.u32 %s1, 4
      %s18 = int_to_ptr.hbm [resolvable:$true] %s17
      %s19 = sshll.u32 [#allocation2], 4
      %s20 = int_to_ptr.vmem [resolvable:$true] %s19
      %22 = dma.hbm_to_vmem [thread:$0]  %s18, 16, %s20, [#allocation3]
    $region9: #{decoder_forward.5} parent=1 // pred_fallthru
      _
    // Predicated region
    $region10: #{decoder_forward.5} parent=1 // pred_check
      _
    $region11: #{decoder_forward.5} parent=1 // pred_check_branch
      %24 = sbr.rel (0) target = $region13
    $region12: #{decoder_forward.5} parent=1 // pred_region
      %26 = vsyncadd [#allocation5], 0
      %s27 = sshll.u32 %s2, 4
      %s28 = int_to_ptr.hbm [resolvable:$true] %s27
      %s29 = sshll.u32 [#allocation4], 4
      %s30 = int_to_ptr.vmem [resolvable:$true] %s29
      %35 = dma.hbm_to_vmem [thread:$0]  %s28, 13312, %s30, [#allocation5], 832, 832, 52
    $region13: #{decoder_forward.5} parent=1 // pred_fallthru
      _
    // Predicated region
    $region14: #{decoder_forward.5} parent=1 // pred_check
      _
    $region15: #{decoder_forward.5} parent=1 // pred_check_branch
      %37 = sbr.rel (0) target = $region17
    $region16: #{decoder_forward.5} parent=1 // pred_region
      %39 = dma.done [#allocation3], 16
    $region17: #{decoder_forward.5} parent=1 // pred_fallthru
      _
    // Predicated region
    $region18: #{decoder_forward.5} parent=1 // pred_check
      _
    $region19: #{decoder_forward.5} parent=1 // pred_check_branch
      %41 = sbr.rel (0) target = $region21
    $region20: #{decoder_forward.5} parent=1 // pred_region
      %43 = dma.done [#allocation5], 13312
    $region21: #{decoder_forward.5} parent=1 // pred_fallthru
      _
    %v44 = vld [vmem:[%s0] sm:$0xff]
    %v45 = vld [vmem:[%s0 + $0x8] sm:$0xff]
    %v46 = vld [vmem:[%s0 + $0x10] sm:$0xff]
    %v47 = vld [vmem:[%s0 + $0x18] sm:$0xff]
    %v48 = vld [vmem:[%s0 + $0x20] sm:$0xff]
    %v49 = vld [vmem:[%s0 + $0x28] sm:$0xff]
    %v50 = vld [vmem:[%s0 + $0x30] sm:$0xff]
    %v51 = vld [vmem:[#allocation2] sm:$0x1]
    %v53 = vperm.slane %v51, 0
    %v55 = vadd.f32 %v44, %v53
    %v56 = vadd.f32 %v45, %v53
    %v57 = vadd.f32 %v46, %v53
    %v58 = vadd.f32 %v47, %v53
    %v59 = vadd.f32 %v48, %v53
    %v60 = vadd.f32 %v49, %v53
    %v61 = vadd.f32 %v50, %v53
    %v62 = vmax.f32 %v55, 0.0
    %v63 = vmax.f32 %v56, 0.0
    %v64 = vmax.f32 %v57, 0.0
    %v65 = vmax.f32 %v58, 0.0
    %v66 = vmax.f32 %v59, 0.0
    %v67 = vmax.f32 %v60, 0.0
    %v68 = vmax.f32 %v61, 0.0
    %v69 = vpack.c.bf16 %v63, %v62
    %v70 = vpack.c.bf16 %v65, %v64
    %v71 = vpack.c.bf16 %v67, %v66
    %v72 = vpack.c.bf16 %v68, %v68
    %v73 = vld [vmem:[#allocation4] sm:$0xff]
    %v74 = vld [vmem:[#allocation4 + $0x8] sm:$0xff]
    %v75 = vld [vmem:[#allocation4 + $0x10] sm:$0xff]
    %v76 = vld [vmem:[#allocation4 + $0x18] sm:$0xff]
    %v77 = vld [vmem:[#allocation4 + $0x20] sm:$0xff]
    %v78 = vld [vmem:[#allocation4 + $0x28] sm:$0xff]
    %v79 = vld [vmem:[#allocation4 + $0x30] sm:$0xf]
    %v80 = vld [vmem:[#allocation4 + $0x34] sm:$0xff]
    %v81 = vld [vmem:[#allocation4 + $0x3c] sm:$0xff]
    %v82 = vld [vmem:[#allocation4 + $0x44] sm:$0xff]
    %v83 = vld [vmem:[#allocation4 + $0x4c] sm:$0xff]
    %v84 = vld [vmem:[#allocation4 + $0x54] sm:$0xff]
    %v85 = vld [vmem:[#allocation4 + $0x5c] sm:$0xff]
    %v86 = vld [vmem:[#allocation4 + $0x64] sm:$0xf]
    %v87 = vld [vmem:[#allocation4 + $0x68] sm:$0xff]
    %v88 = vld [vmem:[#allocation4 + $0x70] sm:$0xff]
    %v89 = vld [vmem:[#allocation4 + $0x78] sm:$0xff]
    %v90 = vld [vmem:[#allocation4 + $0x80] sm:$0xff]
    %v91 = vld [vmem:[#allocation4 + $0x88] sm:$0xff]
    %v92 = vld [vmem:[#allocation4 + $0x90] sm:$0xff]
    %v93 = vld [vmem:[#allocation4 + $0x98] sm:$0xf]
    %v94 = vld [vmem:[#allocation4 + $0x9c] sm:$0xff]
    %v95 = vld [vmem:[#allocation4 + $0xa4] sm:$0xff]
    %v96 = vld [vmem:[#allocation4 + $0xac] sm:$0xff]
    %v97 = vld [vmem:[#allocation4 + $0xb4] sm:$0xff]
    %v98 = vld [vmem:[#allocation4 + $0xbc] sm:$0xff]
    %v99 = vld [vmem:[#allocation4 + $0xc4] sm:$0xff]
    %v100 = vld [vmem:[#allocation4 + $0xcc] sm:$0xf]
    %v101 = vld [vmem:[#allocation4 + $0xd0] sm:$0xff]
    %v102 = vld [vmem:[#allocation4 + $0xd8] sm:$0xff]
    %v103 = vld [vmem:[#allocation4 + $0xe0] sm:$0xff]
    %v104 = vld [vmem:[#allocation4 + $0xe8] sm:$0xff]
    %v105 = vld [vmem:[#allocation4 + $0xf0] sm:$0xff]
    %v106 = vld [vmem:[#allocation4 + $0xf8] sm:$0xff]
    %v107 = vld [vmem:[#allocation4 + $0x100] sm:$0xf]
    %v108 = vld [vmem:[#allocation4 + $0x104] sm:$0xff]
    %v109 = vld [vmem:[#allocation4 + $0x10c] sm:$0xff]
    %v110 = vld [vmem:[#allocation4 + $0x114] sm:$0xff]
    %v111 = vld [vmem:[#allocation4 + $0x11c] sm:$0xff]
    %v112 = vld [vmem:[#allocation4 + $0x124] sm:$0xff]
    %v113 = vld [vmem:[#allocation4 + $0x12c] sm:$0xff]
    %v114 = vld [vmem:[#allocation4 + $0x134] sm:$0xf]
    %v115 = vld [vmem:[#allocation4 + $0x138] sm:$0xff]
    %v116 = vld [vmem:[#allocation4 + $0x140] sm:$0xff]
    %v117 = vld [vmem:[#allocation4 + $0x148] sm:$0xff]
    %v118 = vld [vmem:[#allocation4 + $0x150] sm:$0xff]
    %v119 = vld [vmem:[#allocation4 + $0x158] sm:$0xff]
    %v120 = vld [vmem:[#allocation4 + $0x160] sm:$0xff]
    %v121 = vld [vmem:[#allocation4 + $0x168] sm:$0xf]
    %v122 = vld [vmem:[#allocation4 + $0x16c] sm:$0xff]
    %v123 = vld [vmem:[#allocation4 + $0x174] sm:$0xff]
    %v124 = vld [vmem:[#allocation4 + $0x17c] sm:$0xff]
    %v125 = vld [vmem:[#allocation4 + $0x184] sm:$0xff]
    %v126 = vld [vmem:[#allocation4 + $0x18c] sm:$0xff]
    %v127 = vld [vmem:[#allocation4 + $0x194] sm:$0xff]
    %v128 = vld [vmem:[#allocation4 + $0x19c] sm:$0xf]
    %v129 = vld [vmem:[#allocation4 + $0x1a0] sm:$0xff]
    %v130 = vld [vmem:[#allocation4 + $0x1a8] sm:$0xff]
    %v131 = vld [vmem:[#allocation4 + $0x1b0] sm:$0xff]
    %v132 = vld [vmem:[#allocation4 + $0x1b8] sm:$0xff]
    %v133 = vld [vmem:[#allocation4 + $0x1c0] sm:$0xff]
    %v134 = vld [vmem:[#allocation4 + $0x1c8] sm:$0xff]
    %v135 = vld [vmem:[#allocation4 + $0x1d0] sm:$0xf]
    %v136 = vld [vmem:[#allocation4 + $0x1d4] sm:$0xff]
    %v137 = vld [vmem:[#allocation4 + $0x1dc] sm:$0xff]
    %v138 = vld [vmem:[#allocation4 + $0x1e4] sm:$0xff]
    %v139 = vld [vmem:[#allocation4 + $0x1ec] sm:$0xff]
    %v140 = vld [vmem:[#allocation4 + $0x1f4] sm:$0xff]
    %v141 = vld [vmem:[#allocation4 + $0x1fc] sm:$0xff]
    %v142 = vld [vmem:[#allocation4 + $0x204] sm:$0xf]
    %v143 = vld [vmem:[#allocation4 + $0x208] sm:$0xff]
    %v144 = vld [vmem:[#allocation4 + $0x210] sm:$0xff]
    %v145 = vld [vmem:[#allocation4 + $0x218] sm:$0xff]
    %v146 = vld [vmem:[#allocation4 + $0x220] sm:$0xff]
    %v147 = vld [vmem:[#allocation4 + $0x228] sm:$0xff]
    %v148 = vld [vmem:[#allocation4 + $0x230] sm:$0xff]
    %v149 = vld [vmem:[#allocation4 + $0x238] sm:$0xf]
    %v150 = vld [vmem:[#allocation4 + $0x23c] sm:$0xff]
    %v151 = vld [vmem:[#allocation4 + $0x244] sm:$0xff]
    %v152 = vld [vmem:[#allocation4 + $0x24c] sm:$0xff]
    %v153 = vld [vmem:[#allocation4 + $0x254] sm:$0xff]
    %v154 = vld [vmem:[#allocation4 + $0x25c] sm:$0xff]
    %v155 = vld [vmem:[#allocation4 + $0x264] sm:$0xff]
    %v156 = vld [vmem:[#allocation4 + $0x26c] sm:$0xf]
    %v157 = vld [vmem:[#allocation4 + $0x270] sm:$0xff]
    %v158 = vld [vmem:[#allocation4 + $0x278] sm:$0xff]
    %v159 = vld [vmem:[#allocation4 + $0x280] sm:$0xff]
    %v160 = vld [vmem:[#allocation4 + $0x288] sm:$0xff]
    %v161 = vld [vmem:[#allocation4 + $0x290] sm:$0xff]
    %v162 = vld [vmem:[#allocation4 + $0x298] sm:$0xff]
    %v163 = vld [vmem:[#allocation4 + $0x2a0] sm:$0xf]
    %v164 = vld [vmem:[#allocation4 + $0x2a4] sm:$0xff]
    %v165 = vld [vmem:[#allocation4 + $0x2ac] sm:$0xff]
    %v166 = vld [vmem:[#allocation4 + $0x2b4] sm:$0xff]
    %v167 = vld [vmem:[#allocation4 + $0x2bc] sm:$0xff]
    %v168 = vld [vmem:[#allocation4 + $0x2c4] sm:$0xff]
    %v169 = vld [vmem:[#allocation4 + $0x2cc] sm:$0xff]
    %v170 = vld [vmem:[#allocation4 + $0x2d4] sm:$0xf]
    %v171 = vld [vmem:[#allocation4 + $0x2d8] sm:$0xff]
    %v172 = vld [vmem:[#allocation4 + $0x2e0] sm:$0xff]
    %v173 = vld [vmem:[#allocation4 + $0x2e8] sm:$0xff]
    %v174 = vld [vmem:[#allocation4 + $0x2f0] sm:$0xff]
    %v175 = vld [vmem:[#allocation4 + $0x2f8] sm:$0xff]
    %v176 = vld [vmem:[#allocation4 + $0x300] sm:$0xff]
    %v177 = vld [vmem:[#allocation4 + $0x308] sm:$0xf]
    %v178 = vld [vmem:[#allocation4 + $0x30c] sm:$0xff]
    %v179 = vld [vmem:[#allocation4 + $0x314] sm:$0xff]
    %v180 = vld [vmem:[#allocation4 + $0x31c] sm:$0xff]
    %v181 = vld [vmem:[#allocation4 + $0x324] sm:$0xff]
    %v182 = vld [vmem:[#allocation4 + $0x32c] sm:$0xff]
    %v183 = vld [vmem:[#allocation4 + $0x334] sm:$0xff]
    %v184 = vld [vmem:[#allocation4 + $0x33c] sm:$0xf]
    %v297 = vunpack.c.l.b16 %v73
    %v298 = vunpack.c.h.b16 %v73
    %v299 = vunpack.c.l.b16 %v74
    %v300 = vunpack.c.h.b16 %v74
    %v301 = vunpack.c.l.b16 %v75
    %v302 = vunpack.c.h.b16 %v75
    %v303 = vunpack.c.l.b16 %v76
    %v304 = vunpack.c.h.b16 %v76
    %v305 = vunpack.c.l.b16 %v77
    %v306 = vunpack.c.h.b16 %v77
    %v307 = vunpack.c.l.b16 %v78
    %v308 = vunpack.c.h.b16 %v78
    %v309 = vunpack.c.l.b16 %v79
    %v310 = vunpack.c.l.b16 %v80
    %v311 = vunpack.c.h.b16 %v80
    %v312 = vunpack.c.l.b16 %v81
    %v313 = vunpack.c.h.b16 %v81
    %v314 = vunpack.c.l.b16 %v82
    %v315 = vunpack.c.h.b16 %v82
    %v316 = vunpack.c.l.b16 %v83
    %v317 = vunpack.c.h.b16 %v83
    %v318 = vunpack.c.l.b16 %v84
    %v319 = vunpack.c.h.b16 %v84
    %v320 = vunpack.c.l.b16 %v85
    %v321 = vunpack.c.h.b16 %v85
    %v322 = vunpack.c.l.b16 %v86
    %v323 = vunpack.c.l.b16 %v87
    %v324 = vunpack.c.h.b16 %v87
    %v325 = vunpack.c.l.b16 %v88
    %v326 = vunpack.c.h.b16 %v88
    %v327 = vunpack.c.l.b16 %v89
    %v328 = vunpack.c.h.b16 %v89
    %v329 = vunpack.c.l.b16 %v90
    %v330 = vunpack.c.h.b16 %v90
    %v331 = vunpack.c.l.b16 %v91
    %v332 = vunpack.c.h.b16 %v91
    %v333 = vunpack.c.l.b16 %v92
    %v334 = vunpack.c.h.b16 %v92
    %v335 = vunpack.c.l.b16 %v93
    %v336 = vunpack.c.l.b16 %v94
    %v337 = vunpack.c.h.b16 %v94
    %v338 = vunpack.c.l.b16 %v95
    %v339 = vunpack.c.h.b16 %v95
    %v340 = vunpack.c.l.b16 %v96
    %v341 = vunpack.c.h.b16 %v96
    %v342 = vunpack.c.l.b16 %v97
    %v343 = vunpack.c.h.b16 %v97
    %v344 = vunpack.c.l.b16 %v98
    %v345 = vunpack.c.h.b16 %v98
    %v346 = vunpack.c.l.b16 %v99
    %v347 = vunpack.c.h.b16 %v99
    %v348 = vunpack.c.l.b16 %v100
    %v349 = vunpack.c.l.b16 %v101
    %v350 = vunpack.c.h.b16 %v101
    %v351 = vunpack.c.l.b16 %v102
    %v352 = vunpack.c.h.b16 %v102
    %v353 = vunpack.c.l.b16 %v103
    %v354 = vunpack.c.h.b16 %v103
    %v355 = vunpack.c.l.b16 %v104
    %v356 = vunpack.c.h.b16 %v104
    %v357 = vunpack.c.l.b16 %v105
    %v358 = vunpack.c.h.b16 %v105
    %v359 = vunpack.c.l.b16 %v106
    %v360 = vunpack.c.h.b16 %v106
    %v361 = vunpack.c.l.b16 %v107
    %v362 = vunpack.c.l.b16 %v108
    %v363 = vunpack.c.h.b16 %v108
    %v364 = vunpack.c.l.b16 %v109
    %v365 = vunpack.c.h.b16 %v109
    %v366 = vunpack.c.l.b16 %v110
    %v367 = vunpack.c.h.b16 %v110
    %v368 = vunpack.c.l.b16 %v111
    %v369 = vunpack.c.h.b16 %v111
    %v370 = vunpack.c.l.b16 %v112
    %v371 = vunpack.c.h.b16 %v112
    %v372 = vunpack.c.l.b16 %v113
    %v373 = vunpack.c.h.b16 %v113
    %v374 = vunpack.c.l.b16 %v114
    %v375 = vunpack.c.l.b16 %v115
    %v376 = vunpack.c.h.b16 %v115
    %v377 = vunpack.c.l.b16 %v116
    %v378 = vunpack.c.h.b16 %v116
    %v379 = vunpack.c.l.b16 %v117
    %v380 = vunpack.c.h.b16 %v117
    %v381 = vunpack.c.l.b16 %v118
    %v382 = vunpack.c.h.b16 %v118
    %v383 = vunpack.c.l.b16 %v119
    %v384 = vunpack.c.h.b16 %v119
    %v385 = vunpack.c.l.b16 %v120
    %v386 = vunpack.c.h.b16 %v120
    %v387 = vunpack.c.l.b16 %v121
    %v388 = vunpack.c.l.b16 %v122
    %v389 = vunpack.c.h.b16 %v122
    %v390 = vunpack.c.l.b16 %v123
    %v391 = vunpack.c.h.b16 %v123
    %v392 = vunpack.c.l.b16 %v124
    %v393 = vunpack.c.h.b16 %v124
    %v394 = vunpack.c.l.b16 %v125
    %v395 = vunpack.c.h.b16 %v125
    %v396 = vunpack.c.l.b16 %v126
    %v397 = vunpack.c.h.b16 %v126
    %v398 = vunpack.c.l.b16 %v127
    %v399 = vunpack.c.h.b16 %v127
    %v400 = vunpack.c.l.b16 %v128
    %v401 = vunpack.c.l.b16 %v129
    %v402 = vunpack.c.h.b16 %v129
    %v403 = vunpack.c.l.b16 %v130
    %v404 = vunpack.c.h.b16 %v130
    %v405 = vunpack.c.l.b16 %v131
    %v406 = vunpack.c.h.b16 %v131
    %v407 = vunpack.c.l.b16 %v132
    %v408 = vunpack.c.h.b16 %v132
    %v409 = vunpack.c.l.b16 %v133
    %v410 = vunpack.c.h.b16 %v133
    %v411 = vunpack.c.l.b16 %v134
    %v412 = vunpack.c.h.b16 %v134
    %v413 = vunpack.c.l.b16 %v135
    %v414 = vunpack.c.l.b16 %v136
    %v415 = vunpack.c.h.b16 %v136
    %v416 = vunpack.c.l.b16 %v137
    %v417 = vunpack.c.h.b16 %v137
    %v418 = vunpack.c.l.b16 %v138
    %v419 = vunpack.c.h.b16 %v138
    %v420 = vunpack.c.l.b16 %v139
    %v421 = vunpack.c.h.b16 %v139
    %v422 = vunpack.c.l.b16 %v140
    %v423 = vunpack.c.h.b16 %v140
    %v424 = vunpack.c.l.b16 %v141
    %v425 = vunpack.c.h.b16 %v141
    %v426 = vunpack.c.l.b16 %v142
    %v427 = vunpack.c.l.b16 %v143
    %v428 = vunpack.c.h.b16 %v143
    %v429 = vunpack.c.l.b16 %v144
    %v430 = vunpack.c.h.b16 %v144
    %v431 = vunpack.c.l.b16 %v145
    %v432 = vunpack.c.h.b16 %v145
    %v433 = vunpack.c.l.b16 %v146
    %v434 = vunpack.c.h.b16 %v146
    %v435 = vunpack.c.l.b16 %v147
    %v436 = vunpack.c.h.b16 %v147
    %v437 = vunpack.c.l.b16 %v148
    %v438 = vunpack.c.h.b16 %v148
    %v439 = vunpack.c.l.b16 %v149
    %v440 = vunpack.c.l.b16 %v150
    %v441 = vunpack.c.h.b16 %v150
    %v442 = vunpack.c.l.b16 %v151
    %v443 = vunpack.c.h.b16 %v151
    %v444 = vunpack.c.l.b16 %v152
    %v445 = vunpack.c.h.b16 %v152
    %v446 = vunpack.c.l.b16 %v153
    %v447 = vunpack.c.h.b16 %v153
    %v448 = vunpack.c.l.b16 %v154
    %v449 = vunpack.c.h.b16 %v154
    %v450 = vunpack.c.l.b16 %v155
    %v451 = vunpack.c.h.b16 %v155
    %v452 = vunpack.c.l.b16 %v156
    %v453 = vunpack.c.l.b16 %v157
    %v454 = vunpack.c.h.b16 %v157
    %v455 = vunpack.c.l.b16 %v158
    %v456 = vunpack.c.h.b16 %v158
    %v457 = vunpack.c.l.b16 %v159
    %v458 = vunpack.c.h.b16 %v159
    %v459 = vunpack.c.l.b16 %v160
    %v460 = vunpack.c.h.b16 %v160
    %v461 = vunpack.c.l.b16 %v161
    %v462 = vunpack.c.h.b16 %v161
    %v463 = vunpack.c.l.b16 %v162
    %v464 = vunpack.c.h.b16 %v162
    %v465 = vunpack.c.l.b16 %v163
    %v466 = vunpack.c.l.b16 %v164
    %v467 = vunpack.c.h.b16 %v164
    %v468 = vunpack.c.l.b16 %v165
    %v469 = vunpack.c.h.b16 %v165
    %v470 = vunpack.c.l.b16 %v166
    %v471 = vunpack.c.h.b16 %v166
    %v472 = vunpack.c.l.b16 %v167
    %v473 = vunpack.c.h.b16 %v167
    %v474 = vunpack.c.l.b16 %v168
    %v475 = vunpack.c.h.b16 %v168
    %v476 = vunpack.c.l.b16 %v169
    %v477 = vunpack.c.h.b16 %v169
    %v478 = vunpack.c.l.b16 %v170
    %v479 = vunpack.c.l.b16 %v171
    %v480 = vunpack.c.h.b16 %v171
    %v481 = vunpack.c.l.b16 %v172
    %v482 = vunpack.c.h.b16 %v172
    %v483 = vunpack.c.l.b16 %v173
    %v484 = vunpack.c.h.b16 %v173
    %v485 = vunpack.c.l.b16 %v174
    %v486 = vunpack.c.h.b16 %v174
    %v487 = vunpack.c.l.b16 %v175
    %v488 = vunpack.c.h.b16 %v175
    %v489 = vunpack.c.l.b16 %v176
    %v490 = vunpack.c.h.b16 %v176
    %v491 = vunpack.c.l.b16 %v177
    %v492 = vunpack.c.l.b16 %v178
    %v493 = vunpack.c.h.b16 %v178
    %v494 = vunpack.c.l.b16 %v179
    %v495 = vunpack.c.h.b16 %v179
    %v496 = vunpack.c.l.b16 %v180
    %v497 = vunpack.c.h.b16 %v180
    %v498 = vunpack.c.l.b16 %v181
    %v499 = vunpack.c.h.b16 %v181
    %v500 = vunpack.c.l.b16 %v182
    %v501 = vunpack.c.h.b16 %v182
    %v502 = vunpack.c.l.b16 %v183
    %v503 = vunpack.c.h.b16 %v183
    %v504 = vunpack.c.l.b16 %v184
    %v505 = vpack.c.b16 %v310, %v297
    %v506 = vpack.c.b16 %v311, %v298
    %v507 = vpack.c.b16 %v312, %v299
    %v508 = vpack.c.b16 %v313, %v300
    %v509 = vpack.c.b16 %v314, %v301
    %v510 = vpack.c.b16 %v315, %v302
    %v511 = vpack.c.b16 %v316, %v303
    %v512 = vpack.c.b16 %v317, %v304
    %v513 = vpack.c.b16 %v318, %v305
    %v514 = vpack.c.b16 %v319, %v306
    %v515 = vpack.c.b16 %v320, %v307
    %v516 = vpack.c.b16 %v321, %v308
    %v517 = vpack.c.b16 %v322, %v309
    %v518 = vpack.c.b16 %v336, %v323
    %v519 = vpack.c.b16 %v337, %v324
    %v520 = vpack.c.b16 %v338, %v325
    %v521 = vpack.c.b16 %v339, %v326
    %v522 = vpack.c.b16 %v340, %v327
    %v523 = vpack.c.b16 %v341, %v328
    %v524 = vpack.c.b16 %v342, %v329
    %v525 = vpack.c.b16 %v343, %v330
    %v526 = vpack.c.b16 %v344, %v331
    %v527 = vpack.c.b16 %v345, %v332
    %v528 = vpack.c.b16 %v346, %v333
    %v529 = vpack.c.b16 %v347, %v334
    %v530 = vpack.c.b16 %v348, %v335
    %v531 = vpack.c.b16 %v362, %v349
    %v532 = vpack.c.b16 %v363, %v350
    %v533 = vpack.c.b16 %v364, %v351
    %v534 = vpack.c.b16 %v365, %v352
    %v535 = vpack.c.b16 %v366, %v353
    %v536 = vpack.c.b16 %v367, %v354
    %v537 = vpack.c.b16 %v368, %v355
    %v538 = vpack.c.b16 %v369, %v356
    %v539 = vpack.c.b16 %v370, %v357
    %v540 = vpack.c.b16 %v371, %v358
    %v541 = vpack.c.b16 %v372, %v359
    %v542 = vpack.c.b16 %v373, %v360
    %v543 = vpack.c.b16 %v374, %v361
    %v544 = vpack.c.b16 %v388, %v375
    %v545 = vpack.c.b16 %v389, %v376
    %v546 = vpack.c.b16 %v390, %v377
    %v547 = vpack.c.b16 %v391, %v378
    %v548 = vpack.c.b16 %v392, %v379
    %v549 = vpack.c.b16 %v393, %v380
    %v550 = vpack.c.b16 %v394, %v381
    %v551 = vpack.c.b16 %v395, %v382
    %v552 = vpack.c.b16 %v396, %v383
    %v553 = vpack.c.b16 %v397, %v384
    %v554 = vpack.c.b16 %v398, %v385
    %v555 = vpack.c.b16 %v399, %v386
    %v556 = vpack.c.b16 %v400, %v387
    %v557 = vpack.c.b16 %v414, %v401
    %v558 = vpack.c.b16 %v415, %v402
    %v559 = vpack.c.b16 %v416, %v403
    %v560 = vpack.c.b16 %v417, %v404
    %v561 = vpack.c.b16 %v418, %v405
    %v562 = vpack.c.b16 %v419, %v406
    %v563 = vpack.c.b16 %v420, %v407
    %v564 = vpack.c.b16 %v421, %v408
    %v565 = vpack.c.b16 %v422, %v409
    %v566 = vpack.c.b16 %v423, %v410
    %v567 = vpack.c.b16 %v424, %v411
    %v568 = vpack.c.b16 %v425, %v412
    %v569 = vpack.c.b16 %v426, %v413
    %v570 = vpack.c.b16 %v440, %v427
    %v571 = vpack.c.b16 %v441, %v428
    %v572 = vpack.c.b16 %v442, %v429
    %v573 = vpack.c.b16 %v443, %v430
    %v574 = vpack.c.b16 %v444, %v431
    %v575 = vpack.c.b16 %v445, %v432
    %v576 = vpack.c.b16 %v446, %v433
    %v577 = vpack.c.b16 %v447, %v434
    %v578 = vpack.c.b16 %v448, %v435
    %v579 = vpack.c.b16 %v449, %v436
    %v580 = vpack.c.b16 %v450, %v437
    %v581 = vpack.c.b16 %v451, %v438
    %v582 = vpack.c.b16 %v452, %v439
    %v583 = vpack.c.b16 %v466, %v453
    %v584 = vpack.c.b16 %v467, %v454
    %v585 = vpack.c.b16 %v468, %v455
    %v586 = vpack.c.b16 %v469, %v456
    %v587 = vpack.c.b16 %v470, %v457
    %v588 = vpack.c.b16 %v471, %v458
    %v589 = vpack.c.b16 %v472, %v459
    %v590 = vpack.c.b16 %v473, %v460
    %v591 = vpack.c.b16 %v474, %v461
    %v592 = vpack.c.b16 %v475, %v462
    %v593 = vpack.c.b16 %v476, %v463
    %v594 = vpack.c.b16 %v477, %v464
    %v595 = vpack.c.b16 %v478, %v465
    %v596 = vpack.c.b16 %v492, %v479
    %v597 = vpack.c.b16 %v493, %v480
    %v598 = vpack.c.b16 %v494, %v481
    %v599 = vpack.c.b16 %v495, %v482
    %v600 = vpack.c.b16 %v496, %v483
    %v601 = vpack.c.b16 %v497, %v484
    %v602 = vpack.c.b16 %v498, %v485
    %v603 = vpack.c.b16 %v499, %v486
    %v604 = vpack.c.b16 %v500, %v487
    %v605 = vpack.c.b16 %v501, %v488
    %v606 = vpack.c.b16 %v502, %v489
    %v607 = vpack.c.b16 %v503, %v490
    %v608 = vpack.c.b16 %v504, %v491
    %713 = vmatpush.bf16.msra.mxu0 %v596
    %714 = vmatpush.bf16.msra.mxu0 %v583
    %715 = vmatpush.bf16.msra.mxu0 %v570
    %716 = vmatpush.bf16.msra.mxu0 %v557
    %717 = vmatpush.bf16.msra.mxu0 %v544
    %718 = vmatpush.bf16.msra.mxu0 %v531
    %719 = vmatpush.bf16.msra.mxu0 %v518
    %720 = vmatpush.bf16.msra.mxu0 %v505
    %721 = vmatmul.bf16.gmra.mxu0 %v69
    %v722 = vpop.f32.mrf.mxu0
    %v723 = vadd.f32 0.0, %v722
    %v724 = vpop.f32.mrf.mxu0
    %v725 = vadd.f32 0.0, %v724
    %726 = vmatmul.bf16.gmra.mxu0 %v70
    %v727 = vpop.f32.mrf.mxu0
    %v728 = vadd.f32 0.0, %v727
    %v729 = vpop.f32.mrf.mxu0
    %v730 = vadd.f32 0.0, %v729
    %731 = vmatmul.bf16.gmra.mxu0 %v71
    %v732 = vpop.f32.mrf.mxu0
    %v733 = vadd.f32 0.0, %v732
    %v734 = vpop.f32.mrf.mxu0
    %v735 = vadd.f32 0.0, %v734
    %736 = vmatmul.bf16.gmra.mxu0 %v72
    %v737 = vpop.f32.mrf.mxu0
    %v738 = vadd.f32 0.0, %v737
    %v739 = vpop.f32.mrf.mxu0
    %740 = vdwg.mxu0
    %741 = vmatpush.bf16.msra.mxu0 %v597
    %742 = vmatpush.bf16.msra.mxu0 %v584
    %743 = vmatpush.bf16.msra.mxu0 %v571
    %744 = vmatpush.bf16.msra.mxu0 %v558
    %745 = vmatpush.bf16.msra.mxu0 %v545
    %746 = vmatpush.bf16.msra.mxu0 %v532
    %747 = vmatpush.bf16.msra.mxu0 %v519
    %748 = vmatpush.bf16.msra.mxu0 %v506
    %749 = vmatmul.bf16.gmra.mxu0 %v69
    %v750 = vpop.f32.mrf.mxu0
    %v751 = vadd.f32 0.0, %v750
    %v752 = vpop.f32.mrf.mxu0
    %v753 = vadd.f32 0.0, %v752
    %754 = vmatmul.bf16.gmra.mxu0 %v70
    %v755 = vpop.f32.mrf.mxu0
    %v756 = vadd.f32 0.0, %v755
    %v757 = vpop.f32.mrf.mxu0
    %v758 = vadd.f32 0.0, %v757
    %759 = vmatmul.bf16.gmra.mxu0 %v71
    %v760 = vpop.f32.mrf.mxu0
    %v761 = vadd.f32 0.0, %v760
    %v762 = vpop.f32.mrf.mxu0
    %v763 = vadd.f32 0.0, %v762
    %764 = vmatmul.bf16.gmra.mxu0 %v72
    %v765 = vpop.f32.mrf.mxu0
    %v766 = vadd.f32 0.0, %v765
    %v767 = vpop.f32.mrf.mxu0
    %768 = vdwg.mxu0
    %769 = vmatpush.bf16.msra.mxu0 %v598
    %770 = vmatpush.bf16.msra.mxu0 %v585
    %771 = vmatpush.bf16.msra.mxu0 %v572
    %772 = vmatpush.bf16.msra.mxu0 %v559
    %773 = vmatpush.bf16.msra.mxu0 %v546
    %774 = vmatpush.bf16.msra.mxu0 %v533
    %775 = vmatpush.bf16.msra.mxu0 %v520
    %776 = vmatpush.bf16.msra.mxu0 %v507
    %777 = vmatmul.bf16.gmra.mxu0 %v69
    %v778 = vpop.f32.mrf.mxu0
    %v779 = vadd.f32 0.0, %v778
    %v780 = vpop.f32.mrf.mxu0
    %v781 = vadd.f32 0.0, %v780
    %782 = vmatmul.bf16.gmra.mxu0 %v70
    %v783 = vpop.f32.mrf.mxu0
    %v784 = vadd.f32 0.0, %v783
    %v785 = vpop.f32.mrf.mxu0
    %v786 = vadd.f32 0.0, %v785
    %787 = vmatmul.bf16.gmra.mxu0 %v71
    %v788 = vpop.f32.mrf.mxu0
    %v789 = vadd.f32 0.0, %v788
    %v790 = vpop.f32.mrf.mxu0
    %v791 = vadd.f32 0.0, %v790
    %792 = vmatmul.bf16.gmra.mxu0 %v72
    %v793 = vpop.f32.mrf.mxu0
    %v794 = vadd.f32 0.0, %v793
    %v795 = vpop.f32.mrf.mxu0
    %796 = vdwg.mxu0
    %797 = vmatpush.bf16.msra.mxu0 %v599
    %798 = vmatpush.bf16.msra.mxu0 %v586
    %799 = vmatpush.bf16.msra.mxu0 %v573
    %800 = vmatpush.bf16.msra.mxu0 %v560
    %801 = vmatpush.bf16.msra.mxu0 %v547
    %802 = vmatpush.bf16.msra.mxu0 %v534
    %803 = vmatpush.bf16.msra.mxu0 %v521
    %804 = vmatpush.bf16.msra.mxu0 %v508
    %805 = vmatmul.bf16.gmra.mxu0 %v69
    %v806 = vpop.f32.mrf.mxu0
    %v807 = vadd.f32 0.0, %v806
    %v808 = vpop.f32.mrf.mxu0
    %v809 = vadd.f32 0.0, %v808
    %810 = vmatmul.bf16.gmra.mxu0 %v70
    %v811 = vpop.f32.mrf.mxu0
    %v812 = vadd.f32 0.0, %v811
    %v813 = vpop.f32.mrf.mxu0
    %v814 = vadd.f32 0.0, %v813
    %815 = vmatmul.bf16.gmra.mxu0 %v71
    %v816 = vpop.f32.mrf.mxu0
    %v817 = vadd.f32 0.0, %v816
    %v818 = vpop.f32.mrf.mxu0
    %v819 = vadd.f32 0.0, %v818
    %820 = vmatmul.bf16.gmra.mxu0 %v72
    %v821 = vpop.f32.mrf.mxu0
    %v822 = vadd.f32 0.0, %v821
    %v823 = vpop.f32.mrf.mxu0
    %824 = vdwg.mxu0
    %825 = vmatpush.bf16.msra.mxu0 %v600
    %826 = vmatpush.bf16.msra.mxu0 %v587
    %827 = vmatpush.bf16.msra.mxu0 %v574
    %828 = vmatpush.bf16.msra.mxu0 %v561
    %829 = vmatpush.bf16.msra.mxu0 %v548
    %830 = vmatpush.bf16.msra.mxu0 %v535
    %831 = vmatpush.bf16.msra.mxu0 %v522
    %832 = vmatpush.bf16.msra.mxu0 %v509
    %833 = vmatmul.bf16.gmra.mxu0 %v69
    %v834 = vpop.f32.mrf.mxu0
    %v835 = vadd.f32 0.0, %v834
    %v836 = vpop.f32.mrf.mxu0
    %v837 = vadd.f32 0.0, %v836
    %838 = vmatmul.bf16.gmra.mxu0 %v70
    %v839 = vpop.f32.mrf.mxu0
    %v840 = vadd.f32 0.0, %v839
    %v841 = vpop.f32.mrf.mxu0
    %v842 = vadd.f32 0.0, %v841
    %843 = vmatmul.bf16.gmra.mxu0 %v71
    %v844 = vpop.f32.mrf.mxu0
    %v845 = vadd.f32 0.0, %v844
    %v846 = vpop.f32.mrf.mxu0
    %v847 = vadd.f32 0.0, %v846
    %848 = vmatmul.bf16.gmra.mxu0 %v72
    %v849 = vpop.f32.mrf.mxu0
    %v850 = vadd.f32 0.0, %v849
    %v851 = vpop.f32.mrf.mxu0
    %852 = vdwg.mxu0
    %853 = vmatpush.bf16.msra.mxu0 %v601
    %854 = vmatpush.bf16.msra.mxu0 %v588
    %855 = vmatpush.bf16.msra.mxu0 %v575
    %856 = vmatpush.bf16.msra.mxu0 %v562
    %857 = vmatpush.bf16.msra.mxu0 %v549
    %858 = vmatpush.bf16.msra.mxu0 %v536
    %859 = vmatpush.bf16.msra.mxu0 %v523
    %860 = vmatpush.bf16.msra.mxu0 %v510
    %861 = vmatmul.bf16.gmra.mxu0 %v69
    %v862 = vpop.f32.mrf.mxu0
    %v863 = vadd.f32 0.0, %v862
    %v864 = vpop.f32.mrf.mxu0
    %v865 = vadd.f32 0.0, %v864
    %866 = vmatmul.bf16.gmra.mxu0 %v70
    %v867 = vpop.f32.mrf.mxu0
    %v868 = vadd.f32 0.0, %v867
    %v869 = vpop.f32.mrf.mxu0
    %v870 = vadd.f32 0.0, %v869
    %871 = vmatmul.bf16.gmra.mxu0 %v71
    %v872 = vpop.f32.mrf.mxu0
    %v873 = vadd.f32 0.0, %v872
    %v874 = vpop.f32.mrf.mxu0
    %v875 = vadd.f32 0.0, %v874
    %876 = vmatmul.bf16.gmra.mxu0 %v72
    %v877 = vpop.f32.mrf.mxu0
    %v878 = vadd.f32 0.0, %v877
    %v879 = vpop.f32.mrf.mxu0
    %880 = vdwg.mxu0
    %881 = vmatpush.bf16.msra.mxu0 %v602
    %882 = vmatpush.bf16.msra.mxu0 %v589
    %883 = vmatpush.bf16.msra.mxu0 %v576
    %884 = vmatpush.bf16.msra.mxu0 %v563
    %885 = vmatpush.bf16.msra.mxu0 %v550
    %886 = vmatpush.bf16.msra.mxu0 %v537
    %887 = vmatpush.bf16.msra.mxu0 %v524
    %888 = vmatpush.bf16.msra.mxu0 %v511
    %889 = vmatmul.bf16.gmra.mxu0 %v69
    %v890 = vpop.f32.mrf.mxu0
    %v891 = vadd.f32 0.0, %v890
    %v892 = vpop.f32.mrf.mxu0
    %v893 = vadd.f32 0.0, %v892
    %894 = vmatmul.bf16.gmra.mxu0 %v70
    %v895 = vpop.f32.mrf.mxu0
    %v896 = vadd.f32 0.0, %v895
    %v897 = vpop.f32.mrf.mxu0
    %v898 = vadd.f32 0.0, %v897
    %899 = vmatmul.bf16.gmra.mxu0 %v71
    %v900 = vpop.f32.mrf.mxu0
    %v901 = vadd.f32 0.0, %v900
    %v902 = vpop.f32.mrf.mxu0
    %v903 = vadd.f32 0.0, %v902
    %904 = vmatmul.bf16.gmra.mxu0 %v72
    %v905 = vpop.f32.mrf.mxu0
    %v906 = vadd.f32 0.0, %v905
    %v907 = vpop.f32.mrf.mxu0
    %908 = vdwg.mxu0
    %909 = vmatpush.bf16.msra.mxu0 %v603
    %910 = vmatpush.bf16.msra.mxu0 %v590
    %911 = vmatpush.bf16.msra.mxu0 %v577
    %912 = vmatpush.bf16.msra.mxu0 %v564
    %913 = vmatpush.bf16.msra.mxu0 %v551
    %914 = vmatpush.bf16.msra.mxu0 %v538
    %915 = vmatpush.bf16.msra.mxu0 %v525
    %916 = vmatpush.bf16.msra.mxu0 %v512
    %917 = vmatmul.bf16.gmra.mxu0 %v69
    %v918 = vpop.f32.mrf.mxu0
    %v919 = vadd.f32 0.0, %v918
    %v920 = vpop.f32.mrf.mxu0
    %v921 = vadd.f32 0.0, %v920
    %922 = vmatmul.bf16.gmra.mxu0 %v70
    %v923 = vpop.f32.mrf.mxu0
    %v924 = vadd.f32 0.0, %v923
    %v925 = vpop.f32.mrf.mxu0
    %v926 = vadd.f32 0.0, %v925
    %927 = vmatmul.bf16.gmra.mxu0 %v71
    %v928 = vpop.f32.mrf.mxu0
    %v929 = vadd.f32 0.0, %v928
    %v930 = vpop.f32.mrf.mxu0
    %v931 = vadd.f32 0.0, %v930
    %932 = vmatmul.bf16.gmra.mxu0 %v72
    %v933 = vpop.f32.mrf.mxu0
    %v934 = vadd.f32 0.0, %v933
    %v935 = vpop.f32.mrf.mxu0
    %936 = vdwg.mxu0
    %937 = vmatpush.bf16.msra.mxu0 %v604
    %938 = vmatpush.bf16.msra.mxu0 %v591
    %939 = vmatpush.bf16.msra.mxu0 %v578
    %940 = vmatpush.bf16.msra.mxu0 %v565
    %941 = vmatpush.bf16.msra.mxu0 %v552
    %942 = vmatpush.bf16.msra.mxu0 %v539
    %943 = vmatpush.bf16.msra.mxu0 %v526
    %944 = vmatpush.bf16.msra.mxu0 %v513
    %945 = vmatmul.bf16.gmra.mxu0 %v69
    %v946 = vpop.f32.mrf.mxu0
    %v947 = vadd.f32 0.0, %v946
    %v948 = vpop.f32.mrf.mxu0
    %v949 = vadd.f32 0.0, %v948
    %950 = vmatmul.bf16.gmra.mxu0 %v70
    %v951 = vpop.f32.mrf.mxu0
    %v952 = vadd.f32 0.0, %v951
    %v953 = vpop.f32.mrf.mxu0
    %v954 = vadd.f32 0.0, %v953
    %955 = vmatmul.bf16.gmra.mxu0 %v71
    %v956 = vpop.f32.mrf.mxu0
    %v957 = vadd.f32 0.0, %v956
    %v958 = vpop.f32.mrf.mxu0
    %v959 = vadd.f32 0.0, %v958
    %960 = vmatmul.bf16.gmra.mxu0 %v72
    %v961 = vpop.f32.mrf.mxu0
    %v962 = vadd.f32 0.0, %v961
    %v963 = vpop.f32.mrf.mxu0
    %964 = vdwg.mxu0
    %965 = vmatpush.bf16.msra.mxu0 %v605
    %966 = vmatpush.bf16.msra.mxu0 %v592
    %967 = vmatpush.bf16.msra.mxu0 %v579
    %968 = vmatpush.bf16.msra.mxu0 %v566
    %969 = vmatpush.bf16.msra.mxu0 %v553
    %970 = vmatpush.bf16.msra.mxu0 %v540
    %971 = vmatpush.bf16.msra.mxu0 %v527
    %972 = vmatpush.bf16.msra.mxu0 %v514
    %973 = vmatmul.bf16.gmra.mxu0 %v69
    %v974 = vpop.f32.mrf.mxu0
    %v975 = vadd.f32 0.0, %v974
    %v976 = vpop.f32.mrf.mxu0
    %v977 = vadd.f32 0.0, %v976
    %978 = vmatmul.bf16.gmra.mxu0 %v70
    %v979 = vpop.f32.mrf.mxu0
    %v980 = vadd.f32 0.0, %v979
    %v981 = vpop.f32.mrf.mxu0
    %v982 = vadd.f32 0.0, %v981
    %983 = vmatmul.bf16.gmra.mxu0 %v71
    %v984 = vpop.f32.mrf.mxu0
    %v985 = vadd.f32 0.0, %v984
    %v986 = vpop.f32.mrf.mxu0
    %v987 = vadd.f32 0.0, %v986
    %988 = vmatmul.bf16.gmra.mxu0 %v72
    %v989 = vpop.f32.mrf.mxu0
    %v990 = vadd.f32 0.0, %v989
    %v991 = vpop.f32.mrf.mxu0
    %992 = vdwg.mxu0
    %993 = vmatpush.bf16.msra.mxu0 %v606
    %994 = vmatpush.bf16.msra.mxu0 %v593
    %995 = vmatpush.bf16.msra.mxu0 %v580
    %996 = vmatpush.bf16.msra.mxu0 %v567
    %997 = vmatpush.bf16.msra.mxu0 %v554
    %998 = vmatpush.bf16.msra.mxu0 %v541
    %999 = vmatpush.bf16.msra.mxu0 %v528
    %1000 = vmatpush.bf16.msra.mxu0 %v515
    %1001 = vmatmul.bf16.gmra.mxu0 %v69
    %v1002 = vpop.f32.mrf.mxu0
    %v1003 = vadd.f32 0.0, %v1002
    %v1004 = vpop.f32.mrf.mxu0
    %v1005 = vadd.f32 0.0, %v1004
    %1006 = vmatmul.bf16.gmra.mxu0 %v70
    %v1007 = vpop.f32.mrf.mxu0
    %v1008 = vadd.f32 0.0, %v1007
    %v1009 = vpop.f32.mrf.mxu0
    %v1010 = vadd.f32 0.0, %v1009
    %1011 = vmatmul.bf16.gmra.mxu0 %v71
    %v1012 = vpop.f32.mrf.mxu0
    %v1013 = vadd.f32 0.0, %v1012
    %v1014 = vpop.f32.mrf.mxu0
    %v1015 = vadd.f32 0.0, %v1014
    %1016 = vmatmul.bf16.gmra.mxu0 %v72
    %v1017 = vpop.f32.mrf.mxu0
    %v1018 = vadd.f32 0.0, %v1017
    %v1019 = vpop.f32.mrf.mxu0
    %1020 = vdwg.mxu0
    %1021 = vmatpush.bf16.msra.mxu0 %v607
    %1022 = vmatpush.bf16.msra.mxu0 %v594
    %1023 = vmatpush.bf16.msra.mxu0 %v581
    %1024 = vmatpush.bf16.msra.mxu0 %v568
    %1025 = vmatpush.bf16.msra.mxu0 %v555
    %1026 = vmatpush.bf16.msra.mxu0 %v542
    %1027 = vmatpush.bf16.msra.mxu0 %v529
    %1028 = vmatpush.bf16.msra.mxu0 %v516
    %1029 = vmatmul.bf16.gmra.mxu0 %v69
    %v1030 = vpop.f32.mrf.mxu0
    %v1031 = vadd.f32 0.0, %v1030
    %v1032 = vpop.f32.mrf.mxu0
    %v1033 = vadd.f32 0.0, %v1032
    %1034 = vmatmul.bf16.gmra.mxu0 %v70
    %v1035 = vpop.f32.mrf.mxu0
    %v1036 = vadd.f32 0.0, %v1035
    %v1037 = vpop.f32.mrf.mxu0
    %v1038 = vadd.f32 0.0, %v1037
    %1039 = vmatmul.bf16.gmra.mxu0 %v71
    %v1040 = vpop.f32.mrf.mxu0
    %v1041 = vadd.f32 0.0, %v1040
    %v1042 = vpop.f32.mrf.mxu0
    %v1043 = vadd.f32 0.0, %v1042
    %1044 = vmatmul.bf16.gmra.mxu0 %v72
    %v1045 = vpop.f32.mrf.mxu0
    %v1046 = vadd.f32 0.0, %v1045
    %v1047 = vpop.f32.mrf.mxu0
    %1048 = vdwg.mxu0
    %1049 = vmatpush.bf16.msra.mxu0 %v608
    %1050 = vmatpush.bf16.msra.mxu0 %v595
    %1051 = vmatpush.bf16.msra.mxu0 %v582
    %1052 = vmatpush.bf16.msra.mxu0 %v569
    %1053 = vmatpush.bf16.msra.mxu0 %v556
    %1054 = vmatpush.bf16.msra.mxu0 %v543
    %1055 = vmatpush.bf16.msra.mxu0 %v530
    %1056 = vmatpush.bf16.msra.mxu0 %v517
    %1057 = vmatmul.bf16.gmra.mxu0 %v69
    %v1058 = vpop.f32.mrf.mxu0
    %v1059 = vadd.f32 0.0, %v1058
    %v1060 = vpop.f32.mrf.mxu0
    %v1061 = vadd.f32 0.0, %v1060
    %1062 = vmatmul.bf16.gmra.mxu0 %v70
    %v1063 = vpop.f32.mrf.mxu0
    %v1064 = vadd.f32 0.0, %v1063
    %v1065 = vpop.f32.mrf.mxu0
    %v1066 = vadd.f32 0.0, %v1065
    %1067 = vmatmul.bf16.gmra.mxu0 %v71
    %v1068 = vpop.f32.mrf.mxu0
    %v1069 = vadd.f32 0.0, %v1068
    %v1070 = vpop.f32.mrf.mxu0
    %v1071 = vadd.f32 0.0, %v1070
    %1072 = vmatmul.bf16.gmra.mxu0 %v72
    %v1073 = vpop.f32.mrf.mxu0
    %v1074 = vadd.f32 0.0, %v1073
    %v1075 = vpop.f32.mrf.mxu0
    %1076 = vdwg.mxu0
    %1077 = vst [vmem:[%s3] sm:$0xff] %v723
    %1078 = vst [vmem:[%s3 + $0x8] sm:$0xff] %v751
    %1079 = vst [vmem:[%s3 + $0x10] sm:$0xff] %v779
    %1080 = vst [vmem:[%s3 + $0x18] sm:$0xff] %v807
    %1081 = vst [vmem:[%s3 + $0x20] sm:$0xff] %v835
    %1082 = vst [vmem:[%s3 + $0x28] sm:$0xff] %v863
    %1083 = vst [vmem:[%s3 + $0x30] sm:$0xff] %v891
    %1084 = vst [vmem:[%s3 + $0x38] sm:$0xff] %v919
    %1085 = vst [vmem:[%s3 + $0x40] sm:$0xff] %v947
    %1086 = vst [vmem:[%s3 + $0x48] sm:$0xff] %v975
    %1087 = vst [vmem:[%s3 + $0x50] sm:$0xff] %v1003
    %1088 = vst [vmem:[%s3 + $0x58] sm:$0xff] %v1031
    %1089 = vst [vmem:[%s3 + $0x60] sm:$0xff] %v1059
    %1090 = vst [vmem:[%s3 + $0x68] sm:$0xff] %v725
    %1091 = vst [vmem:[%s3 + $0x70] sm:$0xff] %v753
    %1092 = vst [vmem:[%s3 + $0x78] sm:$0xff] %v781
    %1093 = vst [vmem:[%s3 + $0x80] sm:$0xff] %v809
    %1094 = vst [vmem:[%s3 + $0x88] sm:$0xff] %v837
    %1095 = vst [vmem:[%s3 + $0x90] sm:$0xff] %v865
    %1096 = vst [vmem:[%s3 + $0x98] sm:$0xff] %v893
    %1097 = vst [vmem:[%s3 + $0xa0] sm:$0xff] %v921
    %1098 = vst [vmem:[%s3 + $0xa8] sm:$0xff] %v949
    %1099 = vst [vmem:[%s3 + $0xb0] sm:$0xff] %v977
    %1100 = vst [vmem:[%s3 + $0xb8] sm:$0xff] %v1005
    %1101 = vst [vmem:[%s3 + $0xc0] sm:$0xff] %v1033
    %1102 = vst [vmem:[%s3 + $0xc8] sm:$0xff] %v1061
    %1103 = vst [vmem:[%s3 + $0xd0] sm:$0xff] %v728
    %1104 = vst [vmem:[%s3 + $0xd8] sm:$0xff] %v756
    %1105 = vst [vmem:[%s3 + $0xe0] sm:$0xff] %v784
    %1106 = vst [vmem:[%s3 + $0xe8] sm:$0xff] %v812
    %1107 = vst [vmem:[%s3 + $0xf0] sm:$0xff] %v840
    %1108 = vst [vmem:[%s3 + $0xf8] sm:$0xff] %v868
    %1109 = vst [vmem:[%s3 + $0x100] sm:$0xff] %v896
    %1110 = vst [vmem:[%s3 + $0x108] sm:$0xff] %v924
    %1111 = vst [vmem:[%s3 + $0x110] sm:$0xff] %v952
    %1112 = vst [vmem:[%s3 + $0x118] sm:$0xff] %v980
    %1113 = vst [vmem:[%s3 + $0x120] sm:$0xff] %v1008
    %1114 = vst [vmem:[%s3 + $0x128] sm:$0xff] %v1036
    %1115 = vst [vmem:[%s3 + $0x130] sm:$0xff] %v1064
    %1116 = vst [vmem:[%s3 + $0x138] sm:$0xff] %v730
    %1117 = vst [vmem:[%s3 + $0x140] sm:$0xff] %v758
    %1118 = vst [vmem:[%s3 + $0x148] sm:$0xff] %v786
    %1119 = vst [vmem:[%s3 + $0x150] sm:$0xff] %v814
    %1120 = vst [vmem:[%s3 + $0x158] sm:$0xff] %v842
    %1121 = vst [vmem:[%s3 + $0x160] sm:$0xff] %v870
    %1122 = vst [vmem:[%s3 + $0x168] sm:$0xff] %v898
    %1123 = vst [vmem:[%s3 + $0x170] sm:$0xff] %v926
    %1124 = vst [vmem:[%s3 + $0x178] sm:$0xff] %v954
    %1125 = vst [vmem:[%s3 + $0x180] sm:$0xff] %v982
    %1126 = vst [vmem:[%s3 + $0x188] sm:$0xff] %v1010
    %1127 = vst [vmem:[%s3 + $0x190] sm:$0xff] %v1038
    %1128 = vst [vmem:[%s3 + $0x198] sm:$0xff] %v1066
    %1129 = vst [vmem:[%s3 + $0x1a0] sm:$0xff] %v733
    %1130 = vst [vmem:[%s3 + $0x1a8] sm:$0xff] %v761
    %1131 = vst [vmem:[%s3 + $0x1b0] sm:$0xff] %v789
    %1132 = vst [vmem:[%s3 + $0x1b8] sm:$0xff] %v817
    %1133 = vst [vmem:[%s3 + $0x1c0] sm:$0xff] %v845
    %1134 = vst [vmem:[%s3 + $0x1c8] sm:$0xff] %v873
    %1135 = vst [vmem:[%s3 + $0x1d0] sm:$0xff] %v901
    %1136 = vst [vmem:[%s3 + $0x1d8] sm:$0xff] %v929
    %1137 = vst [vmem:[%s3 + $0x1e0] sm:$0xff] %v957
    %1138 = vst [vmem:[%s3 + $0x1e8] sm:$0xff] %v985
    %1139 = vst [vmem:[%s3 + $0x1f0] sm:$0xff] %v1013
    %1140 = vst [vmem:[%s3 + $0x1f8] sm:$0xff] %v1041
    %1141 = vst [vmem:[%s3 + $0x200] sm:$0xff] %v1069
    %1142 = vst [vmem:[%s3 + $0x208] sm:$0xff] %v735
    %1143 = vst [vmem:[%s3 + $0x210] sm:$0xff] %v763
    %1144 = vst [vmem:[%s3 + $0x218] sm:$0xff] %v791
    %1145 = vst [vmem:[%s3 + $0x220] sm:$0xff] %v819
    %1146 = vst [vmem:[%s3 + $0x228] sm:$0xff] %v847
    %1147 = vst [vmem:[%s3 + $0x230] sm:$0xff] %v875
    %1148 = vst [vmem:[%s3 + $0x238] sm:$0xff] %v903
    %1149 = vst [vmem:[%s3 + $0x240] sm:$0xff] %v931
    %1150 = vst [vmem:[%s3 + $0x248] sm:$0xff] %v959
    %1151 = vst [vmem:[%s3 + $0x250] sm:$0xff] %v987
    %1152 = vst [vmem:[%s3 + $0x258] sm:$0xff] %v1015
    %1153 = vst [vmem:[%s3 + $0x260] sm:$0xff] %v1043
    %1154 = vst [vmem:[%s3 + $0x268] sm:$0xff] %v1071
    %1155 = vst [vmem:[%s3 + $0x270] sm:$0xff] %v738
    %1156 = vst [vmem:[%s3 + $0x278] sm:$0xff] %v766
    %1157 = vst [vmem:[%s3 + $0x280] sm:$0xff] %v794
    %1158 = vst [vmem:[%s3 + $0x288] sm:$0xff] %v822
    %1159 = vst [vmem:[%s3 + $0x290] sm:$0xff] %v850
    %1160 = vst [vmem:[%s3 + $0x298] sm:$0xff] %v878
    %1161 = vst [vmem:[%s3 + $0x2a0] sm:$0xff] %v906
    %1162 = vst [vmem:[%s3 + $0x2a8] sm:$0xff] %v934
    %1163 = vst [vmem:[%s3 + $0x2b0] sm:$0xff] %v962
    %1164 = vst [vmem:[%s3 + $0x2b8] sm:$0xff] %v990
    %1165 = vst [vmem:[%s3 + $0x2c0] sm:$0xff] %v1018
    %1166 = vst [vmem:[%s3 + $0x2c8] sm:$0xff] %v1046
    %1167 = vst [vmem:[%s3 + $0x2d0] sm:$0xff] %v1074
    // Predicated region
    $region22: #{decoder_forward.5} parent=1 // pred_check
      _
    $region23: #{decoder_forward.5} parent=1 // pred_check_branch
      %1169 = sbr.rel (0) target = $region25
    $region24: #{decoder_forward.5} parent=1 // pred_region
      _
    $region25: #{decoder_forward.5} parent=1 // pred_fallthru
      _
    // Predicated region
    $region26: #{decoder_forward.5} parent=1 // pred_check
      _
    $region27: #{decoder_forward.5} parent=1 // pred_check_branch
      %1171 = sbr.rel (0) target = $region29
    $region28: #{decoder_forward.5} parent=1 // pred_region
      _
    $region29: #{decoder_forward.5} parent=1 // pred_fallthru
      _
    %1172 = vsyncpa [#allocation3], 1
    %1173 = vsyncpa [#allocation5], 1

// kernel: decoder_forward.4
$region0: #{decoder_forward.4}
  #allocation0 [shape = 'u32[]', space=smem, size = 0x4, offset = 0x4, fixed_abs, tag = 'smem constant byte address 0x4 - core index']
  #allocation1 [shape = 'u32[72,128]{1,0:T(1,128)}', space=vmem, size = 0x9000, scoped, tag = 'internal scratch']
  %s0 = inlined_call_operand.vmem [shape: bf16[2,32], index: 0, kind: input, shape index: {}]
  %s1 = inlined_call_operand.hbm [shape: bf16[32,1024], index: 1, kind: input, shape index: {}]
  %s2 = inlined_call_operand.hbm [shape: f32[1,1024], index: 2, kind: input, shape index: {}]
  %s3 = inlined_call_operand.hbm [shape: bf16[1024,3200], index: 3, kind: input, shape index: {}]
  %s4 = inlined_call_operand.vmem [shape: f32[2,3200], index: 4, kind: output, shape index: {}]
  %s5 = sld [smem:[#allocation0]]
  $region61: #{decoder_forward.4} parent=0
    _
  %s7 = ssub.s32 1, %s5
  %s8 = scalar_select 0, %s7, %s5
  $region1: #{decoder_forward.4} parent=0
    #allocation2 [shape = 'u8[65536]{0}', space=vmem, size = 0x10000, scoped, tag = 'input window, operand 1, single buffered']
    #allocation3 [shape = 's32[2]{0}', space=sflag, size = 0x8, scoped, tag = 'scoped memory for decoder_forward.4']
    #allocation4 [shape = 'u8[4096]{0}', space=vmem, size = 0x1000, scoped, tag = 'input window, operand 2, single buffered']
    #allocation5 [shape = 's32[1]{0}', space=sflag, size = 0x4, scoped, tag = 'scoped memory for decoder_forward.4']
    #allocation6 [shape = 'u8[2621440]{0}', space=vmem, size = 0x280000, scoped, tag = 'input window, operand 3']
    %9 = vsyncpa [#allocation3], 0
    %10 = vsyncpa [#allocation5], 0
    loop: start=0, step=1, limit=7
    $region2: #{decoder_forward.4} parent=1 // loop_pre_header
      _
    $region3: #{decoder_forward.4} parent=1 // loop_header
      %s12 = sphi 0, %s16
      %p13 = scmp.ge.s32.totalorder %s12, 7
      %s20 = sphi 0, %s20
      %s22 = sphi 0, %s20
      %s23 = sphi 0, %s22
      %s37 = sphi 0, %s23
      %s41 = sphi 0, %s41
      %s43 = sphi 0, %s41
      %s44 = sphi 0, %s43
      %s58 = sphi 0, %s44
      %s62 = sphi 0, %s62
      %s64 = sphi 0, %s62
      %s65 = sphi 0, %s64
      %s79 = sphi 0, %s65
      %s85 = sphi 0, %s87
      %s88 = sphi 0, %s85
      %s89 = sphi 0, %s88
      %s105 = sphi 0, %s89
      %s111 = sphi 0, %s113
      %s114 = sphi 0, %s111
      %s115 = sphi 0, %s114
      %s131 = sphi 0, %s115
    $region4: #{decoder_forward.4} parent=1 // loop_header_branch
      %15 = sbr.rel (%p13) target = $region8
    $region5: #{decoder_forward.4} parent=1 // loop_body
      %s17 = ssub.s32 %s12, 1
      %s18 = ssub.s32 %s12, 2
      %s19 = sadd.s32 %s12, 1
      %s21 = sadd.s32 %s20, 1
      %p24 = scmp.eq.s32.totalorder %s12, 4
      %p25 = scmp.ne.s32.totalorder %s20, %s22
      %p26 = scmp.eq.s32.totalorder %s12, 0
      %p27 = por %p25, %p26
      %p28 = scmp.ne.s32.totalorder %s20, %s22
      %p29 = scmp.eq.s32.totalorder %s17, 4
      %p30 = por %p28, %p29
      %p31 = scmp.ne.s32.totalorder %s22, %s23
      %p32 = scmp.eq.s32.totalorder %s17, 0
      %p33 = por %p31, %p32
      %p34 = scmp.ne.s32.totalorder %s22, %s23
      %p35 = scmp.eq.s32.totalorder %s18, 4
      %p36 = por %p34, %p35
      %p38 = scmp.ne.s32.totalorder %s23, %s37
      %p39 = scmp.eq.s32.totalorder %s18, 0
      %p40 = por %p38, %p39
      %s42 = sadd.s32 %s41, 1
      %p45 = scmp.eq.s32.totalorder %s12, 4
      %p46 = scmp.ne.s32.totalorder %s41, %s43
      %p47 = scmp.eq.s32.totalorder %s12, 0
      %p48 = por %p46, %p47
      %p49 = scmp.ne.s32.totalorder %s41, %s43
      %p50 = scmp.eq.s32.totalorder %s17, 4
      %p51 = por %p49, %p50
      %p52 = scmp.ne.s32.totalorder %s43, %s44
      %p53 = scmp.eq.s32.totalorder %s17, 0
      %p54 = por %p52, %p53
      %p55 = scmp.ne.s32.totalorder %s43, %s44
      %p56 = scmp.eq.s32.totalorder %s18, 4
      %p57 = por %p55, %p56
      %p59 = scmp.ne.s32.totalorder %s44, %s58
      %p60 = scmp.eq.s32.totalorder %s18, 0
      %p61 = por %p59, %p60
      %s63 = sadd.s32 %s62, 1
      %p66 = scmp.eq.s32.totalorder %s12, 4
      %p67 = scmp.ne.s32.totalorder %s62, %s64
      %p68 = scmp.eq.s32.totalorder %s12, 0
      %p69 = por %p67, %p68
      %p70 = scmp.ne.s32.totalorder %s62, %s64
      %p71 = scmp.eq.s32.totalorder %s17, 4
      %p72 = por %p70, %p71
      %p73 = scmp.ne.s32.totalorder %s64, %s65
      %p74 = scmp.eq.s32.totalorder %s17, 0
      %p75 = por %p73, %p74
      %p76 = scmp.ne.s32.totalorder %s64, %s65
      %p77 = scmp.eq.s32.totalorder %s18, 4
      %p78 = por %p76, %p77
      %p80 = scmp.ne.s32.totalorder %s65, %s79
      %p81 = scmp.eq.s32.totalorder %s18, 0
      %p82 = por %p80, %p81
      %s83 = ssub.s32 %s12, %s19
      %p84 = scmp.eq.s32.totalorder %s83, 0
      %s86 = sadd.s32 %s85, 1
      %s87 = scalar_select %p84, %s85, %s86
      %p90 = pneg %p84
      %p91 = scmp.eq.s32.totalorder %s12, 4
      %p92 = por %p90, %p91
      %p93 = scmp.ne.s32.totalorder %s85, %s88
      %p94 = scmp.eq.s32.totalorder %s12, 0
      %p95 = por %p93, %p94
      %p96 = scmp.ne.s32.totalorder %s85, %s88
      %p97 = scmp.eq.s32.totalorder %s17, 4
      %p98 = por %p96, %p97
      %p99 = scmp.ne.s32.totalorder %s88, %s89
      %p100 = scmp.eq.s32.totalorder %s17, 0
      %p101 = por %p99, %p100
      %p102 = scmp.ne.s32.totalorder %s88, %s89
      %p103 = scmp.eq.s32.totalorder %s18, 4
      %p104 = por %p102, %p103
      %p106 = scmp.ne.s32.totalorder %s89, %s105
      %p107 = scmp.eq.s32.totalorder %s18, 0
      %p108 = por %p106, %p107
      %s109 = ssub.s32 %s12, %s19
      %p110 = scmp.eq.s32.totalorder %s109, 0
      %s112 = sadd.s32 %s111, 1
      %s113 = scalar_select %p110, %s111, %s112
      %p116 = pneg %p110
      %p117 = scmp.eq.s32.totalorder %s12, 4
      %p118 = por %p116, %p117
      %p119 = scmp.ne.s32.totalorder %s111, %s114
      %p120 = scmp.eq.s32.totalorder %s12, 0
      %p121 = por %p119, %p120
      %p122 = scmp.ne.s32.totalorder %s111, %s114
      %p123 = scmp.eq.s32.totalorder %s17, 4
      %p124 = por %p122, %p123
      %p125 = scmp.ne.s32.totalorder %s114, %s115
      %p126 = scmp.eq.s32.totalorder %s17, 0
      %p127 = por %p125, %p126
      %p128 = scmp.ne.s32.totalorder %s114, %s115
      %p129 = scmp.eq.s32.totalorder %s18, 4
      %p130 = por %p128, %p129
      %p132 = scmp.ne.s32.totalorder %s115, %s131
      %p133 = scmp.eq.s32.totalorder %s18, 0
      %p134 = por %p132, %p133
      %p135 = scmp.le.s32.totalorder 1, %s12
      %p136 = scmp.lt.s32.totalorder %s12, 6
      %p137 = pnand %p135, %p136
      %p138 = pneg %p137
      // Predicated region
      $region9: #{decoder_forward.4} parent=5 // pred_check
        _
      $region10: #{decoder_forward.4} parent=5 // pred_check_branch
        %140 = sbr.rel (%p137) target = $region12
      $region11: #{decoder_forward.4} parent=5 // pred_region
        %s141 = ssub.s32 %s12, 1
        // Predicated region
        $region13: #{decoder_forward.4} parent=11 // pred_check
          %p142 = pneg %p33
        $region14: #{decoder_forward.4} parent=11 // pred_check_branch
          %144 = sbr.rel (%p142) target = $region16
        $region15: #{decoder_forward.4} parent=11 // pred_region
          _
        $region16: #{decoder_forward.4} parent=11 // pred_fallthru
          _
        // Predicated region
        $region17: #{decoder_forward.4} parent=11 // pred_check
          %p145 = pneg %p54
        $region18: #{decoder_forward.4} parent=11 // pred_check_branch
          %147 = sbr.rel (%p145) target = $region20
        $region19: #{decoder_forward.4} parent=11 // pred_region
          %149 = vsyncadd [#allocation3], 0
          %s150 = sshll.u32 %s1, 4
          %s151 = int_to_ptr.hbm [resolvable:$true] %s150
          %s152 = sshll.u32 [#allocation2], 4
          %s153 = int_to_ptr.vmem [resolvable:$true] %s152
          %158 = dma.hbm_to_vmem [thread:$0]  %s151, 2048, %s153, [#allocation3], 512, 512, 32
        $region20: #{decoder_forward.4} parent=11 // pred_fallthru
          _
        // Predicated region
        $region21: #{decoder_forward.4} parent=11 // pred_check
          %p159 = pneg %p75
        $region22: #{decoder_forward.4} parent=11 // pred_check_branch
          %161 = sbr.rel (%p159) target = $region24
        $region23: #{decoder_forward.4} parent=11 // pred_region
          %163 = vsyncadd [#allocation5], 0
          %s165 = sshll.u32 %s2, 4
          %s166 = int_to_ptr.hbm [resolvable:$true] %s165
          %s167 = sshll.u32 [#allocation4], 4
          %s168 = int_to_ptr.vmem [resolvable:$true] %s167
          %170 = dma.hbm_to_vmem [thread:$0]  %s166, 128, %s168, [#allocation5]
        $region24: #{decoder_forward.4} parent=11 // pred_fallthru
          _
      $region12: #{decoder_forward.4} parent=5 // pred_fallthru
        _
      %p171 = scmp.lt.s32.totalorder %s12, 5
      // Predicated region
      $region25: #{decoder_forward.4} parent=5 // pred_check
        %p172 = pneg %p171
      $region26: #{decoder_forward.4} parent=5 // pred_check_branch
        %174 = sbr.rel (%p172) target = $region28
      $region27: #{decoder_forward.4} parent=5 // pred_region
        // Predicated region
        $region29: #{decoder_forward.4} parent=27 // pred_check
          %p175 = pneg %p95
        $region30: #{decoder_forward.4} parent=27 // pred_check_branch
          %177 = sbr.rel (%p175) target = $region32
        $region31: #{decoder_forward.4} parent=27 // pred_region
          %s178 = sand.u32 %s12, 1
          %s179 = scalar_lea.sflag [#allocation3], %s178
          %s180 = sand.u32 %s85, 1
          %s181 = smul.addr %s180, 2560
          %s182 = scalar_lea.vmem [#allocation6], %s181
          %s183 = smul.u32 5, %s12
          %185 = vsyncadd %s179, 0
          %s186 = smul.addr %s183, 4
          %s187 = scalar_lea.hbm %s3, %s186
          %s188 = sshll.u32 %s187, 4
          %s189 = int_to_ptr.hbm [resolvable:$true] %s188
          %s190 = sshll.u32 %s182, 4
          %s191 = int_to_ptr.vmem [resolvable:$true] %s190
          %196 = dma.hbm_to_vmem [thread:$0]  %s189, 40960, %s191, %s179, 1600, 320, 20
        $region32: #{decoder_forward.4} parent=27 // pred_fallthru
          _
      $region28: #{decoder_forward.4} parent=5 // pred_fallthru
        _
      %p197 = scmp.le.s32.totalorder 1, %s12
      %p198 = scmp.lt.s32.totalorder %s12, 6
      %p199 = pnand %p197, %p198
      %p200 = pneg %p199
      // Predicated region
      $region33: #{decoder_forward.4} parent=5 // pred_check
        _
      $region34: #{decoder_forward.4} parent=5 // pred_check_branch
        %202 = sbr.rel (%p199) target = $region36
      $region35: #{decoder_forward.4} parent=5 // pred_region
        %s203 = ssub.s32 %s12, 1
        // Predicated region
        $region37: #{decoder_forward.4} parent=35 // pred_check
          %p204 = pneg %p54
        $region38: #{decoder_forward.4} parent=35 // pred_check_branch
          %206 = sbr.rel (%p204) target = $region40
        $region39: #{decoder_forward.4} parent=35 // pred_region
          %208 = dma.done [#allocation3], 2048
        $region40: #{decoder_forward.4} parent=35 // pred_fallthru
          _
        // Predicated region
        $region41: #{decoder_forward.4} parent=35 // pred_check
          %p209 = pneg %p75
        $region42: #{decoder_forward.4} parent=35 // pred_check_branch
          %211 = sbr.rel (%p209) target = $region44
        $region43: #{decoder_forward.4} parent=35 // pred_region
          %213 = dma.done [#allocation5], 128
        $region44: #{decoder_forward.4} parent=35 // pred_fallthru
          _
        %s214 = sand.u32 %s17, 1
        %s215 = scalar_lea.sflag [#allocation3], %s214
        %s216 = sand.u32 %s88, 1
        %s217 = smul.addr %s216, 2560
        %s218 = scalar_lea.vmem [#allocation6], %s217
        // Predicated region
        $region45: #{decoder_forward.4} parent=35 // pred_check
          %p219 = pneg %p101
        $region46: #{decoder_forward.4} parent=35 // pred_check_branch
          %221 = sbr.rel (%p219) target = $region48
        $region47: #{decoder_forward.4} parent=35 // pred_region
          %223 = dma.done %s215, 40960
        $region48: #{decoder_forward.4} parent=35 // pred_fallthru
          _
        %p224 = pneg %p33
        %p225 = pneg %p30
        %p226 = pneg %p54
        %p227 = pneg %p51
        %p228 = pneg %p75
        %p229 = pneg %p72
        %s230 = sand.u32 %s17, 1
        %s231 = scalar_lea.sflag [#allocation3], %s230
        %s232 = sand.u32 %s88, 1
        %s233 = smul.addr %s232, 2560
        %s234 = scalar_lea.vmem [#allocation6], %s233
        %p235 = pneg %p101
        %p236 = pneg %p98
        %p237 = pneg %p127
        %p238 = pneg %p124
        %s239 = smul.u32 5, %s17
        %p240 = scmp.lt.s32.totalorder %s239, 24
        %s241 = scalar_select %p240, %s239, 24
        %s242 = smul.addr %s241, 2
        %s243 = scalar_lea.vmem %s4, %s242
        %s244 = smul.u32 5, %s17
        %s245 = smul.u32 5, %s17
        %p246 = scmp.lt.s32.totalorder %s245, 24
        %s247 = scalar_select %p246, %s245, 24
        %s248 = smul.addr %s247, 2
        %s249 = scalar_lea.vmem %s4, %s248
        %s250 = smul.u32 5, %s17
        %v252 = vld [vmem:[%s0] sm:$0x1]
        %v253 = vld [vmem:[#allocation2] sm:$0xff]
        %v254 = vld [vmem:[#allocation2 + $0x8] sm:$0xff]
        %v255 = vld [vmem:[#allocation2 + $0x10] sm:$0xff]
        %v256 = vld [vmem:[#allocation2 + $0x18] sm:$0xff]
        %v257 = vld [vmem:[#allocation2 + $0x20] sm:$0xff]
        %v258 = vld [vmem:[#allocation2 + $0x28] sm:$0xff]
        %v259 = vld [vmem:[#allocation2 + $0x30] sm:$0xff]
        %v260 = vld [vmem:[#allocation2 + $0x38] sm:$0xff]
        %v261 = vld [vmem:[#allocation2 + $0x40] sm:$0xff]
        %v262 = vld [vmem:[#allocation2 + $0x48] sm:$0xff]
        %v263 = vld [vmem:[#allocation2 + $0x50] sm:$0xff]
        %v264 = vld [vmem:[#allocation2 + $0x58] sm:$0xff]
        %v265 = vld [vmem:[#allocation2 + $0x60] sm:$0xff]
        %v266 = vld [vmem:[#allocation2 + $0x68] sm:$0xff]
        %v267 = vld [vmem:[#allocation2 + $0x70] sm:$0xff]
        %v268 = vld [vmem:[#allocation2 + $0x78] sm:$0xff]
        %v269 = vld [vmem:[#allocation4] sm:$0xff]
        %v271 = vperm.slane %v269, 0
        %v272 = vperm.slane %v269, 1
        %v273 = vperm.slane %v269, 2
        %v274 = vperm.slane %v269, 3
        %v275 = vperm.slane %v269, 4
        %v276 = vperm.slane %v269, 5
        %v277 = vperm.slane %v269, 6
        %v278 = vperm.slane %v269, 7
        %v303 = vunpack.c.l.b16 %v253
        %v304 = vunpack.c.h.b16 %v253
        %v305 = vunpack.c.l.b16 %v254
        %v306 = vunpack.c.h.b16 %v254
        %v307 = vunpack.c.l.b16 %v255
        %v308 = vunpack.c.h.b16 %v255
        %v309 = vunpack.c.l.b16 %v256
        %v310 = vunpack.c.h.b16 %v256
        %v311 = vunpack.c.l.b16 %v257
        %v312 = vunpack.c.h.b16 %v257
        %v313 = vunpack.c.l.b16 %v258
        %v314 = vunpack.c.h.b16 %v258
        %v315 = vunpack.c.l.b16 %v259
        %v316 = vunpack.c.h.b16 %v259
        %v317 = vunpack.c.l.b16 %v260
        %v318 = vunpack.c.h.b16 %v260
        %v319 = vunpack.c.l.b16 %v261
        %v320 = vunpack.c.h.b16 %v261
        %v321 = vunpack.c.l.b16 %v262
        %v322 = vunpack.c.h.b16 %v262
        %v323 = vunpack.c.l.b16 %v263
        %v324 = vunpack.c.h.b16 %v263
        %v325 = vunpack.c.l.b16 %v264
        %v326 = vunpack.c.h.b16 %v264
        %v327 = vunpack.c.l.b16 %v265
        %v328 = vunpack.c.h.b16 %v265
        %v329 = vunpack.c.l.b16 %v266
        %v330 = vunpack.c.h.b16 %v266
        %v331 = vunpack.c.l.b16 %v267
        %v332 = vunpack.c.h.b16 %v267
        %v333 = vunpack.c.l.b16 %v268
        %v334 = vunpack.c.h.b16 %v268
        %v335 = vpack.c.b16 %v311, %v303
        %v336 = vpack.c.b16 %v312, %v304
        %v337 = vpack.c.b16 %v313, %v305
        %v338 = vpack.c.b16 %v314, %v306
        %v339 = vpack.c.b16 %v315, %v307
        %v340 = vpack.c.b16 %v316, %v308
        %v341 = vpack.c.b16 %v317, %v309
        %v342 = vpack.c.b16 %v318, %v310
        %v343 = vpack.c.b16 %v327, %v319
        %v344 = vpack.c.b16 %v328, %v320
        %v345 = vpack.c.b16 %v329, %v321
        %v346 = vpack.c.b16 %v330, %v322
        %v347 = vpack.c.b16 %v331, %v323
        %v348 = vpack.c.b16 %v332, %v324
        %v349 = vpack.c.b16 %v333, %v325
        %v350 = vpack.c.b16 %v334, %v326
        %vm367 = vcmask 261120
        %v369 = vsel %vm367, %v252, 0
        %371 = vmatpush.bf16.msra.mxu0 0
        %372 = vmatpush.bf16.msra.mxu0 0
        %373 = vmatpush.bf16.msra.mxu0 0
        %374 = vmatpush.bf16.msra.mxu0 0
        %375 = vmatpush.bf16.msra.mxu0 0
        %376 = vmatpush.bf16.msra.mxu0 0
        %377 = vmatpush.bf16.msra.mxu0 %v343
        %378 = vmatpush.bf16.msra.mxu0 %v335
        %379 = vmatmul.bf16.gmra.mxu0 %v369
        %v380 = vpop.f32.mrf.mxu0
        %v381 = vadd.f32 %v271, %v380
        %v382 = vpop.f32.mrf.mxu0
        %383 = vdwg.mxu0
        %384 = vmatpush.bf16.msra.mxu0 0
        %385 = vmatpush.bf16.msra.mxu0 0
        %386 = vmatpush.bf16.msra.mxu0 0
        %387 = vmatpush.bf16.msra.mxu0 0
        %388 = vmatpush.bf16.msra.mxu0 0
        %389 = vmatpush.bf16.msra.mxu0 0
        %390 = vmatpush.bf16.msra.mxu0 %v344
        %391 = vmatpush.bf16.msra.mxu0 %v336
        %392 = vmatmul.bf16.gmra.mxu0 %v369
        %v393 = vpop.f32.mrf.mxu0
        %v394 = vadd.f32 %v272, %v393
        %v395 = vpop.f32.mrf.mxu0
        %396 = vdwg.mxu0
        %397 = vmatpush.bf16.msra.mxu0 0
        %398 = vmatpush.bf16.msra.mxu0 0
        %399 = vmatpush.bf16.msra.mxu0 0
        %400 = vmatpush.bf16.msra.mxu0 0
        %401 = vmatpush.bf16.msra.mxu0 0
        %402 = vmatpush.bf16.msra.mxu0 0
        %403 = vmatpush.bf16.msra.mxu0 %v345
        %404 = vmatpush.bf16.msra.mxu0 %v337
        %405 = vmatmul.bf16.gmra.mxu0 %v369
        %v406 = vpop.f32.mrf.mxu0
        %v407 = vadd.f32 %v273, %v406
        %v408 = vpop.f32.mrf.mxu0
        %409 = vdwg.mxu0
        %410 = vmatpush.bf16.msra.mxu0 0
        %411 = vmatpush.bf16.msra.mxu0 0
        %412 = vmatpush.bf16.msra.mxu0 0
        %413 = vmatpush.bf16.msra.mxu0 0
        %414 = vmatpush.bf16.msra.mxu0 0
        %415 = vmatpush.bf16.msra.mxu0 0
        %416 = vmatpush.bf16.msra.mxu0 %v346
        %417 = vmatpush.bf16.msra.mxu0 %v338
        %418 = vmatmul.bf16.gmra.mxu0 %v369
        %v419 = vpop.f32.mrf.mxu0
        %v420 = vadd.f32 %v274, %v419
        %v421 = vpop.f32.mrf.mxu0
        %422 = vdwg.mxu0
        %423 = vmatpush.bf16.msra.mxu0 0
        %424 = vmatpush.bf16.msra.mxu0 0
        %425 = vmatpush.bf16.msra.mxu0 0
        %426 = vmatpush.bf16.msra.mxu0 0
        %427 = vmatpush.bf16.msra.mxu0 0
        %428 = vmatpush.bf16.msra.mxu0 0
        %429 = vmatpush.bf16.msra.mxu0 %v347
        %430 = vmatpush.bf16.msra.mxu0 %v339
        %431 = vmatmul.bf16.gmra.mxu0 %v369
        %v432 = vpop.f32.mrf.mxu0
        %v433 = vadd.f32 %v275, %v432
        %v434 = vpop.f32.mrf.mxu0
        %435 = vdwg.mxu0
        %436 = vmatpush.bf16.msra.mxu0 0
        %437 = vmatpush.bf16.msra.mxu0 0
        %438 = vmatpush.bf16.msra.mxu0 0
        %439 = vmatpush.bf16.msra.mxu0 0
        %440 = vmatpush.bf16.msra.mxu0 0
        %441 = vmatpush.bf16.msra.mxu0 0
        %442 = vmatpush.bf16.msra.mxu0 %v348
        %443 = vmatpush.bf16.msra.mxu0 %v340
        %444 = vmatmul.bf16.gmra.mxu0 %v369
        %v445 = vpop.f32.mrf.mxu0
        %v446 = vadd.f32 %v276, %v445
        %v447 = vpop.f32.mrf.mxu0
        %448 = vdwg.mxu0
        %449 = vmatpush.bf16.msra.mxu0 0
        %450 = vmatpush.bf16.msra.mxu0 0
        %451 = vmatpush.bf16.msra.mxu0 0
        %452 = vmatpush.bf16.msra.mxu0 0
        %453 = vmatpush.bf16.msra.mxu0 0
        %454 = vmatpush.bf16.msra.mxu0 0
        %455 = vmatpush.bf16.msra.mxu0 %v349
        %456 = vmatpush.bf16.msra.mxu0 %v341
        %457 = vmatmul.bf16.gmra.mxu0 %v369
        %v458 = vpop.f32.mrf.mxu0
        %v459 = vadd.f32 %v277, %v458
        %v460 = vpop.f32.mrf.mxu0
        %461 = vdwg.mxu0
        %462 = vmatpush.bf16.msra.mxu0 0
        %463 = vmatpush.bf16.msra.mxu0 0
        %464 = vmatpush.bf16.msra.mxu0 0
        %465 = vmatpush.bf16.msra.mxu0 0
        %466 = vmatpush.bf16.msra.mxu0 0
        %467 = vmatpush.bf16.msra.mxu0 0
        %468 = vmatpush.bf16.msra.mxu0 %v350
        %469 = vmatpush.bf16.msra.mxu0 %v342
        %470 = vmatmul.bf16.gmra.mxu0 %v369
        %v471 = vpop.f32.mrf.mxu0
        %v472 = vadd.f32 %v278, %v471
        %v473 = vpop.f32.mrf.mxu0
        %474 = vdwg.mxu0
        %v475 = vpack.c.bf16 %v381, %v381
        %v476 = vpack.c.bf16 %v394, %v394
        %v477 = vpack.c.bf16 %v407, %v407
        %v478 = vpack.c.bf16 %v420, %v420
        %v479 = vpack.c.bf16 %v433, %v433
        %v480 = vpack.c.bf16 %v446, %v446
        %v481 = vpack.c.bf16 %v459, %v459
        %v482 = vpack.c.bf16 %v472, %v472
        %v483 = vld [vmem:[%s218] sm:$0xff]
        %v484 = vld [vmem:[%s218 + $0x8] sm:$0xff]
        %v485 = vld [vmem:[%s218 + $0x10] sm:$0xf]
        %v486 = vld [vmem:[%s218 + $0x14] sm:$0xff]
        %v487 = vld [vmem:[%s218 + $0x1c] sm:$0xff]
        %v488 = vld [vmem:[%s218 + $0x24] sm:$0xf]
        %v489 = vld [vmem:[%s218 + $0x28] sm:$0xff]
        %v490 = vld [vmem:[%s218 + $0x30] sm:$0xff]
        %v491 = vld [vmem:[%s218 + $0x38] sm:$0xf]
        %v492 = vld [vmem:[%s218 + $0x3c] sm:$0xff]
        %v493 = vld [vmem:[%s218 + $0x44] sm:$0xff]
        %v494 = vld [vmem:[%s218 + $0x4c] sm:$0xf]
        %v495 = vld [vmem:[%s218 + $0x50] sm:$0xff]
        %v496 = vld [vmem:[%s218 + $0x58] sm:$0xff]
        %v497 = vld [vmem:[%s218 + $0x60] sm:$0xf]
        %v498 = vld [vmem:[%s218 + $0x64] sm:$0xff]
        %v499 = vld [vmem:[%s218 + $0x6c] sm:$0xff]
        %v500 = vld [vmem:[%s218 + $0x74] sm:$0xf]
        %v501 = vld [vmem:[%s218 + $0x78] sm:$0xff]
        %v502 = vld [vmem:[%s218 + $0x80] sm:$0xff]
        %v503 = vld [vmem:[%s218 + $0x88] sm:$0xf]
        %v504 = vld [vmem:[%s218 + $0x8c] sm:$0xff]
        %v505 = vld [vmem:[%s218 + $0x94] sm:$0xff]
        %v506 = vld [vmem:[%s218 + $0x9c] sm:$0xf]
        %v507 = vld [vmem:[%s218 + $0xa0] sm:$0xff]
        %v508 = vld [vmem:[%s218 + $0xa8] sm:$0xff]
        %v509 = vld [vmem:[%s218 + $0xb0] sm:$0xf]
        %v510 = vld [vmem:[%s218 + $0xb4] sm:$0xff]
        %v511 = vld [vmem:[%s218 + $0xbc] sm:$0xff]
        %v512 = vld [vmem:[%s218 + $0xc4] sm:$0xf]
        %v513 = vld [vmem:[%s218 + $0xc8] sm:$0xff]
        %v514 = vld [vmem:[%s218 + $0xd0] sm:$0xff]
        %v515 = vld [vmem:[%s218 + $0xd8] sm:$0xf]
        %v516 = vld [vmem:[%s218 + $0xdc] sm:$0xff]
        %v517 = vld [vmem:[%s218 + $0xe4] sm:$0xff]
        %v518 = vld [vmem:[%s218 + $0xec] sm:$0xf]
        %v519 = vld [vmem:[%s218 + $0xf0] sm:$0xff]
        %v520 = vld [vmem:[%s218 + $0xf8] sm:$0xff]
        %v521 = vld [vmem:[%s218 + $0x100] sm:$0xf]
        %v522 = vld [vmem:[%s218 + $0x104] sm:$0xff]
        %v523 = vld [vmem:[%s218 + $0x10c] sm:$0xff]
        %v524 = vld [vmem:[%s218 + $0x114] sm:$0xf]
        %v525 = vld [vmem:[%s218 + $0x118] sm:$0xff]
        %v526 = vld [vmem:[%s218 + $0x120] sm:$0xff]
        %v527 = vld [vmem:[%s218 + $0x128] sm:$0xf]
        %v528 = vld [vmem:[%s218 + $0x12c] sm:$0xff]
        %v529 = vld [vmem:[%s218 + $0x134] sm:$0xff]
        %v530 = vld [vmem:[%s218 + $0x13c] sm:$0xf]
        %v531 = vld [vmem:[%s218 + $0x140] sm:$0xff]
        %v532 = vld [vmem:[%s218 + $0x148] sm:$0xff]
        %v533 = vld [vmem:[%s218 + $0x150] sm:$0xf]
        %v534 = vld [vmem:[%s218 + $0x154] sm:$0xff]
        %v535 = vld [vmem:[%s218 + $0x15c] sm:$0xff]
        %v536 = vld [vmem:[%s218 + $0x164] sm:$0xf]
        %v537 = vld [vmem:[%s218 + $0x168] sm:$0xff]
        %v538 = vld [vmem:[%s218 + $0x170] sm:$0xff]
        %v539 = vld [vmem:[%s218 + $0x178] sm:$0xf]
        %v540 = vld [vmem:[%s218 + $0x17c] sm:$0xff]
        %v541 = vld [vmem:[%s218 + $0x184] sm:$0xff]
        %v542 = vld [vmem:[%s218 + $0x18c] sm:$0xf]
        %v543 = vld [vmem:[%s218 + $0x190] sm:$0xff]
        %v544 = vld [vmem:[%s218 + $0x198] sm:$0xff]
        %v545 = vld [vmem:[%s218 + $0x1a0] sm:$0xf]
        %v546 = vld [vmem:[%s218 + $0x1a4] sm:$0xff]
        %v547 = vld [vmem:[%s218 + $0x1ac] sm:$0xff]
        %v548 = vld [vmem:[%s218 + $0x1b4] sm:$0xf]
        %v549 = vld [vmem:[%s218 + $0x1b8] sm:$0xff]
        %v550 = vld [vmem:[%s218 + $0x1c0] sm:$0xff]
        %v551 = vld [vmem:[%s218 + $0x1c8] sm:$0xf]
        %v552 = vld [vmem:[%s218 + $0x1cc] sm:$0xff]
        %v553 = vld [vmem:[%s218 + $0x1d4] sm:$0xff]
        %v554 = vld [vmem:[%s218 + $0x1dc] sm:$0xf]
        %v555 = vld [vmem:[%s218 + $0x1e0] sm:$0xff]
        %v556 = vld [vmem:[%s218 + $0x1e8] sm:$0xff]
        %v557 = vld [vmem:[%s218 + $0x1f0] sm:$0xf]
        %v558 = vld [vmem:[%s218 + $0x1f4] sm:$0xff]
        %v559 = vld [vmem:[%s218 + $0x1fc] sm:$0xff]
        %v560 = vld [vmem:[%s218 + $0x204] sm:$0xf]
        %v561 = vld [vmem:[%s218 + $0x208] sm:$0xff]
        %v562 = vld [vmem:[%s218 + $0x210] sm:$0xff]
        %v563 = vld [vmem:[%s218 + $0x218] sm:$0xf]
        %v564 = vld [vmem:[%s218 + $0x21c] sm:$0xff]
        %v565 = vld [vmem:[%s218 + $0x224] sm:$0xff]
        %v566 = vld [vmem:[%s218 + $0x22c] sm:$0xf]
        %v567 = vld [vmem:[%s218 + $0x230] sm:$0xff]
        %v568 = vld [vmem:[%s218 + $0x238] sm:$0xff]
        %v569 = vld [vmem:[%s218 + $0x240] sm:$0xf]
        %v570 = vld [vmem:[%s218 + $0x244] sm:$0xff]
        %v571 = vld [vmem:[%s218 + $0x24c] sm:$0xff]
        %v572 = vld [vmem:[%s218 + $0x254] sm:$0xf]
        %v573 = vld [vmem:[%s218 + $0x258] sm:$0xff]
        %v574 = vld [vmem:[%s218 + $0x260] sm:$0xff]
        %v575 = vld [vmem:[%s218 + $0x268] sm:$0xf]
        %v576 = vld [vmem:[%s218 + $0x26c] sm:$0xff]
        %v577 = vld [vmem:[%s218 + $0x274] sm:$0xff]
        %v578 = vld [vmem:[%s218 + $0x27c] sm:$0xf]
        %v579 = vld [vmem:[%s218 + $0x280] sm:$0xff]
        %v580 = vld [vmem:[%s218 + $0x288] sm:$0xff]
        %v581 = vld [vmem:[%s218 + $0x290] sm:$0xf]
        %v582 = vld [vmem:[%s218 + $0x294] sm:$0xff]
        %v583 = vld [vmem:[%s218 + $0x29c] sm:$0xff]
        %v584 = vld [vmem:[%s218 + $0x2a4] sm:$0xf]
        %v585 = vld [vmem:[%s218 + $0x2a8] sm:$0xff]
        %v586 = vld [vmem:[%s218 + $0x2b0] sm:$0xff]
        %v587 = vld [vmem:[%s218 + $0x2b8] sm:$0xf]
        %v588 = vld [vmem:[%s218 + $0x2bc] sm:$0xff]
        %v589 = vld [vmem:[%s218 + $0x2c4] sm:$0xff]
        %v590 = vld [vmem:[%s218 + $0x2cc] sm:$0xf]
        %v591 = vld [vmem:[%s218 + $0x2d0] sm:$0xff]
        %v592 = vld [vmem:[%s218 + $0x2d8] sm:$0xff]
        %v593 = vld [vmem:[%s218 + $0x2e0] sm:$0xf]
        %v594 = vld [vmem:[%s218 + $0x2e4] sm:$0xff]
        %v595 = vld [vmem:[%s218 + $0x2ec] sm:$0xff]
        %v596 = vld [vmem:[%s218 + $0x2f4] sm:$0xf]
        %v597 = vld [vmem:[%s218 + $0x2f8] sm:$0xff]
        %v598 = vld [vmem:[%s218 + $0x300] sm:$0xff]
        %v599 = vld [vmem:[%s218 + $0x308] sm:$0xf]
        %v600 = vld [vmem:[%s218 + $0x30c] sm:$0xff]
        %v601 = vld [vmem:[%s218 + $0x314] sm:$0xff]
        %v602 = vld [vmem:[%s218 + $0x31c] sm:$0xf]
        %v603 = vld [vmem:[%s218 + $0x320] sm:$0xff]
        %v604 = vld [vmem:[%s218 + $0x328] sm:$0xff]
        %v605 = vld [vmem:[%s218 + $0x330] sm:$0xf]
        %v606 = vld [vmem:[%s218 + $0x334] sm:$0xff]
        %v607 = vld [vmem:[%s218 + $0x33c] sm:$0xff]
        %v608 = vld [vmem:[%s218 + $0x344] sm:$0xf]
        %v609 = vld [vmem:[%s218 + $0x348] sm:$0xff]
        %v610 = vld [vmem:[%s218 + $0x350] sm:$0xff]
        %v611 = vld [vmem:[%s218 + $0x358] sm:$0xf]
        %v612 = vld [vmem:[%s218 + $0x35c] sm:$0xff]
        %v613 = vld [vmem:[%s218 + $0x364] sm:$0xff]
        %v614 = vld [vmem:[%s218 + $0x36c] sm:$0xf]
        %v615 = vld [vmem:[%s218 + $0x370] sm:$0xff]
        %v616 = vld [vmem:[%s218 + $0x378] sm:$0xff]
        %v617 = vld [vmem:[%s218 + $0x380] sm:$0xf]
        %v618 = vld [vmem:[%s218 + $0x384] sm:$0xff]
        %v619 = vld [vmem:[%s218 + $0x38c] sm:$0xff]
        %v620 = vld [vmem:[%s218 + $0x394] sm:$0xf]
        %v621 = vld [vmem:[%s218 + $0x398] sm:$0xff]
        %v622 = vld [vmem:[%s218 + $0x3a0] sm:$0xff]
        %v623 = vld [vmem:[%s218 + $0x3a8] sm:$0xf]
        %v624 = vld [vmem:[%s218 + $0x3ac] sm:$0xff]
        %v625 = vld [vmem:[%s218 + $0x3b4] sm:$0xff]
        %v626 = vld [vmem:[%s218 + $0x3bc] sm:$0xf]
        %v627 = vld [vmem:[%s218 + $0x3c0] sm:$0xff]
        %v628 = vld [vmem:[%s218 + $0x3c8] sm:$0xff]
        %v629 = vld [vmem:[%s218 + $0x3d0] sm:$0xf]
        %v630 = vld [vmem:[%s218 + $0x3d4] sm:$0xff]
        %v631 = vld [vmem:[%s218 + $0x3dc] sm:$0xff]
        %v632 = vld [vmem:[%s218 + $0x3e4] sm:$0xf]
        %v633 = vld [vmem:[%s218 + $0x3e8] sm:$0xff]
        %v634 = vld [vmem:[%s218 + $0x3f0] sm:$0xff]
        %v635 = vld [vmem:[%s218 + $0x3f8] sm:$0xf]
        %v636 = vld [vmem:[%s218 + $0x3fc] sm:$0xff]
        %v637 = vld [vmem:[%s218 + $0x404] sm:$0xff]
        %v638 = vld [vmem:[%s218 + $0x40c] sm:$0xf]
        %v639 = vld [vmem:[%s218 + $0x410] sm:$0xff]
        %v640 = vld [vmem:[%s218 + $0x418] sm:$0xff]
        %v641 = vld [vmem:[%s218 + $0x420] sm:$0xf]
        %v642 = vld [vmem:[%s218 + $0x424] sm:$0xff]
        %v643 = vld [vmem:[%s218 + $0x42c] sm:$0xff]
        %v644 = vld [vmem:[%s218 + $0x434] sm:$0xf]
        %v645 = vld [vmem:[%s218 + $0x438] sm:$0xff]
        %v646 = vld [vmem:[%s218 + $0x440] sm:$0xff]
        %v647 = vld [vmem:[%s218 + $0x448] sm:$0xf]
        %v648 = vld [vmem:[%s218 + $0x44c] sm:$0xff]
        %v649 = vld [vmem:[%s218 + $0x454] sm:$0xff]
        %v650 = vld [vmem:[%s218 + $0x45c] sm:$0xf]
        %v651 = vld [vmem:[%s218 + $0x460] sm:$0xff]
        %v652 = vld [vmem:[%s218 + $0x468] sm:$0xff]
        %v653 = vld [vmem:[%s218 + $0x470] sm:$0xf]
        %v654 = vld [vmem:[%s218 + $0x474] sm:$0xff]
        %v655 = vld [vmem:[%s218 + $0x47c] sm:$0xff]
        %v656 = vld [vmem:[%s218 + $0x484] sm:$0xf]
        %v657 = vld [vmem:[%s218 + $0x488] sm:$0xff]
        %v658 = vld [vmem:[%s218 + $0x490] sm:$0xff]
        %v659 = vld [vmem:[%s218 + $0x498] sm:$0xf]
        %v660 = vld [vmem:[%s218 + $0x49c] sm:$0xff]
        %v661 = vld [vmem:[%s218 + $0x4a4] sm:$0xff]
        %v662 = vld [vmem:[%s218 + $0x4ac] sm:$0xf]
        %v663 = vld [vmem:[%s218 + $0x4b0] sm:$0xff]
        %v664 = vld [vmem:[%s218 + $0x4b8] sm:$0xff]
        %v665 = vld [vmem:[%s218 + $0x4c0] sm:$0xf]
        %v666 = vld [vmem:[%s218 + $0x4c4] sm:$0xff]
        %v667 = vld [vmem:[%s218 + $0x4cc] sm:$0xff]
        %v668 = vld [vmem:[%s218 + $0x4d4] sm:$0xf]
        %v669 = vld [vmem:[%s218 + $0x4d8] sm:$0xff]
        %v670 = vld [vmem:[%s218 + $0x4e0] sm:$0xff]
        %v671 = vld [vmem:[%s218 + $0x4e8] sm:$0xf]
        %v672 = vld [vmem:[%s218 + $0x4ec] sm:$0xff]
        %v673 = vld [vmem:[%s218 + $0x4f4] sm:$0xff]
        %v674 = vld [vmem:[%s218 + $0x4fc] sm:$0xf]
        %v675 = vld [vmem:[%s218 + $0x500] sm:$0xff]
        %v676 = vld [vmem:[%s218 + $0x508] sm:$0xff]
        %v677 = vld [vmem:[%s218 + $0x510] sm:$0xf]
        %v678 = vld [vmem:[%s218 + $0x514] sm:$0xff]
        %v679 = vld [vmem:[%s218 + $0x51c] sm:$0xff]
        %v680 = vld [vmem:[%s218 + $0x524] sm:$0xf]
        %v681 = vld [vmem:[%s218 + $0x528] sm:$0xff]
        %v682 = vld [vmem:[%s218 + $0x530] sm:$0xff]
        %v683 = vld [vmem:[%s218 + $0x538] sm:$0xf]
        %v684 = vld [vmem:[%s218 + $0x53c] sm:$0xff]
        %v685 = vld [vmem:[%s218 + $0x544] sm:$0xff]
        %v686 = vld [vmem:[%s218 + $0x54c] sm:$0xf]
        %v687 = vld [vmem:[%s218 + $0x550] sm:$0xff]
        %v688 = vld [vmem:[%s218 + $0x558] sm:$0xff]
        %v689 = vld [vmem:[%s218 + $0x560] sm:$0xf]
        %v690 = vld [vmem:[%s218 + $0x564] sm:$0xff]
        %v691 = vld [vmem:[%s218 + $0x56c] sm:$0xff]
        %v692 = vld [vmem:[%s218 + $0x574] sm:$0xf]
        %v693 = vld [vmem:[%s218 + $0x578] sm:$0xff]
        %v694 = vld [vmem:[%s218 + $0x580] sm:$0xff]
        %v695 = vld [vmem:[%s218 + $0x588] sm:$0xf]
        %v696 = vld [vmem:[%s218 + $0x58c] sm:$0xff]
        %v697 = vld [vmem:[%s218 + $0x594] sm:$0xff]
        %v698 = vld [vmem:[%s218 + $0x59c] sm:$0xf]
        %v699 = vld [vmem:[%s218 + $0x5a0] sm:$0xff]
        %v700 = vld [vmem:[%s218 + $0x5a8] sm:$0xff]
        %v701 = vld [vmem:[%s218 + $0x5b0] sm:$0xf]
        %v702 = vld [vmem:[%s218 + $0x5b4] sm:$0xff]
        %v703 = vld [vmem:[%s218 + $0x5bc] sm:$0xff]
        %v704 = vld [vmem:[%s218 + $0x5c4] sm:$0xf]
        %v705 = vld [vmem:[%s218 + $0x5c8] sm:$0xff]
        %v706 = vld [vmem:[%s218 + $0x5d0] sm:$0xff]
        %v707 = vld [vmem:[%s218 + $0x5d8] sm:$0xf]
        %v708 = vld [vmem:[%s218 + $0x5dc] sm:$0xff]
        %v709 = vld [vmem:[%s218 + $0x5e4] sm:$0xff]
        %v710 = vld [vmem:[%s218 + $0x5ec] sm:$0xf]
        %v711 = vld [vmem:[%s218 + $0x5f0] sm:$0xff]
        %v712 = vld [vmem:[%s218 + $0x5f8] sm:$0xff]
        %v713 = vld [vmem:[%s218 + $0x600] sm:$0xf]
        %v714 = vld [vmem:[%s218 + $0x604] sm:$0xff]
        %v715 = vld [vmem:[%s218 + $0x60c] sm:$0xff]
        %v716 = vld [vmem:[%s218 + $0x614] sm:$0xf]
        %v717 = vld [vmem:[%s218 + $0x618] sm:$0xff]
        %v718 = vld [vmem:[%s218 + $0x620] sm:$0xff]
        %v719 = vld [vmem:[%s218 + $0x628] sm:$0xf]
        %v720 = vld [vmem:[%s218 + $0x62c] sm:$0xff]
        %v721 = vld [vmem:[%s218 + $0x634] sm:$0xff]
        %v722 = vld [vmem:[%s218 + $0x63c] sm:$0xf]
        %v723 = vld [vmem:[%s218 + $0x640] sm:$0xff]
        %v724 = vld [vmem:[%s218 + $0x648] sm:$0xff]
        %v725 = vld [vmem:[%s218 + $0x650] sm:$0xf]
        %v726 = vld [vmem:[%s218 + $0x654] sm:$0xff]
        %v727 = vld [vmem:[%s218 + $0x65c] sm:$0xff]
        %v728 = vld [vmem:[%s218 + $0x664] sm:$0xf]
        %v729 = vld [vmem:[%s218 + $0x668] sm:$0xff]
        %v730 = vld [vmem:[%s218 + $0x670] sm:$0xff]
        %v731 = vld [vmem:[%s218 + $0x678] sm:$0xf]
        %v732 = vld [vmem:[%s218 + $0x67c] sm:$0xff]
        %v733 = vld [vmem:[%s218 + $0x684] sm:$0xff]
        %v734 = vld [vmem:[%s218 + $0x68c] sm:$0xf]
        %v735 = vld [vmem:[%s218 + $0x690] sm:$0xff]
        %v736 = vld [vmem:[%s218 + $0x698] sm:$0xff]
        %v737 = vld [vmem:[%s218 + $0x6a0] sm:$0xf]
        %v738 = vld [vmem:[%s218 + $0x6a4] sm:$0xff]
        %v739 = vld [vmem:[%s218 + $0x6ac] sm:$0xff]
        %v740 = vld [vmem:[%s218 + $0x6b4] sm:$0xf]
        %v741 = vld [vmem:[%s218 + $0x6b8] sm:$0xff]
        %v742 = vld [vmem:[%s218 + $0x6c0] sm:$0xff]
        %v743 = vld [vmem:[%s218 + $0x6c8] sm:$0xf]
        %v744 = vld [vmem:[%s218 + $0x6cc] sm:$0xff]
        %v745 = vld [vmem:[%s218 + $0x6d4] sm:$0xff]
        %v746 = vld [vmem:[%s218 + $0x6dc] sm:$0xf]
        %v747 = vld [vmem:[%s218 + $0x6e0] sm:$0xff]
        %v748 = vld [vmem:[%s218 + $0x6e8] sm:$0xff]
        %v749 = vld [vmem:[%s218 + $0x6f0] sm:$0xf]
        %v750 = vld [vmem:[%s218 + $0x6f4] sm:$0xff]
        %v751 = vld [vmem:[%s218 + $0x6fc] sm:$0xff]
        %v752 = vld [vmem:[%s218 + $0x704] sm:$0xf]
        %v753 = vld [vmem:[%s218 + $0x708] sm:$0xff]
        %v754 = vld [vmem:[%s218 + $0x710] sm:$0xff]
        %v755 = vld [vmem:[%s218 + $0x718] sm:$0xf]
        %v756 = vld [vmem:[%s218 + $0x71c] sm:$0xff]
        %v757 = vld [vmem:[%s218 + $0x724] sm:$0xff]
        %v758 = vld [vmem:[%s218 + $0x72c] sm:$0xf]
        %v759 = vld [vmem:[%s218 + $0x730] sm:$0xff]
        %v760 = vld [vmem:[%s218 + $0x738] sm:$0xff]
        %v761 = vld [vmem:[%s218 + $0x740] sm:$0xf]
        %v762 = vld [vmem:[%s218 + $0x744] sm:$0xff]
        %v763 = vld [vmem:[%s218 + $0x74c] sm:$0xff]
        %v764 = vld [vmem:[%s218 + $0x754] sm:$0xf]
        %v765 = vld [vmem:[%s218 + $0x758] sm:$0xff]
        %v766 = vld [vmem:[%s218 + $0x760] sm:$0xff]
        %v767 = vld [vmem:[%s218 + $0x768] sm:$0xf]
        %v768 = vld [vmem:[%s218 + $0x76c] sm:$0xff]
        %v769 = vld [vmem:[%s218 + $0x774] sm:$0xff]
        %v770 = vld [vmem:[%s218 + $0x77c] sm:$0xf]
        %v771 = vld [vmem:[%s218 + $0x780] sm:$0xff]
        %v772 = vld [vmem:[%s218 + $0x788] sm:$0xff]
        %v773 = vld [vmem:[%s218 + $0x790] sm:$0xf]
        %v774 = vld [vmem:[%s218 + $0x794] sm:$0xff]
        %v775 = vld [vmem:[%s218 + $0x79c] sm:$0xff]
        %v776 = vld [vmem:[%s218 + $0x7a4] sm:$0xf]
        %v777 = vld [vmem:[%s218 + $0x7a8] sm:$0xff]
        %v778 = vld [vmem:[%s218 + $0x7b0] sm:$0xff]
        %v779 = vld [vmem:[%s218 + $0x7b8] sm:$0xf]
        %v780 = vld [vmem:[%s218 + $0x7bc] sm:$0xff]
        %v781 = vld [vmem:[%s218 + $0x7c4] sm:$0xff]
        %v782 = vld [vmem:[%s218 + $0x7cc] sm:$0xf]
        %v783 = vld [vmem:[%s218 + $0x7d0] sm:$0xff]
        %v784 = vld [vmem:[%s218 + $0x7d8] sm:$0xff]
        %v785 = vld [vmem:[%s218 + $0x7e0] sm:$0xf]
        %v786 = vld [vmem:[%s218 + $0x7e4] sm:$0xff]
        %v787 = vld [vmem:[%s218 + $0x7ec] sm:$0xff]
        %v788 = vld [vmem:[%s218 + $0x7f4] sm:$0xf]
        %v789 = vld [vmem:[%s218 + $0x7f8] sm:$0xff]
        %v790 = vld [vmem:[%s218 + $0x800] sm:$0xff]
        %v791 = vld [vmem:[%s218 + $0x808] sm:$0xf]
        %v792 = vld [vmem:[%s218 + $0x80c] sm:$0xff]
        %v793 = vld [vmem:[%s218 + $0x814] sm:$0xff]
        %v794 = vld [vmem:[%s218 + $0x81c] sm:$0xf]
        %v795 = vld [vmem:[%s218 + $0x820] sm:$0xff]
        %v796 = vld [vmem:[%s218 + $0x828] sm:$0xff]
        %v797 = vld [vmem:[%s218 + $0x830] sm:$0xf]
        %v798 = vld [vmem:[%s218 + $0x834] sm:$0xff]
        %v799 = vld [vmem:[%s218 + $0x83c] sm:$0xff]
        %v800 = vld [vmem:[%s218 + $0x844] sm:$0xf]
        %v801 = vld [vmem:[%s218 + $0x848] sm:$0xff]
        %v802 = vld [vmem:[%s218 + $0x850] sm:$0xff]
        %v803 = vld [vmem:[%s218 + $0x858] sm:$0xf]
        %v804 = vld [vmem:[%s218 + $0x85c] sm:$0xff]
        %v805 = vld [vmem:[%s218 + $0x864] sm:$0xff]
        %v806 = vld [vmem:[%s218 + $0x86c] sm:$0xf]
        %v807 = vld [vmem:[%s218 + $0x870] sm:$0xff]
        %v808 = vld [vmem:[%s218 + $0x878] sm:$0xff]
        %v809 = vld [vmem:[%s218 + $0x880] sm:$0xf]
        %v810 = vld [vmem:[%s218 + $0x884] sm:$0xff]
        %v811 = vld [vmem:[%s218 + $0x88c] sm:$0xff]
        %v812 = vld [vmem:[%s218 + $0x894] sm:$0xf]
        %v813 = vld [vmem:[%s218 + $0x898] sm:$0xff]
        %v814 = vld [vmem:[%s218 + $0x8a0] sm:$0xff]
        %v815 = vld [vmem:[%s218 + $0x8a8] sm:$0xf]
        %v816 = vld [vmem:[%s218 + $0x8ac] sm:$0xff]
        %v817 = vld [vmem:[%s218 + $0x8b4] sm:$0xff]
        %v818 = vld [vmem:[%s218 + $0x8bc] sm:$0xf]
        %v819 = vld [vmem:[%s218 + $0x8c0] sm:$0xff]
        %v820 = vld [vmem:[%s218 + $0x8c8] sm:$0xff]
        %v821 = vld [vmem:[%s218 + $0x8d0] sm:$0xf]
        %v822 = vld [vmem:[%s218 + $0x8d4] sm:$0xff]
        %v823 = vld [vmem:[%s218 + $0x8dc] sm:$0xff]
        %v824 = vld [vmem:[%s218 + $0x8e4] sm:$0xf]
        %v825 = vld [vmem:[%s218 + $0x8e8] sm:$0xff]
        %v826 = vld [vmem:[%s218 + $0x8f0] sm:$0xff]
        %v827 = vld [vmem:[%s218 + $0x8f8] sm:$0xf]
        %v828 = vld [vmem:[%s218 + $0x8fc] sm:$0xff]
        %v829 = vld [vmem:[%s218 + $0x904] sm:$0xff]
        %v830 = vld [vmem:[%s218 + $0x90c] sm:$0xf]
        %v831 = vld [vmem:[%s218 + $0x910] sm:$0xff]
        %v832 = vld [vmem:[%s218 + $0x918] sm:$0xff]
        %v833 = vld [vmem:[%s218 + $0x920] sm:$0xf]
        %v834 = vld [vmem:[%s218 + $0x924] sm:$0xff]
        %v835 = vld [vmem:[%s218 + $0x92c] sm:$0xff]
        %v836 = vld [vmem:[%s218 + $0x934] sm:$0xf]
        %v837 = vld [vmem:[%s218 + $0x938] sm:$0xff]
        %v838 = vld [vmem:[%s218 + $0x940] sm:$0xff]
        %v839 = vld [vmem:[%s218 + $0x948] sm:$0xf]
        %v840 = vld [vmem:[%s218 + $0x94c] sm:$0xff]
        %v841 = vld [vmem:[%s218 + $0x954] sm:$0xff]
        %v842 = vld [vmem:[%s218 + $0x95c] sm:$0xf]
        %v843 = vld [vmem:[%s218 + $0x960] sm:$0xff]
        %v844 = vld [vmem:[%s218 + $0x968] sm:$0xff]
        %v845 = vld [vmem:[%s218 + $0x970] sm:$0xf]
        %v846 = vld [vmem:[%s218 + $0x974] sm:$0xff]
        %v847 = vld [vmem:[%s218 + $0x97c] sm:$0xff]
        %v848 = vld [vmem:[%s218 + $0x984] sm:$0xf]
        %v849 = vld [vmem:[%s218 + $0x988] sm:$0xff]
        %v850 = vld [vmem:[%s218 + $0x990] sm:$0xff]
        %v851 = vld [vmem:[%s218 + $0x998] sm:$0xf]
        %v852 = vld [vmem:[%s218 + $0x99c] sm:$0xff]
        %v853 = vld [vmem:[%s218 + $0x9a4] sm:$0xff]
        %v854 = vld [vmem:[%s218 + $0x9ac] sm:$0xf]
        %v855 = vld [vmem:[%s218 + $0x9b0] sm:$0xff]
        %v856 = vld [vmem:[%s218 + $0x9b8] sm:$0xff]
        %v857 = vld [vmem:[%s218 + $0x9c0] sm:$0xf]
        %v858 = vld [vmem:[%s218 + $0x9c4] sm:$0xff]
        %v859 = vld [vmem:[%s218 + $0x9cc] sm:$0xff]
        %v860 = vld [vmem:[%s218 + $0x9d4] sm:$0xf]
        %v861 = vld [vmem:[%s218 + $0x9d8] sm:$0xff]
        %v862 = vld [vmem:[%s218 + $0x9e0] sm:$0xff]
        %v863 = vld [vmem:[%s218 + $0x9e8] sm:$0xf]
        %v864 = vld [vmem:[%s218 + $0x9ec] sm:$0xff]
        %v865 = vld [vmem:[%s218 + $0x9f4] sm:$0xff]
        %v866 = vld [vmem:[%s218 + $0x9fc] sm:$0xf]
        %v1251 = vunpack.c.l.b16 %v483
        %v1252 = vunpack.c.h.b16 %v483
        %v1253 = vunpack.c.l.b16 %v484
        %v1254 = vunpack.c.h.b16 %v484
        %v1255 = vunpack.c.l.b16 %v485
        %v1256 = vunpack.c.l.b16 %v486
        %v1257 = vunpack.c.h.b16 %v486
        %v1258 = vunpack.c.l.b16 %v487
        %v1259 = vunpack.c.h.b16 %v487
        %v1260 = vunpack.c.l.b16 %v488
        %v1261 = vunpack.c.l.b16 %v489
        %v1262 = vunpack.c.h.b16 %v489
        %v1263 = vunpack.c.l.b16 %v490
        %v1264 = vunpack.c.h.b16 %v490
        %v1265 = vunpack.c.l.b16 %v491
        %v1266 = vunpack.c.l.b16 %v492
        %v1267 = vunpack.c.h.b16 %v492
        %v1268 = vunpack.c.l.b16 %v493
        %v1269 = vunpack.c.h.b16 %v493
        %v1270 = vunpack.c.l.b16 %v494
        %v1271 = vunpack.c.l.b16 %v495
        %v1272 = vunpack.c.h.b16 %v495
        %v1273 = vunpack.c.l.b16 %v496
        %v1274 = vunpack.c.h.b16 %v496
        %v1275 = vunpack.c.l.b16 %v497
        %v1276 = vunpack.c.l.b16 %v498
        %v1277 = vunpack.c.h.b16 %v498
        %v1278 = vunpack.c.l.b16 %v499
        %v1279 = vunpack.c.h.b16 %v499
        %v1280 = vunpack.c.l.b16 %v500
        %v1281 = vunpack.c.l.b16 %v501
        %v1282 = vunpack.c.h.b16 %v501
        %v1283 = vunpack.c.l.b16 %v502
        %v1284 = vunpack.c.h.b16 %v502
        %v1285 = vunpack.c.l.b16 %v503
        %v1286 = vunpack.c.l.b16 %v504
        %v1287 = vunpack.c.h.b16 %v504
        %v1288 = vunpack.c.l.b16 %v505
        %v1289 = vunpack.c.h.b16 %v505
        %v1290 = vunpack.c.l.b16 %v506
        %v1291 = vunpack.c.l.b16 %v507
        %v1292 = vunpack.c.h.b16 %v507
        %v1293 = vunpack.c.l.b16 %v508
        %v1294 = vunpack.c.h.b16 %v508
        %v1295 = vunpack.c.l.b16 %v509
        %v1296 = vunpack.c.l.b16 %v510
        %v1297 = vunpack.c.h.b16 %v510
        %v1298 = vunpack.c.l.b16 %v511
        %v1299 = vunpack.c.h.b16 %v511
        %v1300 = vunpack.c.l.b16 %v512
        %v1301 = vunpack.c.l.b16 %v513
        %v1302 = vunpack.c.h.b16 %v513
        %v1303 = vunpack.c.l.b16 %v514
        %v1304 = vunpack.c.h.b16 %v514
        %v1305 = vunpack.c.l.b16 %v515
        %v1306 = vunpack.c.l.b16 %v516
        %v1307 = vunpack.c.h.b16 %v516
        %v1308 = vunpack.c.l.b16 %v517
        %v1309 = vunpack.c.h.b16 %v517
        %v1310 = vunpack.c.l.b16 %v518
        %v1311 = vunpack.c.l.b16 %v519
        %v1312 = vunpack.c.h.b16 %v519
        %v1313 = vunpack.c.l.b16 %v520
        %v1314 = vunpack.c.h.b16 %v520
        %v1315 = vunpack.c.l.b16 %v521
        %v1316 = vunpack.c.l.b16 %v522
        %v1317 = vunpack.c.h.b16 %v522
        %v1318 = vunpack.c.l.b16 %v523
        %v1319 = vunpack.c.h.b16 %v523
        %v1320 = vunpack.c.l.b16 %v524
        %v1321 = vunpack.c.l.b16 %v525
        %v1322 = vunpack.c.h.b16 %v525
        %v1323 = vunpack.c.l.b16 %v526
        %v1324 = vunpack.c.h.b16 %v526
        %v1325 = vunpack.c.l.b16 %v527
        %v1326 = vunpack.c.l.b16 %v528
        %v1327 = vunpack.c.h.b16 %v528
        %v1328 = vunpack.c.l.b16 %v529
        %v1329 = vunpack.c.h.b16 %v529
        %v1330 = vunpack.c.l.b16 %v530
        %v1331 = vunpack.c.l.b16 %v531
        %v1332 = vunpack.c.h.b16 %v531
        %v1333 = vunpack.c.l.b16 %v532
        %v1334 = vunpack.c.h.b16 %v532
        %v1335 = vunpack.c.l.b16 %v533
        %v1336 = vunpack.c.l.b16 %v534
        %v1337 = vunpack.c.h.b16 %v534
        %v1338 = vunpack.c.l.b16 %v535
        %v1339 = vunpack.c.h.b16 %v535
        %v1340 = vunpack.c.l.b16 %v536
        %v1341 = vunpack.c.l.b16 %v537
        %v1342 = vunpack.c.h.b16 %v537
        %v1343 = vunpack.c.l.b16 %v538
        %v1344 = vunpack.c.h.b16 %v538
        %v1345 = vunpack.c.l.b16 %v539
        %v1346 = vunpack.c.l.b16 %v540
        %v1347 = vunpack.c.h.b16 %v540
        %v1348 = vunpack.c.l.b16 %v541
        %v1349 = vunpack.c.h.b16 %v541
        %v1350 = vunpack.c.l.b16 %v542
        %v1351 = vunpack.c.l.b16 %v543
        %v1352 = vunpack.c.h.b16 %v543
        %v1353 = vunpack.c.l.b16 %v544
        %v1354 = vunpack.c.h.b16 %v544
        %v1355 = vunpack.c.l.b16 %v545
        %v1356 = vunpack.c.l.b16 %v546
        %v1357 = vunpack.c.h.b16 %v546
        %v1358 = vunpack.c.l.b16 %v547
        %v1359 = vunpack.c.h.b16 %v547
        %v1360 = vunpack.c.l.b16 %v548
        %v1361 = vunpack.c.l.b16 %v549
        %v1362 = vunpack.c.h.b16 %v549
        %v1363 = vunpack.c.l.b16 %v550
        %v1364 = vunpack.c.h.b16 %v550
        %v1365 = vunpack.c.l.b16 %v551
        %v1366 = vunpack.c.l.b16 %v552
        %v1367 = vunpack.c.h.b16 %v552
        %v1368 = vunpack.c.l.b16 %v553
        %v1369 = vunpack.c.h.b16 %v553
        %v1370 = vunpack.c.l.b16 %v554
        %v1371 = vunpack.c.l.b16 %v555
        %v1372 = vunpack.c.h.b16 %v555
        %v1373 = vunpack.c.l.b16 %v556
        %v1374 = vunpack.c.h.b16 %v556
        %v1375 = vunpack.c.l.b16 %v557
        %v1376 = vunpack.c.l.b16 %v558
        %v1377 = vunpack.c.h.b16 %v558
        %v1378 = vunpack.c.l.b16 %v559
        %v1379 = vunpack.c.h.b16 %v559
        %v1380 = vunpack.c.l.b16 %v560
        %v1381 = vunpack.c.l.b16 %v561
        %v1382 = vunpack.c.h.b16 %v561
        %v1383 = vunpack.c.l.b16 %v562
        %v1384 = vunpack.c.h.b16 %v562
        %v1385 = vunpack.c.l.b16 %v563
        %v1386 = vunpack.c.l.b16 %v564
        %v1387 = vunpack.c.h.b16 %v564
        %v1388 = vunpack.c.l.b16 %v565
        %v1389 = vunpack.c.h.b16 %v565
        %v1390 = vunpack.c.l.b16 %v566
        %v1391 = vunpack.c.l.b16 %v567
        %v1392 = vunpack.c.h.b16 %v567
        %v1393 = vunpack.c.l.b16 %v568
        %v1394 = vunpack.c.h.b16 %v568
        %v1395 = vunpack.c.l.b16 %v569
        %v1396 = vunpack.c.l.b16 %v570
        %v1397 = vunpack.c.h.b16 %v570
        %v1398 = vunpack.c.l.b16 %v571
        %v1399 = vunpack.c.h.b16 %v571
        %v1400 = vunpack.c.l.b16 %v572
        %v1401 = vunpack.c.l.b16 %v573
        %v1402 = vunpack.c.h.b16 %v573
        %v1403 = vunpack.c.l.b16 %v574
        %v1404 = vunpack.c.h.b16 %v574
        %v1405 = vunpack.c.l.b16 %v575
        %v1406 = vunpack.c.l.b16 %v576
        %v1407 = vunpack.c.h.b16 %v576
        %v1408 = vunpack.c.l.b16 %v577
        %v1409 = vunpack.c.h.b16 %v577
        %v1410 = vunpack.c.l.b16 %v578
        %v1411 = vunpack.c.l.b16 %v579
        %v1412 = vunpack.c.h.b16 %v579
        %v1413 = vunpack.c.l.b16 %v580
        %v1414 = vunpack.c.h.b16 %v580
        %v1415 = vunpack.c.l.b16 %v581
        %v1416 = vunpack.c.l.b16 %v582
        %v1417 = vunpack.c.h.b16 %v582
        %v1418 = vunpack.c.l.b16 %v583
        %v1419 = vunpack.c.h.b16 %v583
        %v1420 = vunpack.c.l.b16 %v584
        %v1421 = vunpack.c.l.b16 %v585
        %v1422 = vunpack.c.h.b16 %v585
        %v1423 = vunpack.c.l.b16 %v586
        %v1424 = vunpack.c.h.b16 %v586
        %v1425 = vunpack.c.l.b16 %v587
        %v1426 = vunpack.c.l.b16 %v588
        %v1427 = vunpack.c.h.b16 %v588
        %v1428 = vunpack.c.l.b16 %v589
        %v1429 = vunpack.c.h.b16 %v589
        %v1430 = vunpack.c.l.b16 %v590
        %v1431 = vunpack.c.l.b16 %v591
        %v1432 = vunpack.c.h.b16 %v591
        %v1433 = vunpack.c.l.b16 %v592
        %v1434 = vunpack.c.h.b16 %v592
        %v1435 = vunpack.c.l.b16 %v593
        %v1436 = vunpack.c.l.b16 %v594
        %v1437 = vunpack.c.h.b16 %v594
        %v1438 = vunpack.c.l.b16 %v595
        %v1439 = vunpack.c.h.b16 %v595
        %v1440 = vunpack.c.l.b16 %v596
        %v1441 = vunpack.c.l.b16 %v597
        %v1442 = vunpack.c.h.b16 %v597
        %v1443 = vunpack.c.l.b16 %v598
        %v1444 = vunpack.c.h.b16 %v598
        %v1445 = vunpack.c.l.b16 %v599
        %v1446 = vunpack.c.l.b16 %v600
        %v1447 = vunpack.c.h.b16 %v600
        %v1448 = vunpack.c.l.b16 %v601
        %v1449 = vunpack.c.h.b16 %v601
        %v1450 = vunpack.c.l.b16 %v602
        %v1451 = vunpack.c.l.b16 %v603
        %v1452 = vunpack.c.h.b16 %v603
        %v1453 = vunpack.c.l.b16 %v604
        %v1454 = vunpack.c.h.b16 %v604
        %v1455 = vunpack.c.l.b16 %v605
        %v1456 = vunpack.c.l.b16 %v606
        %v1457 = vunpack.c.h.b16 %v606
        %v1458 = vunpack.c.l.b16 %v607
        %v1459 = vunpack.c.h.b16 %v607
        %v1460 = vunpack.c.l.b16 %v608
        %v1461 = vunpack.c.l.b16 %v609
        %v1462 = vunpack.c.h.b16 %v609
        %v1463 = vunpack.c.l.b16 %v610
        %v1464 = vunpack.c.h.b16 %v610
        %v1465 = vunpack.c.l.b16 %v611
        %v1466 = vunpack.c.l.b16 %v612
        %v1467 = vunpack.c.h.b16 %v612
        %v1468 = vunpack.c.l.b16 %v613
        %v1469 = vunpack.c.h.b16 %v613
        %v1470 = vunpack.c.l.b16 %v614
        %v1471 = vunpack.c.l.b16 %v615
        %v1472 = vunpack.c.h.b16 %v615
        %v1473 = vunpack.c.l.b16 %v616
        %v1474 = vunpack.c.h.b16 %v616
        %v1475 = vunpack.c.l.b16 %v617
        %v1476 = vunpack.c.l.b16 %v618
        %v1477 = vunpack.c.h.b16 %v618
        %v1478 = vunpack.c.l.b16 %v619
        %v1479 = vunpack.c.h.b16 %v619
        %v1480 = vunpack.c.l.b16 %v620
        %v1481 = vunpack.c.l.b16 %v621
        %v1482 = vunpack.c.h.b16 %v621
        %v1483 = vunpack.c.l.b16 %v622
        %v1484 = vunpack.c.h.b16 %v622
        %v1485 = vunpack.c.l.b16 %v623
        %v1486 = vunpack.c.l.b16 %v624
        %v1487 = vunpack.c.h.b16 %v624
        %v1488 = vunpack.c.l.b16 %v625
        %v1489 = vunpack.c.h.b16 %v625
        %v1490 = vunpack.c.l.b16 %v626
        %v1491 = vunpack.c.l.b16 %v627
        %v1492 = vunpack.c.h.b16 %v627
        %v1493 = vunpack.c.l.b16 %v628
        %v1494 = vunpack.c.h.b16 %v628
        %v1495 = vunpack.c.l.b16 %v629
        %v1496 = vunpack.c.l.b16 %v630
        %v1497 = vunpack.c.h.b16 %v630
        %v1498 = vunpack.c.l.b16 %v631
        %v1499 = vunpack.c.h.b16 %v631
        %v1500 = vunpack.c.l.b16 %v632
        %v1501 = vunpack.c.l.b16 %v633
        %v1502 = vunpack.c.h.b16 %v633
        %v1503 = vunpack.c.l.b16 %v634
        %v1504 = vunpack.c.h.b16 %v634
        %v1505 = vunpack.c.l.b16 %v635
        %v1506 = vunpack.c.l.b16 %v636
        %v1507 = vunpack.c.h.b16 %v636
        %v1508 = vunpack.c.l.b16 %v637
        %v1509 = vunpack.c.h.b16 %v637
        %v1510 = vunpack.c.l.b16 %v638
        %v1511 = vunpack.c.l.b16 %v639
        %v1512 = vunpack.c.h.b16 %v639
        %v1513 = vunpack.c.l.b16 %v640
        %v1514 = vunpack.c.h.b16 %v640
        %v1515 = vunpack.c.l.b16 %v641
        %v1516 = vunpack.c.l.b16 %v642
        %v1517 = vunpack.c.h.b16 %v642
        %v1518 = vunpack.c.l.b16 %v643
        %v1519 = vunpack.c.h.b16 %v643
        %v1520 = vunpack.c.l.b16 %v644
        %v1521 = vunpack.c.l.b16 %v645
        %v1522 = vunpack.c.h.b16 %v645
        %v1523 = vunpack.c.l.b16 %v646
        %v1524 = vunpack.c.h.b16 %v646
        %v1525 = vunpack.c.l.b16 %v647
        %v1526 = vunpack.c.l.b16 %v648
        %v1527 = vunpack.c.h.b16 %v648
        %v1528 = vunpack.c.l.b16 %v649
        %v1529 = vunpack.c.h.b16 %v649
        %v1530 = vunpack.c.l.b16 %v650
        %v1531 = vunpack.c.l.b16 %v651
        %v1532 = vunpack.c.h.b16 %v651
        %v1533 = vunpack.c.l.b16 %v652
        %v1534 = vunpack.c.h.b16 %v652
        %v1535 = vunpack.c.l.b16 %v653
        %v1536 = vunpack.c.l.b16 %v654
        %v1537 = vunpack.c.h.b16 %v654
        %v1538 = vunpack.c.l.b16 %v655
        %v1539 = vunpack.c.h.b16 %v655
        %v1540 = vunpack.c.l.b16 %v656
        %v1541 = vunpack.c.l.b16 %v657
        %v1542 = vunpack.c.h.b16 %v657
        %v1543 = vunpack.c.l.b16 %v658
        %v1544 = vunpack.c.h.b16 %v658
        %v1545 = vunpack.c.l.b16 %v659
        %v1546 = vunpack.c.l.b16 %v660
        %v1547 = vunpack.c.h.b16 %v660
        %v1548 = vunpack.c.l.b16 %v661
        %v1549 = vunpack.c.h.b16 %v661
        %v1550 = vunpack.c.l.b16 %v662
        %v1551 = vunpack.c.l.b16 %v663
        %v1552 = vunpack.c.h.b16 %v663
        %v1553 = vunpack.c.l.b16 %v664
        %v1554 = vunpack.c.h.b16 %v664
        %v1555 = vunpack.c.l.b16 %v665
        %v1556 = vunpack.c.l.b16 %v666
        %v1557 = vunpack.c.h.b16 %v666
        %v1558 = vunpack.c.l.b16 %v667
        %v1559 = vunpack.c.h.b16 %v667
        %v1560 = vunpack.c.l.b16 %v668
        %v1561 = vunpack.c.l.b16 %v669
        %v1562 = vunpack.c.h.b16 %v669
        %v1563 = vunpack.c.l.b16 %v670
        %v1564 = vunpack.c.h.b16 %v670
        %v1565 = vunpack.c.l.b16 %v671
        %v1566 = vunpack.c.l.b16 %v672
        %v1567 = vunpack.c.h.b16 %v672
        %v1568 = vunpack.c.l.b16 %v673
        %v1569 = vunpack.c.h.b16 %v673
        %v1570 = vunpack.c.l.b16 %v674
        %v1571 = vunpack.c.l.b16 %v675
        %v1572 = vunpack.c.h.b16 %v675
        %v1573 = vunpack.c.l.b16 %v676
        %v1574 = vunpack.c.h.b16 %v676
        %v1575 = vunpack.c.l.b16 %v677
        %v1576 = vunpack.c.l.b16 %v678
        %v1577 = vunpack.c.h.b16 %v678
        %v1578 = vunpack.c.l.b16 %v679
        %v1579 = vunpack.c.h.b16 %v679
        %v1580 = vunpack.c.l.b16 %v680
        %v1581 = vunpack.c.l.b16 %v681
        %v1582 = vunpack.c.h.b16 %v681
        %v1583 = vunpack.c.l.b16 %v682
        %v1584 = vunpack.c.h.b16 %v682
        %v1585 = vunpack.c.l.b16 %v683
        %v1586 = vunpack.c.l.b16 %v684
        %v1587 = vunpack.c.h.b16 %v684
        %v1588 = vunpack.c.l.b16 %v685
        %v1589 = vunpack.c.h.b16 %v685
        %v1590 = vunpack.c.l.b16 %v686
        %v1591 = vunpack.c.l.b16 %v687
        %v1592 = vunpack.c.h.b16 %v687
        %v1593 = vunpack.c.l.b16 %v688
        %v1594 = vunpack.c.h.b16 %v688
        %v1595 = vunpack.c.l.b16 %v689
        %v1596 = vunpack.c.l.b16 %v690
        %v1597 = vunpack.c.h.b16 %v690
        %v1598 = vunpack.c.l.b16 %v691
        %v1599 = vunpack.c.h.b16 %v691
        %v1600 = vunpack.c.l.b16 %v692
        %v1601 = vunpack.c.l.b16 %v693
        %v1602 = vunpack.c.h.b16 %v693
        %v1603 = vunpack.c.l.b16 %v694
        %v1604 = vunpack.c.h.b16 %v694
        %v1605 = vunpack.c.l.b16 %v695
        %v1606 = vunpack.c.l.b16 %v696
        %v1607 = vunpack.c.h.b16 %v696
        %v1608 = vunpack.c.l.b16 %v697
        %v1609 = vunpack.c.h.b16 %v697
        %v1610 = vunpack.c.l.b16 %v698
        %v1611 = vunpack.c.l.b16 %v699
        %v1612 = vunpack.c.h.b16 %v699
        %v1613 = vunpack.c.l.b16 %v700
        %v1614 = vunpack.c.h.b16 %v700
        %v1615 = vunpack.c.l.b16 %v701
        %v1616 = vunpack.c.l.b16 %v702
        %v1617 = vunpack.c.h.b16 %v702
        %v1618 = vunpack.c.l.b16 %v703
        %v1619 = vunpack.c.h.b16 %v703
        %v1620 = vunpack.c.l.b16 %v704
        %v1621 = vunpack.c.l.b16 %v705
        %v1622 = vunpack.c.h.b16 %v705
        %v1623 = vunpack.c.l.b16 %v706
        %v1624 = vunpack.c.h.b16 %v706
        %v1625 = vunpack.c.l.b16 %v707
        %v1626 = vunpack.c.l.b16 %v708
        %v1627 = vunpack.c.h.b16 %v708
        %v1628 = vunpack.c.l.b16 %v709
        %v1629 = vunpack.c.h.b16 %v709
        %v1630 = vunpack.c.l.b16 %v710
        %v1631 = vunpack.c.l.b16 %v711
        %v1632 = vunpack.c.h.b16 %v711
        %v1633 = vunpack.c.l.b16 %v712
        %v1634 = vunpack.c.h.b16 %v712
        %v1635 = vunpack.c.l.b16 %v713
        %v1636 = vunpack.c.l.b16 %v714
        %v1637 = vunpack.c.h.b16 %v714
        %v1638 = vunpack.c.l.b16 %v715
        %v1639 = vunpack.c.h.b16 %v715
        %v1640 = vunpack.c.l.b16 %v716
        %v1641 = vunpack.c.l.b16 %v717
        %v1642 = vunpack.c.h.b16 %v717
        %v1643 = vunpack.c.l.b16 %v718
        %v1644 = vunpack.c.h.b16 %v718
        %v1645 = vunpack.c.l.b16 %v719
        %v1646 = vunpack.c.l.b16 %v720
        %v1647 = vunpack.c.h.b16 %v720
        %v1648 = vunpack.c.l.b16 %v721
        %v1649 = vunpack.c.h.b16 %v721
        %v1650 = vunpack.c.l.b16 %v722
        %v1651 = vunpack.c.l.b16 %v723
        %v1652 = vunpack.c.h.b16 %v723
        %v1653 = vunpack.c.l.b16 %v724
        %v1654 = vunpack.c.h.b16 %v724
        %v1655 = vunpack.c.l.b16 %v725
        %v1656 = vunpack.c.l.b16 %v726
        %v1657 = vunpack.c.h.b16 %v726
        %v1658 = vunpack.c.l.b16 %v727
        %v1659 = vunpack.c.h.b16 %v727
        %v1660 = vunpack.c.l.b16 %v728
        %v1661 = vunpack.c.l.b16 %v729
        %v1662 = vunpack.c.h.b16 %v729
        %v1663 = vunpack.c.l.b16 %v730
        %v1664 = vunpack.c.h.b16 %v730
        %v1665 = vunpack.c.l.b16 %v731
        %v1666 = vunpack.c.l.b16 %v732
        %v1667 = vunpack.c.h.b16 %v732
        %v1668 = vunpack.c.l.b16 %v733
        %v1669 = vunpack.c.h.b16 %v733
        %v1670 = vunpack.c.l.b16 %v734
        %v1671 = vunpack.c.l.b16 %v735
        %v1672 = vunpack.c.h.b16 %v735
        %v1673 = vunpack.c.l.b16 %v736
        %v1674 = vunpack.c.h.b16 %v736
        %v1675 = vunpack.c.l.b16 %v737
        %v1676 = vunpack.c.l.b16 %v738
        %v1677 = vunpack.c.h.b16 %v738
        %v1678 = vunpack.c.l.b16 %v739
        %v1679 = vunpack.c.h.b16 %v739
        %v1680 = vunpack.c.l.b16 %v740
        %v1681 = vunpack.c.l.b16 %v741
        %v1682 = vunpack.c.h.b16 %v741
        %v1683 = vunpack.c.l.b16 %v742
        %v1684 = vunpack.c.h.b16 %v742
        %v1685 = vunpack.c.l.b16 %v743
        %v1686 = vunpack.c.l.b16 %v744
        %v1687 = vunpack.c.h.b16 %v744
        %v1688 = vunpack.c.l.b16 %v745
        %v1689 = vunpack.c.h.b16 %v745
        %v1690 = vunpack.c.l.b16 %v746
        %v1691 = vunpack.c.l.b16 %v747
        %v1692 = vunpack.c.h.b16 %v747
        %v1693 = vunpack.c.l.b16 %v748
        %v1694 = vunpack.c.h.b16 %v748
        %v1695 = vunpack.c.l.b16 %v749
        %v1696 = vunpack.c.l.b16 %v750
        %v1697 = vunpack.c.h.b16 %v750
        %v1698 = vunpack.c.l.b16 %v751
        %v1699 = vunpack.c.h.b16 %v751
        %v1700 = vunpack.c.l.b16 %v752
        %v1701 = vunpack.c.l.b16 %v753
        %v1702 = vunpack.c.h.b16 %v753
        %v1703 = vunpack.c.l.b16 %v754
        %v1704 = vunpack.c.h.b16 %v754
        %v1705 = vunpack.c.l.b16 %v755
        %v1706 = vunpack.c.l.b16 %v756
        %v1707 = vunpack.c.h.b16 %v756
        %v1708 = vunpack.c.l.b16 %v757
        %v1709 = vunpack.c.h.b16 %v757
        %v1710 = vunpack.c.l.b16 %v758
        %v1711 = vunpack.c.l.b16 %v759
        %v1712 = vunpack.c.h.b16 %v759
        %v1713 = vunpack.c.l.b16 %v760
        %v1714 = vunpack.c.h.b16 %v760
        %v1715 = vunpack.c.l.b16 %v761
        %v1716 = vunpack.c.l.b16 %v762
        %v1717 = vunpack.c.h.b16 %v762
        %v1718 = vunpack.c.l.b16 %v763
        %v1719 = vunpack.c.h.b16 %v763
        %v1720 = vunpack.c.l.b16 %v764
        %v1721 = vunpack.c.l.b16 %v765
        %v1722 = vunpack.c.h.b16 %v765
        %v1723 = vunpack.c.l.b16 %v766
        %v1724 = vunpack.c.h.b16 %v766
        %v1725 = vunpack.c.l.b16 %v767
        %v1726 = vunpack.c.l.b16 %v768
        %v1727 = vunpack.c.h.b16 %v768
        %v1728 = vunpack.c.l.b16 %v769
        %v1729 = vunpack.c.h.b16 %v769
        %v1730 = vunpack.c.l.b16 %v770
        %v1731 = vunpack.c.l.b16 %v771
        %v1732 = vunpack.c.h.b16 %v771
        %v1733 = vunpack.c.l.b16 %v772
        %v1734 = vunpack.c.h.b16 %v772
        %v1735 = vunpack.c.l.b16 %v773
        %v1736 = vunpack.c.l.b16 %v774
        %v1737 = vunpack.c.h.b16 %v774
        %v1738 = vunpack.c.l.b16 %v775
        %v1739 = vunpack.c.h.b16 %v775
        %v1740 = vunpack.c.l.b16 %v776
        %v1741 = vunpack.c.l.b16 %v777
        %v1742 = vunpack.c.h.b16 %v777
        %v1743 = vunpack.c.l.b16 %v778
        %v1744 = vunpack.c.h.b16 %v778
        %v1745 = vunpack.c.l.b16 %v779
        %v1746 = vunpack.c.l.b16 %v780
        %v1747 = vunpack.c.h.b16 %v780
        %v1748 = vunpack.c.l.b16 %v781
        %v1749 = vunpack.c.h.b16 %v781
        %v1750 = vunpack.c.l.b16 %v782
        %v1751 = vunpack.c.l.b16 %v783
        %v1752 = vunpack.c.h.b16 %v783
        %v1753 = vunpack.c.l.b16 %v784
        %v1754 = vunpack.c.h.b16 %v784
        %v1755 = vunpack.c.l.b16 %v785
        %v1756 = vunpack.c.l.b16 %v786
        %v1757 = vunpack.c.h.b16 %v786
        %v1758 = vunpack.c.l.b16 %v787
        %v1759 = vunpack.c.h.b16 %v787
        %v1760 = vunpack.c.l.b16 %v788
        %v1761 = vunpack.c.l.b16 %v789
        %v1762 = vunpack.c.h.b16 %v789
        %v1763 = vunpack.c.l.b16 %v790
        %v1764 = vunpack.c.h.b16 %v790
        %v1765 = vunpack.c.l.b16 %v791
        %v1766 = vunpack.c.l.b16 %v792
        %v1767 = vunpack.c.h.b16 %v792
        %v1768 = vunpack.c.l.b16 %v793
        %v1769 = vunpack.c.h.b16 %v793
        %v1770 = vunpack.c.l.b16 %v794
        %v1771 = vunpack.c.l.b16 %v795
        %v1772 = vunpack.c.h.b16 %v795
        %v1773 = vunpack.c.l.b16 %v796
        %v1774 = vunpack.c.h.b16 %v796
        %v1775 = vunpack.c.l.b16 %v797
        %v1776 = vunpack.c.l.b16 %v798
        %v1777 = vunpack.c.h.b16 %v798
        %v1778 = vunpack.c.l.b16 %v799
        %v1779 = vunpack.c.h.b16 %v799
        %v1780 = vunpack.c.l.b16 %v800
        %v1781 = vunpack.c.l.b16 %v801
        %v1782 = vunpack.c.h.b16 %v801
        %v1783 = vunpack.c.l.b16 %v802
        %v1784 = vunpack.c.h.b16 %v802
        %v1785 = vunpack.c.l.b16 %v803
        %v1786 = vunpack.c.l.b16 %v804
        %v1787 = vunpack.c.h.b16 %v804
        %v1788 = vunpack.c.l.b16 %v805
        %v1789 = vunpack.c.h.b16 %v805
        %v1790 = vunpack.c.l.b16 %v806
        %v1791 = vunpack.c.l.b16 %v807
        %v1792 = vunpack.c.h.b16 %v807
        %v1793 = vunpack.c.l.b16 %v808
        %v1794 = vunpack.c.h.b16 %v808
        %v1795 = vunpack.c.l.b16 %v809
        %v1796 = vunpack.c.l.b16 %v810
        %v1797 = vunpack.c.h.b16 %v810
        %v1798 = vunpack.c.l.b16 %v811
        %v1799 = vunpack.c.h.b16 %v811
        %v1800 = vunpack.c.l.b16 %v812
        %v1801 = vunpack.c.l.b16 %v813
        %v1802 = vunpack.c.h.b16 %v813
        %v1803 = vunpack.c.l.b16 %v814
        %v1804 = vunpack.c.h.b16 %v814
        %v1805 = vunpack.c.l.b16 %v815
        %v1806 = vunpack.c.l.b16 %v816
        %v1807 = vunpack.c.h.b16 %v816
        %v1808 = vunpack.c.l.b16 %v817
        %v1809 = vunpack.c.h.b16 %v817
        %v1810 = vunpack.c.l.b16 %v818
        %v1811 = vunpack.c.l.b16 %v819
        %v1812 = vunpack.c.h.b16 %v819
        %v1813 = vunpack.c.l.b16 %v820
        %v1814 = vunpack.c.h.b16 %v820
        %v1815 = vunpack.c.l.b16 %v821
        %v1816 = vunpack.c.l.b16 %v822
        %v1817 = vunpack.c.h.b16 %v822
        %v1818 = vunpack.c.l.b16 %v823
        %v1819 = vunpack.c.h.b16 %v823
        %v1820 = vunpack.c.l.b16 %v824
        %v1821 = vunpack.c.l.b16 %v825
        %v1822 = vunpack.c.h.b16 %v825
        %v1823 = vunpack.c.l.b16 %v826
        %v1824 = vunpack.c.h.b16 %v826
        %v1825 = vunpack.c.l.b16 %v827
        %v1826 = vunpack.c.l.b16 %v828
        %v1827 = vunpack.c.h.b16 %v828
        %v1828 = vunpack.c.l.b16 %v829
        %v1829 = vunpack.c.h.b16 %v829
        %v1830 = vunpack.c.l.b16 %v830
        %v1831 = vunpack.c.l.b16 %v831
        %v1832 = vunpack.c.h.b16 %v831
        %v1833 = vunpack.c.l.b16 %v832
        %v1834 = vunpack.c.h.b16 %v832
        %v1835 = vunpack.c.l.b16 %v833
        %v1836 = vunpack.c.l.b16 %v834
        %v1837 = vunpack.c.h.b16 %v834
        %v1838 = vunpack.c.l.b16 %v835
        %v1839 = vunpack.c.h.b16 %v835
        %v1840 = vunpack.c.l.b16 %v836
        %v1841 = vunpack.c.l.b16 %v837
        %v1842 = vunpack.c.h.b16 %v837
        %v1843 = vunpack.c.l.b16 %v838
        %v1844 = vunpack.c.h.b16 %v838
        %v1845 = vunpack.c.l.b16 %v839
        %v1846 = vunpack.c.l.b16 %v840
        %v1847 = vunpack.c.h.b16 %v840
        %v1848 = vunpack.c.l.b16 %v841
        %v1849 = vunpack.c.h.b16 %v841
        %v1850 = vunpack.c.l.b16 %v842
        %v1851 = vunpack.c.l.b16 %v843
        %v1852 = vunpack.c.h.b16 %v843
        %v1853 = vunpack.c.l.b16 %v844
        %v1854 = vunpack.c.h.b16 %v844
        %v1855 = vunpack.c.l.b16 %v845
        %v1856 = vunpack.c.l.b16 %v846
        %v1857 = vunpack.c.h.b16 %v846
        %v1858 = vunpack.c.l.b16 %v847
        %v1859 = vunpack.c.h.b16 %v847
        %v1860 = vunpack.c.l.b16 %v848
        %v1861 = vunpack.c.l.b16 %v849
        %v1862 = vunpack.c.h.b16 %v849
        %v1863 = vunpack.c.l.b16 %v850
        %v1864 = vunpack.c.h.b16 %v850
        %v1865 = vunpack.c.l.b16 %v851
        %v1866 = vunpack.c.l.b16 %v852
        %v1867 = vunpack.c.h.b16 %v852
        %v1868 = vunpack.c.l.b16 %v853
        %v1869 = vunpack.c.h.b16 %v853
        %v1870 = vunpack.c.l.b16 %v854
        %v1871 = vunpack.c.l.b16 %v855
        %v1872 = vunpack.c.h.b16 %v855
        %v1873 = vunpack.c.l.b16 %v856
        %v1874 = vunpack.c.h.b16 %v856
        %v1875 = vunpack.c.l.b16 %v857
        %v1876 = vunpack.c.l.b16 %v858
        %v1877 = vunpack.c.h.b16 %v858
        %v1878 = vunpack.c.l.b16 %v859
        %v1879 = vunpack.c.h.b16 %v859
        %v1880 = vunpack.c.l.b16 %v860
        %v1881 = vunpack.c.l.b16 %v861
        %v1882 = vunpack.c.h.b16 %v861
        %v1883 = vunpack.c.l.b16 %v862
        %v1884 = vunpack.c.h.b16 %v862
        %v1885 = vunpack.c.l.b16 %v863
        %v1886 = vunpack.c.l.b16 %v864
        %v1887 = vunpack.c.h.b16 %v864
        %v1888 = vunpack.c.l.b16 %v865
        %v1889 = vunpack.c.h.b16 %v865
        %v1890 = vunpack.c.l.b16 %v866
        %v1891 = vpack.c.b16 %v1256, %v1251
        %v1892 = vpack.c.b16 %v1257, %v1252
        %v1893 = vpack.c.b16 %v1258, %v1253
        %v1894 = vpack.c.b16 %v1259, %v1254
        %v1895 = vpack.c.b16 %v1260, %v1255
        %v1896 = vpack.c.b16 %v1266, %v1261
        %v1897 = vpack.c.b16 %v1267, %v1262
        %v1898 = vpack.c.b16 %v1268, %v1263
        %v1899 = vpack.c.b16 %v1269, %v1264
        %v1900 = vpack.c.b16 %v1270, %v1265
        %v1901 = vpack.c.b16 %v1276, %v1271
        %v1902 = vpack.c.b16 %v1277, %v1272
        %v1903 = vpack.c.b16 %v1278, %v1273
        %v1904 = vpack.c.b16 %v1279, %v1274
        %v1905 = vpack.c.b16 %v1280, %v1275
        %v1906 = vpack.c.b16 %v1286, %v1281
        %v1907 = vpack.c.b16 %v1287, %v1282
        %v1908 = vpack.c.b16 %v1288, %v1283
        %v1909 = vpack.c.b16 %v1289, %v1284
        %v1910 = vpack.c.b16 %v1290, %v1285
        %v1911 = vpack.c.b16 %v1296, %v1291
        %v1912 = vpack.c.b16 %v1297, %v1292
        %v1913 = vpack.c.b16 %v1298, %v1293
        %v1914 = vpack.c.b16 %v1299, %v1294
        %v1915 = vpack.c.b16 %v1300, %v1295
        %v1916 = vpack.c.b16 %v1306, %v1301
        %v1917 = vpack.c.b16 %v1307, %v1302
        %v1918 = vpack.c.b16 %v1308, %v1303
        %v1919 = vpack.c.b16 %v1309, %v1304
        %v1920 = vpack.c.b16 %v1310, %v1305
        %v1921 = vpack.c.b16 %v1316, %v1311
        %v1922 = vpack.c.b16 %v1317, %v1312
        %v1923 = vpack.c.b16 %v1318, %v1313
        %v1924 = vpack.c.b16 %v1319, %v1314
        %v1925 = vpack.c.b16 %v1320, %v1315
        %v1926 = vpack.c.b16 %v1326, %v1321
        %v1927 = vpack.c.b16 %v1327, %v1322
        %v1928 = vpack.c.b16 %v1328, %v1323
        %v1929 = vpack.c.b16 %v1329, %v1324
        %v1930 = vpack.c.b16 %v1330, %v1325
        %v1931 = vpack.c.b16 %v1336, %v1331
        %v1932 = vpack.c.b16 %v1337, %v1332
        %v1933 = vpack.c.b16 %v1338, %v1333
        %v1934 = vpack.c.b16 %v1339, %v1334
        %v1935 = vpack.c.b16 %v1340, %v1335
        %v1936 = vpack.c.b16 %v1346, %v1341
        %v1937 = vpack.c.b16 %v1347, %v1342
        %v1938 = vpack.c.b16 %v1348, %v1343
        %v1939 = vpack.c.b16 %v1349, %v1344
        %v1940 = vpack.c.b16 %v1350, %v1345
        %v1941 = vpack.c.b16 %v1356, %v1351
        %v1942 = vpack.c.b16 %v1357, %v1352
        %v1943 = vpack.c.b16 %v1358, %v1353
        %v1944 = vpack.c.b16 %v1359, %v1354
        %v1945 = vpack.c.b16 %v1360, %v1355
        %v1946 = vpack.c.b16 %v1366, %v1361
        %v1947 = vpack.c.b16 %v1367, %v1362
        %v1948 = vpack.c.b16 %v1368, %v1363
        %v1949 = vpack.c.b16 %v1369, %v1364
        %v1950 = vpack.c.b16 %v1370, %v1365
        %v1951 = vpack.c.b16 %v1376, %v1371
        %v1952 = vpack.c.b16 %v1377, %v1372
        %v1953 = vpack.c.b16 %v1378, %v1373
        %v1954 = vpack.c.b16 %v1379, %v1374
        %v1955 = vpack.c.b16 %v1380, %v1375
        %v1956 = vpack.c.b16 %v1386, %v1381
        %v1957 = vpack.c.b16 %v1387, %v1382
        %v1958 = vpack.c.b16 %v1388, %v1383
        %v1959 = vpack.c.b16 %v1389, %v1384
        %v1960 = vpack.c.b16 %v1390, %v1385
        %v1961 = vpack.c.b16 %v1396, %v1391
        %v1962 = vpack.c.b16 %v1397, %v1392
        %v1963 = vpack.c.b16 %v1398, %v1393
        %v1964 = vpack.c.b16 %v1399, %v1394
        %v1965 = vpack.c.b16 %v1400, %v1395
        %v1966 = vpack.c.b16 %v1406, %v1401
        %v1967 = vpack.c.b16 %v1407, %v1402
        %v1968 = vpack.c.b16 %v1408, %v1403
        %v1969 = vpack.c.b16 %v1409, %v1404
        %v1970 = vpack.c.b16 %v1410, %v1405
        %v1971 = vpack.c.b16 %v1416, %v1411
        %v1972 = vpack.c.b16 %v1417, %v1412
        %v1973 = vpack.c.b16 %v1418, %v1413
        %v1974 = vpack.c.b16 %v1419, %v1414
        %v1975 = vpack.c.b16 %v1420, %v1415
        %v1976 = vpack.c.b16 %v1426, %v1421
        %v1977 = vpack.c.b16 %v1427, %v1422
        %v1978 = vpack.c.b16 %v1428, %v1423
        %v1979 = vpack.c.b16 %v1429, %v1424
        %v1980 = vpack.c.b16 %v1430, %v1425
        %v1981 = vpack.c.b16 %v1436, %v1431
        %v1982 = vpack.c.b16 %v1437, %v1432
        %v1983 = vpack.c.b16 %v1438, %v1433
        %v1984 = vpack.c.b16 %v1439, %v1434
        %v1985 = vpack.c.b16 %v1440, %v1435
        %v1986 = vpack.c.b16 %v1446, %v1441
        %v1987 = vpack.c.b16 %v1447, %v1442
        %v1988 = vpack.c.b16 %v1448, %v1443
        %v1989 = vpack.c.b16 %v1449, %v1444
        %v1990 = vpack.c.b16 %v1450, %v1445
        %v1991 = vpack.c.b16 %v1456, %v1451
        %v1992 = vpack.c.b16 %v1457, %v1452
        %v1993 = vpack.c.b16 %v1458, %v1453
        %v1994 = vpack.c.b16 %v1459, %v1454
        %v1995 = vpack.c.b16 %v1460, %v1455
        %v1996 = vpack.c.b16 %v1466, %v1461
        %v1997 = vpack.c.b16 %v1467, %v1462
        %v1998 = vpack.c.b16 %v1468, %v1463
        %v1999 = vpack.c.b16 %v1469, %v1464
        %v2000 = vpack.c.b16 %v1470, %v1465
        %v2001 = vpack.c.b16 %v1476, %v1471
        %v2002 = vpack.c.b16 %v1477, %v1472
        %v2003 = vpack.c.b16 %v1478, %v1473
        %v2004 = vpack.c.b16 %v1479, %v1474
        %v2005 = vpack.c.b16 %v1480, %v1475
        %v2006 = vpack.c.b16 %v1486, %v1481
        %v2007 = vpack.c.b16 %v1487, %v1482
        %v2008 = vpack.c.b16 %v1488, %v1483
        %v2009 = vpack.c.b16 %v1489, %v1484
        %v2010 = vpack.c.b16 %v1490, %v1485
        %v2011 = vpack.c.b16 %v1496, %v1491
        %v2012 = vpack.c.b16 %v1497, %v1492
        %v2013 = vpack.c.b16 %v1498, %v1493
        %v2014 = vpack.c.b16 %v1499, %v1494
        %v2015 = vpack.c.b16 %v1500, %v1495
        %v2016 = vpack.c.b16 %v1506, %v1501
        %v2017 = vpack.c.b16 %v1507, %v1502
        %v2018 = vpack.c.b16 %v1508, %v1503
        %v2019 = vpack.c.b16 %v1509, %v1504
        %v2020 = vpack.c.b16 %v1510, %v1505
        %v2021 = vpack.c.b16 %v1516, %v1511
        %v2022 = vpack.c.b16 %v1517, %v1512
        %v2023 = vpack.c.b16 %v1518, %v1513
        %v2024 = vpack.c.b16 %v1519, %v1514
        %v2025 = vpack.c.b16 %v1520, %v1515
        %v2026 = vpack.c.b16 %v1526, %v1521
        %v2027 = vpack.c.b16 %v1527, %v1522
        %v2028 = vpack.c.b16 %v1528, %v1523
        %v2029 = vpack.c.b16 %v1529, %v1524
        %v2030 = vpack.c.b16 %v1530, %v1525
        %v2031 = vpack.c.b16 %v1536, %v1531
        %v2032 = vpack.c.b16 %v1537, %v1532
        %v2033 = vpack.c.b16 %v1538, %v1533
        %v2034 = vpack.c.b16 %v1539, %v1534
        %v2035 = vpack.c.b16 %v1540, %v1535
        %v2036 = vpack.c.b16 %v1546, %v1541
        %v2037 = vpack.c.b16 %v1547, %v1542
        %v2038 = vpack.c.b16 %v1548, %v1543
        %v2039 = vpack.c.b16 %v1549, %v1544
        %v2040 = vpack.c.b16 %v1550, %v1545
        %v2041 = vpack.c.b16 %v1556, %v1551
        %v2042 = vpack.c.b16 %v1557, %v1552
        %v2043 = vpack.c.b16 %v1558, %v1553
        %v2044 = vpack.c.b16 %v1559, %v1554
        %v2045 = vpack.c.b16 %v1560, %v1555
        %v2046 = vpack.c.b16 %v1566, %v1561
        %v2047 = vpack.c.b16 %v1567, %v1562
        %v2048 = vpack.c.b16 %v1568, %v1563
        %v2049 = vpack.c.b16 %v1569, %v1564
        %v2050 = vpack.c.b16 %v1570, %v1565
        %v2051 = vpack.c.b16 %v1576, %v1571
        %v2052 = vpack.c.b16 %v1577, %v1572
        %v2053 = vpack.c.b16 %v1578, %v1573
        %v2054 = vpack.c.b16 %v1579, %v1574
        %v2055 = vpack.c.b16 %v1580, %v1575
        %v2056 = vpack.c.b16 %v1586, %v1581
        %v2057 = vpack.c.b16 %v1587, %v1582
        %v2058 = vpack.c.b16 %v1588, %v1583
        %v2059 = vpack.c.b16 %v1589, %v1584
        %v2060 = vpack.c.b16 %v1590, %v1585
        %v2061 = vpack.c.b16 %v1596, %v1591
        %v2062 = vpack.c.b16 %v1597, %v1592
        %v2063 = vpack.c.b16 %v1598, %v1593
        %v2064 = vpack.c.b16 %v1599, %v1594
        %v2065 = vpack.c.b16 %v1600, %v1595
        %v2066 = vpack.c.b16 %v1606, %v1601
        %v2067 = vpack.c.b16 %v1607, %v1602
        %v2068 = vpack.c.b16 %v1608, %v1603
        %v2069 = vpack.c.b16 %v1609, %v1604
        %v2070 = vpack.c.b16 %v1610, %v1605
        %v2071 = vpack.c.b16 %v1616, %v1611
        %v2072 = vpack.c.b16 %v1617, %v1612
        %v2073 = vpack.c.b16 %v1618, %v1613
        %v2074 = vpack.c.b16 %v1619, %v1614
        %v2075 = vpack.c.b16 %v1620, %v1615
        %v2076 = vpack.c.b16 %v1626, %v1621
        %v2077 = vpack.c.b16 %v1627, %v1622
        %v2078 = vpack.c.b16 %v1628, %v1623
        %v2079 = vpack.c.b16 %v1629, %v1624
        %v2080 = vpack.c.b16 %v1630, %v1625
        %v2081 = vpack.c.b16 %v1636, %v1631
        %v2082 = vpack.c.b16 %v1637, %v1632
        %v2083 = vpack.c.b16 %v1638, %v1633
        %v2084 = vpack.c.b16 %v1639, %v1634
        %v2085 = vpack.c.b16 %v1640, %v1635
        %v2086 = vpack.c.b16 %v1646, %v1641
        %v2087 = vpack.c.b16 %v1647, %v1642
        %v2088 = vpack.c.b16 %v1648, %v1643
        %v2089 = vpack.c.b16 %v1649, %v1644
        %v2090 = vpack.c.b16 %v1650, %v1645
        %v2091 = vpack.c.b16 %v1656, %v1651
        %v2092 = vpack.c.b16 %v1657, %v1652
        %v2093 = vpack.c.b16 %v1658, %v1653
        %v2094 = vpack.c.b16 %v1659, %v1654
        %v2095 = vpack.c.b16 %v1660, %v1655
        %v2096 = vpack.c.b16 %v1666, %v1661
        %v2097 = vpack.c.b16 %v1667, %v1662
        %v2098 = vpack.c.b16 %v1668, %v1663
        %v2099 = vpack.c.b16 %v1669, %v1664
        %v2100 = vpack.c.b16 %v1670, %v1665
        %v2101 = vpack.c.b16 %v1676, %v1671
        %v2102 = vpack.c.b16 %v1677, %v1672
        %v2103 = vpack.c.b16 %v1678, %v1673
        %v2104 = vpack.c.b16 %v1679, %v1674
        %v2105 = vpack.c.b16 %v1680, %v1675
        %v2106 = vpack.c.b16 %v1686, %v1681
        %v2107 = vpack.c.b16 %v1687, %v1682
        %v2108 = vpack.c.b16 %v1688, %v1683
        %v2109 = vpack.c.b16 %v1689, %v1684
        %v2110 = vpack.c.b16 %v1690, %v1685
        %v2111 = vpack.c.b16 %v1696, %v1691
        %v2112 = vpack.c.b16 %v1697, %v1692
        %v2113 = vpack.c.b16 %v1698, %v1693
        %v2114 = vpack.c.b16 %v1699, %v1694
        %v2115 = vpack.c.b16 %v1700, %v1695
        %v2116 = vpack.c.b16 %v1706, %v1701
        %v2117 = vpack.c.b16 %v1707, %v1702
        %v2118 = vpack.c.b16 %v1708, %v1703
        %v2119 = vpack.c.b16 %v1709, %v1704
        %v2120 = vpack.c.b16 %v1710, %v1705
        %v2121 = vpack.c.b16 %v1716, %v1711
        %v2122 = vpack.c.b16 %v1717, %v1712
        %v2123 = vpack.c.b16 %v1718, %v1713
        %v2124 = vpack.c.b16 %v1719, %v1714
        %v2125 = vpack.c.b16 %v1720, %v1715
        %v2126 = vpack.c.b16 %v1726, %v1721
        %v2127 = vpack.c.b16 %v1727, %v1722
        %v2128 = vpack.c.b16 %v1728, %v1723
        %v2129 = vpack.c.b16 %v1729, %v1724
        %v2130 = vpack.c.b16 %v1730, %v1725
        %v2131 = vpack.c.b16 %v1736, %v1731
        %v2132 = vpack.c.b16 %v1737, %v1732
        %v2133 = vpack.c.b16 %v1738, %v1733
        %v2134 = vpack.c.b16 %v1739, %v1734
        %v2135 = vpack.c.b16 %v1740, %v1735
        %v2136 = vpack.c.b16 %v1746, %v1741
        %v2137 = vpack.c.b16 %v1747, %v1742
        %v2138 = vpack.c.b16 %v1748, %v1743
        %v2139 = vpack.c.b16 %v1749, %v1744
        %v2140 = vpack.c.b16 %v1750, %v1745
        %v2141 = vpack.c.b16 %v1756, %v1751
        %v2142 = vpack.c.b16 %v1757, %v1752
        %v2143 = vpack.c.b16 %v1758, %v1753
        %v2144 = vpack.c.b16 %v1759, %v1754
        %v2145 = vpack.c.b16 %v1760, %v1755
        %v2146 = vpack.c.b16 %v1766, %v1761
        %v2147 = vpack.c.b16 %v1767, %v1762
        %v2148 = vpack.c.b16 %v1768, %v1763
        %v2149 = vpack.c.b16 %v1769, %v1764
        %v2150 = vpack.c.b16 %v1770, %v1765
        %v2151 = vpack.c.b16 %v1776, %v1771
        %v2152 = vpack.c.b16 %v1777, %v1772
        %v2153 = vpack.c.b16 %v1778, %v1773
        %v2154 = vpack.c.b16 %v1779, %v1774
        %v2155 = vpack.c.b16 %v1780, %v1775
        %v2156 = vpack.c.b16 %v1786, %v1781
        %v2157 = vpack.c.b16 %v1787, %v1782
        %v2158 = vpack.c.b16 %v1788, %v1783
        %v2159 = vpack.c.b16 %v1789, %v1784
        %v2160 = vpack.c.b16 %v1790, %v1785
        %v2161 = vpack.c.b16 %v1796, %v1791
        %v2162 = vpack.c.b16 %v1797, %v1792
        %v2163 = vpack.c.b16 %v1798, %v1793
        %v2164 = vpack.c.b16 %v1799, %v1794
        %v2165 = vpack.c.b16 %v1800, %v1795
        %v2166 = vpack.c.b16 %v1806, %v1801
        %v2167 = vpack.c.b16 %v1807, %v1802
        %v2168 = vpack.c.b16 %v1808, %v1803
        %v2169 = vpack.c.b16 %v1809, %v1804
        %v2170 = vpack.c.b16 %v1810, %v1805
        %v2171 = vpack.c.b16 %v1816, %v1811
        %v2172 = vpack.c.b16 %v1817, %v1812
        %v2173 = vpack.c.b16 %v1818, %v1813
        %v2174 = vpack.c.b16 %v1819, %v1814
        %v2175 = vpack.c.b16 %v1820, %v1815
        %v2176 = vpack.c.b16 %v1826, %v1821
        %v2177 = vpack.c.b16 %v1827, %v1822
        %v2178 = vpack.c.b16 %v1828, %v1823
        %v2179 = vpack.c.b16 %v1829, %v1824
        %v2180 = vpack.c.b16 %v1830, %v1825
        %v2181 = vpack.c.b16 %v1836, %v1831
        %v2182 = vpack.c.b16 %v1837, %v1832
        %v2183 = vpack.c.b16 %v1838, %v1833
        %v2184 = vpack.c.b16 %v1839, %v1834
        %v2185 = vpack.c.b16 %v1840, %v1835
        %v2186 = vpack.c.b16 %v1846, %v1841
        %v2187 = vpack.c.b16 %v1847, %v1842
        %v2188 = vpack.c.b16 %v1848, %v1843
        %v2189 = vpack.c.b16 %v1849, %v1844
        %v2190 = vpack.c.b16 %v1850, %v1845
        %v2191 = vpack.c.b16 %v1856, %v1851
        %v2192 = vpack.c.b16 %v1857, %v1852
        %v2193 = vpack.c.b16 %v1858, %v1853
        %v2194 = vpack.c.b16 %v1859, %v1854
        %v2195 = vpack.c.b16 %v1860, %v1855
        %v2196 = vpack.c.b16 %v1866, %v1861
        %v2197 = vpack.c.b16 %v1867, %v1862
        %v2198 = vpack.c.b16 %v1868, %v1863
        %v2199 = vpack.c.b16 %v1869, %v1864
        %v2200 = vpack.c.b16 %v1870, %v1865
        %v2201 = vpack.c.b16 %v1876, %v1871
        %v2202 = vpack.c.b16 %v1877, %v1872
        %v2203 = vpack.c.b16 %v1878, %v1873
        %v2204 = vpack.c.b16 %v1879, %v1874
        %v2205 = vpack.c.b16 %v1880, %v1875
        %v2206 = vpack.c.b16 %v1886, %v1881
        %v2207 = vpack.c.b16 %v1887, %v1882
        %v2208 = vpack.c.b16 %v1888, %v1883
        %v2209 = vpack.c.b16 %v1889, %v1884
        %v2210 = vpack.c.b16 %v1890, %v1885
        %2531 = vmatpush.bf16.msra.mxu0 %v1926
        %2532 = vmatpush.bf16.msra.mxu0 %v1921
        %2533 = vmatpush.bf16.msra.mxu0 %v1916
        %2534 = vmatpush.bf16.msra.mxu0 %v1911
        %2535 = vmatpush.bf16.msra.mxu0 %v1906
        %2536 = vmatpush.bf16.msra.mxu0 %v1901
        %2537 = vmatpush.bf16.msra.mxu0 %v1896
        %2538 = vmatpush.bf16.msra.mxu0 %v1891
        %2539 = vmatmul.bf16.gmra.mxu0 %v475
        %v2540 = vpop.f32.mrf.mxu0
        %v2541 = vadd.f32 0.0, %v2540
        %v2542 = vpop.f32.mrf.mxu0
        %2543 = vdwg.mxu0
        %2544 = vmatpush.bf16.msra.mxu0 %v1966
        %2545 = vmatpush.bf16.msra.mxu0 %v1961
        %2546 = vmatpush.bf16.msra.mxu0 %v1956
        %2547 = vmatpush.bf16.msra.mxu0 %v1951
        %2548 = vmatpush.bf16.msra.mxu0 %v1946
        %2549 = vmatpush.bf16.msra.mxu0 %v1941
        %2550 = vmatpush.bf16.msra.mxu0 %v1936
        %2551 = vmatpush.bf16.msra.mxu0 %v1931
        %2552 = vmatmul.bf16.gmra.mxu0 %v476
        %v2553 = vpop.f32.mrf.mxu0
        %v2554 = vadd.f32 %v2541, %v2553
        %v2555 = vpop.f32.mrf.mxu0
        %2556 = vdwg.mxu0
        %2557 = vmatpush.bf16.msra.mxu0 %v2006
        %2558 = vmatpush.bf16.msra.mxu0 %v2001
        %2559 = vmatpush.bf16.msra.mxu0 %v1996
        %2560 = vmatpush.bf16.msra.mxu0 %v1991
        %2561 = vmatpush.bf16.msra.mxu0 %v1986
        %2562 = vmatpush.bf16.msra.mxu0 %v1981
        %2563 = vmatpush.bf16.msra.mxu0 %v1976
        %2564 = vmatpush.bf16.msra.mxu0 %v1971
        %2565 = vmatmul.bf16.gmra.mxu0 %v477
        %v2566 = vpop.f32.mrf.mxu0
        %v2567 = vadd.f32 %v2554, %v2566
        %v2568 = vpop.f32.mrf.mxu0
        %2569 = vdwg.mxu0
        %2570 = vmatpush.bf16.msra.mxu0 %v2046
        %2571 = vmatpush.bf16.msra.mxu0 %v2041
        %2572 = vmatpush.bf16.msra.mxu0 %v2036
        %2573 = vmatpush.bf16.msra.mxu0 %v2031
        %2574 = vmatpush.bf16.msra.mxu0 %v2026
        %2575 = vmatpush.bf16.msra.mxu0 %v2021
        %2576 = vmatpush.bf16.msra.mxu0 %v2016
        %2577 = vmatpush.bf16.msra.mxu0 %v2011
        %2578 = vmatmul.bf16.gmra.mxu0 %v478
        %v2579 = vpop.f32.mrf.mxu0
        %v2580 = vadd.f32 %v2567, %v2579
        %v2581 = vpop.f32.mrf.mxu0
        %2582 = vdwg.mxu0
        %2583 = vmatpush.bf16.msra.mxu0 %v2086
        %2584 = vmatpush.bf16.msra.mxu0 %v2081
        %2585 = vmatpush.bf16.msra.mxu0 %v2076
        %2586 = vmatpush.bf16.msra.mxu0 %v2071
        %2587 = vmatpush.bf16.msra.mxu0 %v2066
        %2588 = vmatpush.bf16.msra.mxu0 %v2061
        %2589 = vmatpush.bf16.msra.mxu0 %v2056
        %2590 = vmatpush.bf16.msra.mxu0 %v2051
        %2591 = vmatmul.bf16.gmra.mxu0 %v479
        %v2592 = vpop.f32.mrf.mxu0
        %v2593 = vadd.f32 %v2580, %v2592
        %v2594 = vpop.f32.mrf.mxu0
        %2595 = vdwg.mxu0
        %2596 = vmatpush.bf16.msra.mxu0 %v2126
        %2597 = vmatpush.bf16.msra.mxu0 %v2121
        %2598 = vmatpush.bf16.msra.mxu0 %v2116
        %2599 = vmatpush.bf16.msra.mxu0 %v2111
        %2600 = vmatpush.bf16.msra.mxu0 %v2106
        %2601 = vmatpush.bf16.msra.mxu0 %v2101
        %2602 = vmatpush.bf16.msra.mxu0 %v2096
        %2603 = vmatpush.bf16.msra.mxu0 %v2091
        %2604 = vmatmul.bf16.gmra.mxu0 %v480
        %v2605 = vpop.f32.mrf.mxu0
        %v2606 = vadd.f32 %v2593, %v2605
        %v2607 = vpop.f32.mrf.mxu0
        %2608 = vdwg.mxu0
        %2609 = vmatpush.bf16.msra.mxu0 %v2166
        %2610 = vmatpush.bf16.msra.mxu0 %v2161
        %2611 = vmatpush.bf16.msra.mxu0 %v2156
        %2612 = vmatpush.bf16.msra.mxu0 %v2151
        %2613 = vmatpush.bf16.msra.mxu0 %v2146
        %2614 = vmatpush.bf16.msra.mxu0 %v2141
        %2615 = vmatpush.bf16.msra.mxu0 %v2136
        %2616 = vmatpush.bf16.msra.mxu0 %v2131
        %2617 = vmatmul.bf16.gmra.mxu0 %v481
        %v2618 = vpop.f32.mrf.mxu0
        %v2619 = vadd.f32 %v2606, %v2618
        %v2620 = vpop.f32.mrf.mxu0
        %2621 = vdwg.mxu0
        %2622 = vmatpush.bf16.msra.mxu0 %v2206
        %2623 = vmatpush.bf16.msra.mxu0 %v2201
        %2624 = vmatpush.bf16.msra.mxu0 %v2196
        %2625 = vmatpush.bf16.msra.mxu0 %v2191
        %2626 = vmatpush.bf16.msra.mxu0 %v2186
        %2627 = vmatpush.bf16.msra.mxu0 %v2181
        %2628 = vmatpush.bf16.msra.mxu0 %v2176
        %2629 = vmatpush.bf16.msra.mxu0 %v2171
        %2630 = vmatmul.bf16.gmra.mxu0 %v482
        %v2631 = vpop.f32.mrf.mxu0
        %v2632 = vadd.f32 %v2619, %v2631
        %v2633 = vpop.f32.mrf.mxu0
        %2634 = vdwg.mxu0
        %2635 = vmatpush.bf16.msra.mxu0 %v1927
        %2636 = vmatpush.bf16.msra.mxu0 %v1922
        %2637 = vmatpush.bf16.msra.mxu0 %v1917
        %2638 = vmatpush.bf16.msra.mxu0 %v1912
        %2639 = vmatpush.bf16.msra.mxu0 %v1907
        %2640 = vmatpush.bf16.msra.mxu0 %v1902
        %2641 = vmatpush.bf16.msra.mxu0 %v1897
        %2642 = vmatpush.bf16.msra.mxu0 %v1892
        %2643 = vmatmul.bf16.gmra.mxu0 %v475
        %v2644 = vpop.f32.mrf.mxu0
        %v2645 = vadd.f32 0.0, %v2644
        %v2646 = vpop.f32.mrf.mxu0
        %2647 = vdwg.mxu0
        %2648 = vmatpush.bf16.msra.mxu0 %v1967
        %2649 = vmatpush.bf16.msra.mxu0 %v1962
        %2650 = vmatpush.bf16.msra.mxu0 %v1957
        %2651 = vmatpush.bf16.msra.mxu0 %v1952
        %2652 = vmatpush.bf16.msra.mxu0 %v1947
        %2653 = vmatpush.bf16.msra.mxu0 %v1942
        %2654 = vmatpush.bf16.msra.mxu0 %v1937
        %2655 = vmatpush.bf16.msra.mxu0 %v1932
        %2656 = vmatmul.bf16.gmra.mxu0 %v476
        %v2657 = vpop.f32.mrf.mxu0
        %v2658 = vadd.f32 %v2645, %v2657
        %v2659 = vpop.f32.mrf.mxu0
        %2660 = vdwg.mxu0
        %2661 = vmatpush.bf16.msra.mxu0 %v2007
        %2662 = vmatpush.bf16.msra.mxu0 %v2002
        %2663 = vmatpush.bf16.msra.mxu0 %v1997
        %2664 = vmatpush.bf16.msra.mxu0 %v1992
        %2665 = vmatpush.bf16.msra.mxu0 %v1987
        %2666 = vmatpush.bf16.msra.mxu0 %v1982
        %2667 = vmatpush.bf16.msra.mxu0 %v1977
        %2668 = vmatpush.bf16.msra.mxu0 %v1972
        %2669 = vmatmul.bf16.gmra.mxu0 %v477
        %v2670 = vpop.f32.mrf.mxu0
        %v2671 = vadd.f32 %v2658, %v2670
        %v2672 = vpop.f32.mrf.mxu0
        %2673 = vdwg.mxu0
        %2674 = vmatpush.bf16.msra.mxu0 %v2047
        %2675 = vmatpush.bf16.msra.mxu0 %v2042
        %2676 = vmatpush.bf16.msra.mxu0 %v2037
        %2677 = vmatpush.bf16.msra.mxu0 %v2032
        %2678 = vmatpush.bf16.msra.mxu0 %v2027
        %2679 = vmatpush.bf16.msra.mxu0 %v2022
        %2680 = vmatpush.bf16.msra.mxu0 %v2017
        %2681 = vmatpush.bf16.msra.mxu0 %v2012
        %2682 = vmatmul.bf16.gmra.mxu0 %v478
        %v2683 = vpop.f32.mrf.mxu0
        %v2684 = vadd.f32 %v2671, %v2683
        %v2685 = vpop.f32.mrf.mxu0
        %2686 = vdwg.mxu0
        %2687 = vmatpush.bf16.msra.mxu0 %v2087
        %2688 = vmatpush.bf16.msra.mxu0 %v2082
        %2689 = vmatpush.bf16.msra.mxu0 %v2077
        %2690 = vmatpush.bf16.msra.mxu0 %v2072
        %2691 = vmatpush.bf16.msra.mxu0 %v2067
        %2692 = vmatpush.bf16.msra.mxu0 %v2062
        %2693 = vmatpush.bf16.msra.mxu0 %v2057
        %2694 = vmatpush.bf16.msra.mxu0 %v2052
        %2695 = vmatmul.bf16.gmra.mxu0 %v479
        %v2696 = vpop.f32.mrf.mxu0
        %v2697 = vadd.f32 %v2684, %v2696
        %v2698 = vpop.f32.mrf.mxu0
        %2699 = vdwg.mxu0
        %2700 = vmatpush.bf16.msra.mxu0 %v2127
        %2701 = vmatpush.bf16.msra.mxu0 %v2122
        %2702 = vmatpush.bf16.msra.mxu0 %v2117
        %2703 = vmatpush.bf16.msra.mxu0 %v2112
        %2704 = vmatpush.bf16.msra.mxu0 %v2107
        %2705 = vmatpush.bf16.msra.mxu0 %v2102
        %2706 = vmatpush.bf16.msra.mxu0 %v2097
        %2707 = vmatpush.bf16.msra.mxu0 %v2092
        %2708 = vmatmul.bf16.gmra.mxu0 %v480
        %v2709 = vpop.f32.mrf.mxu0
        %v2710 = vadd.f32 %v2697, %v2709
        %v2711 = vpop.f32.mrf.mxu0
        %2712 = vdwg.mxu0
        %2713 = vmatpush.bf16.msra.mxu0 %v2167
        %2714 = vmatpush.bf16.msra.mxu0 %v2162
        %2715 = vmatpush.bf16.msra.mxu0 %v2157
        %2716 = vmatpush.bf16.msra.mxu0 %v2152
        %2717 = vmatpush.bf16.msra.mxu0 %v2147
        %2718 = vmatpush.bf16.msra.mxu0 %v2142
        %2719 = vmatpush.bf16.msra.mxu0 %v2137
        %2720 = vmatpush.bf16.msra.mxu0 %v2132
        %2721 = vmatmul.bf16.gmra.mxu0 %v481
        %v2722 = vpop.f32.mrf.mxu0
        %v2723 = vadd.f32 %v2710, %v2722
        %v2724 = vpop.f32.mrf.mxu0
        %2725 = vdwg.mxu0
        %2726 = vmatpush.bf16.msra.mxu0 %v2207
        %2727 = vmatpush.bf16.msra.mxu0 %v2202
        %2728 = vmatpush.bf16.msra.mxu0 %v2197
        %2729 = vmatpush.bf16.msra.mxu0 %v2192
        %2730 = vmatpush.bf16.msra.mxu0 %v2187
        %2731 = vmatpush.bf16.msra.mxu0 %v2182
        %2732 = vmatpush.bf16.msra.mxu0 %v2177
        %2733 = vmatpush.bf16.msra.mxu0 %v2172
        %2734 = vmatmul.bf16.gmra.mxu0 %v482
        %v2735 = vpop.f32.mrf.mxu0
        %v2736 = vadd.f32 %v2723, %v2735
        %v2737 = vpop.f32.mrf.mxu0
        %2738 = vdwg.mxu0
        %2739 = vmatpush.bf16.msra.mxu0 %v1928
        %2740 = vmatpush.bf16.msra.mxu0 %v1923
        %2741 = vmatpush.bf16.msra.mxu0 %v1918
        %2742 = vmatpush.bf16.msra.mxu0 %v1913
        %2743 = vmatpush.bf16.msra.mxu0 %v1908
        %2744 = vmatpush.bf16.msra.mxu0 %v1903
        %2745 = vmatpush.bf16.msra.mxu0 %v1898
        %2746 = vmatpush.bf16.msra.mxu0 %v1893
        %2747 = vmatmul.bf16.gmra.mxu0 %v475
        %v2748 = vpop.f32.mrf.mxu0
        %v2749 = vadd.f32 0.0, %v2748
        %v2750 = vpop.f32.mrf.mxu0
        %2751 = vdwg.mxu0
        %2752 = vmatpush.bf16.msra.mxu0 %v1968
        %2753 = vmatpush.bf16.msra.mxu0 %v1963
        %2754 = vmatpush.bf16.msra.mxu0 %v1958
        %2755 = vmatpush.bf16.msra.mxu0 %v1953
        %2756 = vmatpush.bf16.msra.mxu0 %v1948
        %2757 = vmatpush.bf16.msra.mxu0 %v1943
        %2758 = vmatpush.bf16.msra.mxu0 %v1938
        %2759 = vmatpush.bf16.msra.mxu0 %v1933
        %2760 = vmatmul.bf16.gmra.mxu0 %v476
        %v2761 = vpop.f32.mrf.mxu0
        %v2762 = vadd.f32 %v2749, %v2761
        %v2763 = vpop.f32.mrf.mxu0
        %2764 = vdwg.mxu0
        %2765 = vmatpush.bf16.msra.mxu0 %v2008
        %2766 = vmatpush.bf16.msra.mxu0 %v2003
        %2767 = vmatpush.bf16.msra.mxu0 %v1998
        %2768 = vmatpush.bf16.msra.mxu0 %v1993
        %2769 = vmatpush.bf16.msra.mxu0 %v1988
        %2770 = vmatpush.bf16.msra.mxu0 %v1983
        %2771 = vmatpush.bf16.msra.mxu0 %v1978
        %2772 = vmatpush.bf16.msra.mxu0 %v1973
        %2773 = vmatmul.bf16.gmra.mxu0 %v477
        %v2774 = vpop.f32.mrf.mxu0
        %v2775 = vadd.f32 %v2762, %v2774
        %v2776 = vpop.f32.mrf.mxu0
        %2777 = vdwg.mxu0
        %2778 = vmatpush.bf16.msra.mxu0 %v2048
        %2779 = vmatpush.bf16.msra.mxu0 %v2043
        %2780 = vmatpush.bf16.msra.mxu0 %v2038
        %2781 = vmatpush.bf16.msra.mxu0 %v2033
        %2782 = vmatpush.bf16.msra.mxu0 %v2028
        %2783 = vmatpush.bf16.msra.mxu0 %v2023
        %2784 = vmatpush.bf16.msra.mxu0 %v2018
        %2785 = vmatpush.bf16.msra.mxu0 %v2013
        %2786 = vmatmul.bf16.gmra.mxu0 %v478
        %v2787 = vpop.f32.mrf.mxu0
        %v2788 = vadd.f32 %v2775, %v2787
        %v2789 = vpop.f32.mrf.mxu0
        %2790 = vdwg.mxu0
        %2791 = vmatpush.bf16.msra.mxu0 %v2088
        %2792 = vmatpush.bf16.msra.mxu0 %v2083
        %2793 = vmatpush.bf16.msra.mxu0 %v2078
        %2794 = vmatpush.bf16.msra.mxu0 %v2073
        %2795 = vmatpush.bf16.msra.mxu0 %v2068
        %2796 = vmatpush.bf16.msra.mxu0 %v2063
        %2797 = vmatpush.bf16.msra.mxu0 %v2058
        %2798 = vmatpush.bf16.msra.mxu0 %v2053
        %2799 = vmatmul.bf16.gmra.mxu0 %v479
        %v2800 = vpop.f32.mrf.mxu0
        %v2801 = vadd.f32 %v2788, %v2800
        %v2802 = vpop.f32.mrf.mxu0
        %2803 = vdwg.mxu0
        %2804 = vmatpush.bf16.msra.mxu0 %v2128
        %2805 = vmatpush.bf16.msra.mxu0 %v2123
        %2806 = vmatpush.bf16.msra.mxu0 %v2118
        %2807 = vmatpush.bf16.msra.mxu0 %v2113
        %2808 = vmatpush.bf16.msra.mxu0 %v2108
        %2809 = vmatpush.bf16.msra.mxu0 %v2103
        %2810 = vmatpush.bf16.msra.mxu0 %v2098
        %2811 = vmatpush.bf16.msra.mxu0 %v2093
        %2812 = vmatmul.bf16.gmra.mxu0 %v480
        %v2813 = vpop.f32.mrf.mxu0
        %v2814 = vadd.f32 %v2801, %v2813
        %v2815 = vpop.f32.mrf.mxu0
        %2816 = vdwg.mxu0
        %2817 = vmatpush.bf16.msra.mxu0 %v2168
        %2818 = vmatpush.bf16.msra.mxu0 %v2163
        %2819 = vmatpush.bf16.msra.mxu0 %v2158
        %2820 = vmatpush.bf16.msra.mxu0 %v2153
        %2821 = vmatpush.bf16.msra.mxu0 %v2148
        %2822 = vmatpush.bf16.msra.mxu0 %v2143
        %2823 = vmatpush.bf16.msra.mxu0 %v2138
        %2824 = vmatpush.bf16.msra.mxu0 %v2133
        %2825 = vmatmul.bf16.gmra.mxu0 %v481
        %v2826 = vpop.f32.mrf.mxu0
        %v2827 = vadd.f32 %v2814, %v2826
        %v2828 = vpop.f32.mrf.mxu0
        %2829 = vdwg.mxu0
        %2830 = vmatpush.bf16.msra.mxu0 %v2208
        %2831 = vmatpush.bf16.msra.mxu0 %v2203
        %2832 = vmatpush.bf16.msra.mxu0 %v2198
        %2833 = vmatpush.bf16.msra.mxu0 %v2193
        %2834 = vmatpush.bf16.msra.mxu0 %v2188
        %2835 = vmatpush.bf16.msra.mxu0 %v2183
        %2836 = vmatpush.bf16.msra.mxu0 %v2178
        %2837 = vmatpush.bf16.msra.mxu0 %v2173
        %2838 = vmatmul.bf16.gmra.mxu0 %v482
        %v2839 = vpop.f32.mrf.mxu0
        %v2840 = vadd.f32 %v2827, %v2839
        %v2841 = vpop.f32.mrf.mxu0
        %2842 = vdwg.mxu0
        %2843 = vmatpush.bf16.msra.mxu0 %v1929
        %2844 = vmatpush.bf16.msra.mxu0 %v1924
        %2845 = vmatpush.bf16.msra.mxu0 %v1919
        %2846 = vmatpush.bf16.msra.mxu0 %v1914
        %2847 = vmatpush.bf16.msra.mxu0 %v1909
        %2848 = vmatpush.bf16.msra.mxu0 %v1904
        %2849 = vmatpush.bf16.msra.mxu0 %v1899
        %2850 = vmatpush.bf16.msra.mxu0 %v1894
        %2851 = vmatmul.bf16.gmra.mxu0 %v475
        %v2852 = vpop.f32.mrf.mxu0
        %v2853 = vadd.f32 0.0, %v2852
        %v2854 = vpop.f32.mrf.mxu0
        %2855 = vdwg.mxu0
        %2856 = vmatpush.bf16.msra.mxu0 %v1969
        %2857 = vmatpush.bf16.msra.mxu0 %v1964
        %2858 = vmatpush.bf16.msra.mxu0 %v1959
        %2859 = vmatpush.bf16.msra.mxu0 %v1954
        %2860 = vmatpush.bf16.msra.mxu0 %v1949
        %2861 = vmatpush.bf16.msra.mxu0 %v1944
        %2862 = vmatpush.bf16.msra.mxu0 %v1939
        %2863 = vmatpush.bf16.msra.mxu0 %v1934
        %2864 = vmatmul.bf16.gmra.mxu0 %v476
        %v2865 = vpop.f32.mrf.mxu0
        %v2866 = vadd.f32 %v2853, %v2865
        %v2867 = vpop.f32.mrf.mxu0
        %2868 = vdwg.mxu0
        %2869 = vmatpush.bf16.msra.mxu0 %v2009
        %2870 = vmatpush.bf16.msra.mxu0 %v2004
        %2871 = vmatpush.bf16.msra.mxu0 %v1999
        %2872 = vmatpush.bf16.msra.mxu0 %v1994
        %2873 = vmatpush.bf16.msra.mxu0 %v1989
        %2874 = vmatpush.bf16.msra.mxu0 %v1984
        %2875 = vmatpush.bf16.msra.mxu0 %v1979
        %2876 = vmatpush.bf16.msra.mxu0 %v1974
        %2877 = vmatmul.bf16.gmra.mxu0 %v477
        %v2878 = vpop.f32.mrf.mxu0
        %v2879 = vadd.f32 %v2866, %v2878
        %v2880 = vpop.f32.mrf.mxu0
        %2881 = vdwg.mxu0
        %2882 = vmatpush.bf16.msra.mxu0 %v2049
        %2883 = vmatpush.bf16.msra.mxu0 %v2044
        %2884 = vmatpush.bf16.msra.mxu0 %v2039
        %2885 = vmatpush.bf16.msra.mxu0 %v2034
        %2886 = vmatpush.bf16.msra.mxu0 %v2029
        %2887 = vmatpush.bf16.msra.mxu0 %v2024
        %2888 = vmatpush.bf16.msra.mxu0 %v2019
        %2889 = vmatpush.bf16.msra.mxu0 %v2014
        %2890 = vmatmul.bf16.gmra.mxu0 %v478
        %v2891 = vpop.f32.mrf.mxu0
        %v2892 = vadd.f32 %v2879, %v2891
        %v2893 = vpop.f32.mrf.mxu0
        %2894 = vdwg.mxu0
        %2895 = vmatpush.bf16.msra.mxu0 %v2089
        %2896 = vmatpush.bf16.msra.mxu0 %v2084
        %2897 = vmatpush.bf16.msra.mxu0 %v2079
        %2898 = vmatpush.bf16.msra.mxu0 %v2074
        %2899 = vmatpush.bf16.msra.mxu0 %v2069
        %2900 = vmatpush.bf16.msra.mxu0 %v2064
        %2901 = vmatpush.bf16.msra.mxu0 %v2059
        %2902 = vmatpush.bf16.msra.mxu0 %v2054
        %2903 = vmatmul.bf16.gmra.mxu0 %v479
        %v2904 = vpop.f32.mrf.mxu0
        %v2905 = vadd.f32 %v2892, %v2904
        %v2906 = vpop.f32.mrf.mxu0
        %2907 = vdwg.mxu0
        %2908 = vmatpush.bf16.msra.mxu0 %v2129
        %2909 = vmatpush.bf16.msra.mxu0 %v2124
        %2910 = vmatpush.bf16.msra.mxu0 %v2119
        %2911 = vmatpush.bf16.msra.mxu0 %v2114
        %2912 = vmatpush.bf16.msra.mxu0 %v2109
        %2913 = vmatpush.bf16.msra.mxu0 %v2104
        %2914 = vmatpush.bf16.msra.mxu0 %v2099
        %2915 = vmatpush.bf16.msra.mxu0 %v2094
        %2916 = vmatmul.bf16.gmra.mxu0 %v480
        %v2917 = vpop.f32.mrf.mxu0
        %v2918 = vadd.f32 %v2905, %v2917
        %v2919 = vpop.f32.mrf.mxu0
        %2920 = vdwg.mxu0
        %2921 = vmatpush.bf16.msra.mxu0 %v2169
        %2922 = vmatpush.bf16.msra.mxu0 %v2164
        %2923 = vmatpush.bf16.msra.mxu0 %v2159
        %2924 = vmatpush.bf16.msra.mxu0 %v2154
        %2925 = vmatpush.bf16.msra.mxu0 %v2149
        %2926 = vmatpush.bf16.msra.mxu0 %v2144
        %2927 = vmatpush.bf16.msra.mxu0 %v2139
        %2928 = vmatpush.bf16.msra.mxu0 %v2134
        %2929 = vmatmul.bf16.gmra.mxu0 %v481
        %v2930 = vpop.f32.mrf.mxu0
        %v2931 = vadd.f32 %v2918, %v2930
        %v2932 = vpop.f32.mrf.mxu0
        %2933 = vdwg.mxu0
        %2934 = vmatpush.bf16.msra.mxu0 %v2209
        %2935 = vmatpush.bf16.msra.mxu0 %v2204
        %2936 = vmatpush.bf16.msra.mxu0 %v2199
        %2937 = vmatpush.bf16.msra.mxu0 %v2194
        %2938 = vmatpush.bf16.msra.mxu0 %v2189
        %2939 = vmatpush.bf16.msra.mxu0 %v2184
        %2940 = vmatpush.bf16.msra.mxu0 %v2179
        %2941 = vmatpush.bf16.msra.mxu0 %v2174
        %2942 = vmatmul.bf16.gmra.mxu0 %v482
        %v2943 = vpop.f32.mrf.mxu0
        %v2944 = vadd.f32 %v2931, %v2943
        %v2945 = vpop.f32.mrf.mxu0
        %2946 = vdwg.mxu0
        %2947 = vmatpush.bf16.msra.mxu0 %v1930
        %2948 = vmatpush.bf16.msra.mxu0 %v1925
        %2949 = vmatpush.bf16.msra.mxu0 %v1920
        %2950 = vmatpush.bf16.msra.mxu0 %v1915
        %2951 = vmatpush.bf16.msra.mxu0 %v1910
        %2952 = vmatpush.bf16.msra.mxu0 %v1905
        %2953 = vmatpush.bf16.msra.mxu0 %v1900
        %2954 = vmatpush.bf16.msra.mxu0 %v1895
        %2955 = vmatmul.bf16.gmra.mxu0 %v475
        %v2956 = vpop.f32.mrf.mxu0
        %v2957 = vadd.f32 0.0, %v2956
        %v2958 = vpop.f32.mrf.mxu0
        %2959 = vdwg.mxu0
        %2960 = vmatpush.bf16.msra.mxu0 %v1970
        %2961 = vmatpush.bf16.msra.mxu0 %v1965
        %2962 = vmatpush.bf16.msra.mxu0 %v1960
        %2963 = vmatpush.bf16.msra.mxu0 %v1955
        %2964 = vmatpush.bf16.msra.mxu0 %v1950
        %2965 = vmatpush.bf16.msra.mxu0 %v1945
        %2966 = vmatpush.bf16.msra.mxu0 %v1940
        %2967 = vmatpush.bf16.msra.mxu0 %v1935
        %2968 = vmatmul.bf16.gmra.mxu0 %v476
        %v2969 = vpop.f32.mrf.mxu0
        %v2970 = vadd.f32 %v2957, %v2969
        %v2971 = vpop.f32.mrf.mxu0
        %2972 = vdwg.mxu0
        %2973 = vmatpush.bf16.msra.mxu0 %v2010
        %2974 = vmatpush.bf16.msra.mxu0 %v2005
        %2975 = vmatpush.bf16.msra.mxu0 %v2000
        %2976 = vmatpush.bf16.msra.mxu0 %v1995
        %2977 = vmatpush.bf16.msra.mxu0 %v1990
        %2978 = vmatpush.bf16.msra.mxu0 %v1985
        %2979 = vmatpush.bf16.msra.mxu0 %v1980
        %2980 = vmatpush.bf16.msra.mxu0 %v1975
        %2981 = vmatmul.bf16.gmra.mxu0 %v477
        %v2982 = vpop.f32.mrf.mxu0
        %v2983 = vadd.f32 %v2970, %v2982
        %v2984 = vpop.f32.mrf.mxu0
        %2985 = vdwg.mxu0
        %2986 = vmatpush.bf16.msra.mxu0 %v2050
        %2987 = vmatpush.bf16.msra.mxu0 %v2045
        %2988 = vmatpush.bf16.msra.mxu0 %v2040
        %2989 = vmatpush.bf16.msra.mxu0 %v2035
        %2990 = vmatpush.bf16.msra.mxu0 %v2030
        %2991 = vmatpush.bf16.msra.mxu0 %v2025
        %2992 = vmatpush.bf16.msra.mxu0 %v2020
        %2993 = vmatpush.bf16.msra.mxu0 %v2015
        %2994 = vmatmul.bf16.gmra.mxu0 %v478
        %v2995 = vpop.f32.mrf.mxu0
        %v2996 = vadd.f32 %v2983, %v2995
        %v2997 = vpop.f32.mrf.mxu0
        %2998 = vdwg.mxu0
        %2999 = vmatpush.bf16.msra.mxu0 %v2090
        %3000 = vmatpush.bf16.msra.mxu0 %v2085
        %3001 = vmatpush.bf16.msra.mxu0 %v2080
        %3002 = vmatpush.bf16.msra.mxu0 %v2075
        %3003 = vmatpush.bf16.msra.mxu0 %v2070
        %3004 = vmatpush.bf16.msra.mxu0 %v2065
        %3005 = vmatpush.bf16.msra.mxu0 %v2060
        %3006 = vmatpush.bf16.msra.mxu0 %v2055
        %3007 = vmatmul.bf16.gmra.mxu0 %v479
        %v3008 = vpop.f32.mrf.mxu0
        %v3009 = vadd.f32 %v2996, %v3008
        %v3010 = vpop.f32.mrf.mxu0
        %3011 = vdwg.mxu0
        %3012 = vmatpush.bf16.msra.mxu0 %v2130
        %3013 = vmatpush.bf16.msra.mxu0 %v2125
        %3014 = vmatpush.bf16.msra.mxu0 %v2120
        %3015 = vmatpush.bf16.msra.mxu0 %v2115
        %3016 = vmatpush.bf16.msra.mxu0 %v2110
        %3017 = vmatpush.bf16.msra.mxu0 %v2105
        %3018 = vmatpush.bf16.msra.mxu0 %v2100
        %3019 = vmatpush.bf16.msra.mxu0 %v2095
        %3020 = vmatmul.bf16.gmra.mxu0 %v480
        %v3021 = vpop.f32.mrf.mxu0
        %v3022 = vadd.f32 %v3009, %v3021
        %v3023 = vpop.f32.mrf.mxu0
        %3024 = vdwg.mxu0
        %3025 = vmatpush.bf16.msra.mxu0 %v2170
        %3026 = vmatpush.bf16.msra.mxu0 %v2165
        %3027 = vmatpush.bf16.msra.mxu0 %v2160
        %3028 = vmatpush.bf16.msra.mxu0 %v2155
        %3029 = vmatpush.bf16.msra.mxu0 %v2150
        %3030 = vmatpush.bf16.msra.mxu0 %v2145
        %3031 = vmatpush.bf16.msra.mxu0 %v2140
        %3032 = vmatpush.bf16.msra.mxu0 %v2135
        %3033 = vmatmul.bf16.gmra.mxu0 %v481
        %v3034 = vpop.f32.mrf.mxu0
        %v3035 = vadd.f32 %v3022, %v3034
        %v3036 = vpop.f32.mrf.mxu0
        %3037 = vdwg.mxu0
        %3038 = vmatpush.bf16.msra.mxu0 %v2210
        %3039 = vmatpush.bf16.msra.mxu0 %v2205
        %3040 = vmatpush.bf16.msra.mxu0 %v2200
        %3041 = vmatpush.bf16.msra.mxu0 %v2195
        %3042 = vmatpush.bf16.msra.mxu0 %v2190
        %3043 = vmatpush.bf16.msra.mxu0 %v2185
        %3044 = vmatpush.bf16.msra.mxu0 %v2180
        %3045 = vmatpush.bf16.msra.mxu0 %v2175
        %3046 = vmatmul.bf16.gmra.mxu0 %v482
        %v3047 = vpop.f32.mrf.mxu0
        %v3048 = vadd.f32 %v3035, %v3047
        %v3049 = vpop.f32.mrf.mxu0
        %3050 = vdwg.mxu0
        %v3055 = vrot.slane %v2736, 6
        %v3056 = vrot.slane %v2840, 4
        %v3057 = vrot.slane %v2944, 2
        %vm3058 = vcmask 1041408
        %v3059 = vsel %vm3058, %v2632, %v3055
        %vm3060 = vcmask 1045508
        %v3061 = vsel %vm3060, %v3056, %v3057
        %vm3062 = vcmask 1043456
        %v3063 = vsel %vm3062, %v3059, %v3061
        %3065 = vst [vmem:[%s249] sm:$0xff] %v3063
        %3066 = vst [vmem:[%s249 + $0x8] sm:$0x3] %v3048
        %s3067 = smul.u32 5, %s17
        %p3068 = scmp.lt.s32.totalorder %s3067, 24
        %s3069 = scalar_select %p3068, %s3067, 24
        %s3070 = smul.addr %s3069, 2
        %s3071 = scalar_lea.vmem %s4, %s3070
        // Predicated region
        $region49: #{decoder_forward.4} parent=35 // pred_check
          %p3072 = pneg %p124
        $region50: #{decoder_forward.4} parent=35 // pred_check_branch
          %3074 = sbr.rel (%p3072) target = $region52
        $region51: #{decoder_forward.4} parent=35 // pred_region
          %s3075 = smul.u32 5, %s17
        $region52: #{decoder_forward.4} parent=35 // pred_fallthru
          _
      $region36: #{decoder_forward.4} parent=5 // pred_fallthru
        _
      %p3076 = scmp.le.s32.totalorder 2, %s12
      // Predicated region
      $region53: #{decoder_forward.4} parent=5 // pred_check
        %p3077 = pneg %p3076
      $region54: #{decoder_forward.4} parent=5 // pred_check_branch
        %3079 = sbr.rel (%p3077) target = $region56
      $region55: #{decoder_forward.4} parent=5 // pred_region
        %s3080 = ssub.s32 %s12, 2
        // Predicated region
        $region57: #{decoder_forward.4} parent=55 // pred_check
          %p3081 = pneg %p130
        $region58: #{decoder_forward.4} parent=55 // pred_check_branch
          %3083 = sbr.rel (%p3081) target = $region60
        $region59: #{decoder_forward.4} parent=55 // pred_region
          %s3084 = smul.u32 5, %s18
          %p3085 = scmp.lt.s32.totalorder %s3084, 24
          %s3086 = scalar_select %p3085, %s3084, 24
          %s3087 = smul.addr %s3086, 2
          %s3088 = scalar_lea.vmem %s4, %s3087
        $region60: #{decoder_forward.4} parent=55 // pred_fallthru
          _
      $region56: #{decoder_forward.4} parent=5 // pred_fallthru
        _
    $region6: #{decoder_forward.4} parent=1 // loop_footer
      %s16 = sadd.s32 1, %s12
    $region7: #{decoder_forward.4} parent=1 // loop_footer_branch
      %11 = sbr.rel target = $region3
    $region8: #{decoder_forward.4} parent=1 // loop_exit
      _
    %3089 = vsyncpa [#allocation3], 1
    %s3090 = scalar_lea.sflag [#allocation3], 1
    %3091 = vsyncpa %s3090, 1
    %3092 = vsyncpa [#allocation5], 1

// kernel: decoder_forward.6
$region0: #{decoder_forward.6}
  #allocation0 [shape = 'u32[]', space=smem, size = 0x4, offset = 0x4, fixed_abs, tag = 'smem constant byte address 0x4 - core index']
  #allocation1 [shape = 'u32[72,128]{1,0:T(1,128)}', space=vmem, size = 0x9000, scoped, tag = 'internal scratch']
  %s0 = inlined_call_operand.vmem [shape: f32[344,64], index: 0, kind: input, shape index: {}]
  %s1 = inlined_call_operand.vmem [shape: f32[1,64], index: 1, kind: input, shape index: {}]
  %s2 = inlined_call_operand.vmem [shape: bf16[64,1152], index: 2, kind: input, shape index: {}]
  %s3 = inlined_call_operand.vmem [shape: f32[344,1152], index: 3, kind: output, shape index: {}]
  %s4 = sld [smem:[#allocation0]]
  $region22: #{decoder_forward.6} parent=0
    _
  %s6 = ssub.s32 1, %s4
  %s7 = scalar_select 0, %s6, %s4
  // Predicated region
  $region2: #{decoder_forward.6} parent=0 // pred_check
    _
  $region3: #{decoder_forward.6} parent=0 // pred_check_branch
    %9 = sbr.rel (0) target = $region5
  $region4: #{decoder_forward.6} parent=0 // pred_region
    _
  $region5: #{decoder_forward.6} parent=0 // pred_fallthru
    _
  // Predicated region
  $region6: #{decoder_forward.6} parent=0 // pred_check
    _
  $region7: #{decoder_forward.6} parent=0 // pred_check_branch
    %11 = sbr.rel (0) target = $region9
  $region8: #{decoder_forward.6} parent=0 // pred_region
    _
  $region9: #{decoder_forward.6} parent=0 // pred_fallthru
    _
  // Predicated region
  $region10: #{decoder_forward.6} parent=0 // pred_check
    _
  $region11: #{decoder_forward.6} parent=0 // pred_check_branch
    %13 = sbr.rel (0) target = $region13
  $region12: #{decoder_forward.6} parent=0 // pred_region
    _
  $region13: #{decoder_forward.6} parent=0 // pred_fallthru
    _
  %v15 = vld [vmem:[%s0] sm:$0xff]
  %v16 = vld [vmem:[%s0 + $0x8] sm:$0xff]
  %v17 = vld [vmem:[%s0 + $0x10] sm:$0xff]
  %v18 = vld [vmem:[%s0 + $0x18] sm:$0xff]
  %v19 = vld [vmem:[%s0 + $0x20] sm:$0xff]
  %v20 = vld [vmem:[%s0 + $0x28] sm:$0xff]
  %v21 = vld [vmem:[%s0 + $0x30] sm:$0xff]
  %v22 = vld [vmem:[%s0 + $0x38] sm:$0xff]
  %v23 = vld [vmem:[%s0 + $0x40] sm:$0xff]
  %v24 = vld [vmem:[%s0 + $0x48] sm:$0xff]
  %v25 = vld [vmem:[%s0 + $0x50] sm:$0xff]
  %v26 = vld [vmem:[%s0 + $0x58] sm:$0xff]
  %v27 = vld [vmem:[%s0 + $0x60] sm:$0xff]
  %v28 = vld [vmem:[%s0 + $0x68] sm:$0xff]
  %v29 = vld [vmem:[%s0 + $0x70] sm:$0xff]
  %v30 = vld [vmem:[%s0 + $0x78] sm:$0xff]
  %v31 = vld [vmem:[%s0 + $0x80] sm:$0xff]
  %v32 = vld [vmem:[%s0 + $0x88] sm:$0xff]
  %v33 = vld [vmem:[%s0 + $0x90] sm:$0xff]
  %v34 = vld [vmem:[%s0 + $0x98] sm:$0xff]
  %v35 = vld [vmem:[%s0 + $0xa0] sm:$0xff]
  %v36 = vld [vmem:[%s0 + $0xa8] sm:$0xff]
  %v37 = vld [vmem:[%s0 + $0xb0] sm:$0xff]
  %v38 = vld [vmem:[%s0 + $0xb8] sm:$0xff]
  %v39 = vld [vmem:[%s0 + $0xc0] sm:$0xff]
  %v40 = vld [vmem:[%s0 + $0xc8] sm:$0xff]
  %v41 = vld [vmem:[%s0 + $0xd0] sm:$0xff]
  %v42 = vld [vmem:[%s0 + $0xd8] sm:$0xff]
  %v43 = vld [vmem:[%s0 + $0xe0] sm:$0xff]
  %v44 = vld [vmem:[%s0 + $0xe8] sm:$0xff]
  %v45 = vld [vmem:[%s0 + $0xf0] sm:$0xff]
  %v46 = vld [vmem:[%s0 + $0xf8] sm:$0xff]
  %v47 = vld [vmem:[%s0 + $0x100] sm:$0xff]
  %v48 = vld [vmem:[%s0 + $0x108] sm:$0xff]
  %v49 = vld [vmem:[%s0 + $0x110] sm:$0xff]
  %v50 = vld [vmem:[%s0 + $0x118] sm:$0xff]
  %v51 = vld [vmem:[%s0 + $0x120] sm:$0xff]
  %v52 = vld [vmem:[%s0 + $0x128] sm:$0xff]
  %v53 = vld [vmem:[%s0 + $0x130] sm:$0xff]
  %v54 = vld [vmem:[%s0 + $0x138] sm:$0xff]
  %v55 = vld [vmem:[%s0 + $0x140] sm:$0xff]
  %v56 = vld [vmem:[%s0 + $0x148] sm:$0xff]
  %v57 = vld [vmem:[%s0 + $0x150] sm:$0xff]
  %v58 = vld [vmem:[%s1] sm:$0x1]
  %v60 = vperm.slane %v58, 0
  %v62 = vadd.f32 %v15, %v60
  %v63 = vadd.f32 %v16, %v60
  %v64 = vadd.f32 %v17, %v60
  %v65 = vadd.f32 %v18, %v60
  %v66 = vadd.f32 %v19, %v60
  %v67 = vadd.f32 %v20, %v60
  %v68 = vadd.f32 %v21, %v60
  %v69 = vadd.f32 %v22, %v60
  %v70 = vadd.f32 %v23, %v60
  %v71 = vadd.f32 %v24, %v60
  %v72 = vadd.f32 %v25, %v60
  %v73 = vadd.f32 %v26, %v60
  %v74 = vadd.f32 %v27, %v60
  %v75 = vadd.f32 %v28, %v60
  %v76 = vadd.f32 %v29, %v60
  %v77 = vadd.f32 %v30, %v60
  %v78 = vadd.f32 %v31, %v60
  %v79 = vadd.f32 %v32, %v60
  %v80 = vadd.f32 %v33, %v60
  %v81 = vadd.f32 %v34, %v60
  %v82 = vadd.f32 %v35, %v60
  %v83 = vadd.f32 %v36, %v60
  %v84 = vadd.f32 %v37, %v60
  %v85 = vadd.f32 %v38, %v60
  %v86 = vadd.f32 %v39, %v60
  %v87 = vadd.f32 %v40, %v60
  %v88 = vadd.f32 %v41, %v60
  %v89 = vadd.f32 %v42, %v60
  %v90 = vadd.f32 %v43, %v60
  %v91 = vadd.f32 %v44, %v60
  %v92 = vadd.f32 %v45, %v60
  %v93 = vadd.f32 %v46, %v60
  %v94 = vadd.f32 %v47, %v60
  %v95 = vadd.f32 %v48, %v60
  %v96 = vadd.f32 %v49, %v60
  %v97 = vadd.f32 %v50, %v60
  %v98 = vadd.f32 %v51, %v60
  %v99 = vadd.f32 %v52, %v60
  %v100 = vadd.f32 %v53, %v60
  %v101 = vadd.f32 %v54, %v60
  %v102 = vadd.f32 %v55, %v60
  %v103 = vadd.f32 %v56, %v60
  %v104 = vadd.f32 %v57, %v60
  %v105 = vmax.f32 %v62, 0.0
  %v106 = vmax.f32 %v63, 0.0
  %v107 = vmax.f32 %v64, 0.0
  %v108 = vmax.f32 %v65, 0.0
  %v109 = vmax.f32 %v66, 0.0
  %v110 = vmax.f32 %v67, 0.0
  %v111 = vmax.f32 %v68, 0.0
  %v112 = vmax.f32 %v69, 0.0
  %v113 = vmax.f32 %v70, 0.0
  %v114 = vmax.f32 %v71, 0.0
  %v115 = vmax.f32 %v72, 0.0
  %v116 = vmax.f32 %v73, 0.0
  %v117 = vmax.f32 %v74, 0.0
  %v118 = vmax.f32 %v75, 0.0
  %v119 = vmax.f32 %v76, 0.0
  %v120 = vmax.f32 %v77, 0.0
  %v121 = vmax.f32 %v78, 0.0
  %v122 = vmax.f32 %v79, 0.0
  %v123 = vmax.f32 %v80, 0.0
  %v124 = vmax.f32 %v81, 0.0
  %v125 = vmax.f32 %v82, 0.0
  %v126 = vmax.f32 %v83, 0.0
  %v127 = vmax.f32 %v84, 0.0
  %v128 = vmax.f32 %v85, 0.0
  %v129 = vmax.f32 %v86, 0.0
  %v130 = vmax.f32 %v87, 0.0
  %v131 = vmax.f32 %v88, 0.0
  %v132 = vmax.f32 %v89, 0.0
  %v133 = vmax.f32 %v90, 0.0
  %v134 = vmax.f32 %v91, 0.0
  %v135 = vmax.f32 %v92, 0.0
  %v136 = vmax.f32 %v93, 0.0
  %v137 = vmax.f32 %v94, 0.0
  %v138 = vmax.f32 %v95, 0.0
  %v139 = vmax.f32 %v96, 0.0
  %v140 = vmax.f32 %v97, 0.0
  %v141 = vmax.f32 %v98, 0.0
  %v142 = vmax.f32 %v99, 0.0
  %v143 = vmax.f32 %v100, 0.0
  %v144 = vmax.f32 %v101, 0.0
  %v145 = vmax.f32 %v102, 0.0
  %v146 = vmax.f32 %v103, 0.0
  %v147 = vmax.f32 %v104, 0.0
  %v148 = vpack.c.bf16 %v106, %v105
  %v149 = vpack.c.bf16 %v108, %v107
  %v150 = vpack.c.bf16 %v110, %v109
  %v151 = vpack.c.bf16 %v112, %v111
  %v152 = vpack.c.bf16 %v114, %v113
  %v153 = vpack.c.bf16 %v116, %v115
  %v154 = vpack.c.bf16 %v118, %v117
  %v155 = vpack.c.bf16 %v120, %v119
  %v156 = vpack.c.bf16 %v122, %v121
  %v157 = vpack.c.bf16 %v124, %v123
  %v158 = vpack.c.bf16 %v126, %v125
  %v159 = vpack.c.bf16 %v128, %v127
  %v160 = vpack.c.bf16 %v130, %v129
  %v161 = vpack.c.bf16 %v132, %v131
  %v162 = vpack.c.bf16 %v134, %v133
  %v163 = vpack.c.bf16 %v136, %v135
  %v164 = vpack.c.bf16 %v138, %v137
  %v165 = vpack.c.bf16 %v140, %v139
  %v166 = vpack.c.bf16 %v142, %v141
  %v167 = vpack.c.bf16 %v144, %v143
  %v168 = vpack.c.bf16 %v146, %v145
  %v169 = vpack.c.bf16 %v147, %v147
  %v170 = vld [vmem:[%s2] sm:$0xff]
  %v171 = vld [vmem:[%s2 + $0x8] sm:$0xff]
  %v172 = vld [vmem:[%s2 + $0x10] sm:$0xff]
  %v173 = vld [vmem:[%s2 + $0x18] sm:$0xff]
  %v174 = vld [vmem:[%s2 + $0x20] sm:$0xf]
  %v175 = vld [vmem:[%s2 + $0x24] sm:$0xff]
  %v176 = vld [vmem:[%s2 + $0x2c] sm:$0xff]
  %v177 = vld [vmem:[%s2 + $0x34] sm:$0xff]
  %v178 = vld [vmem:[%s2 + $0x3c] sm:$0xff]
  %v179 = vld [vmem:[%s2 + $0x44] sm:$0xf]
  %v180 = vld [vmem:[%s2 + $0x48] sm:$0xff]
  %v181 = vld [vmem:[%s2 + $0x50] sm:$0xff]
  %v182 = vld [vmem:[%s2 + $0x58] sm:$0xff]
  %v183 = vld [vmem:[%s2 + $0x60] sm:$0xff]
  %v184 = vld [vmem:[%s2 + $0x68] sm:$0xf]
  %v185 = vld [vmem:[%s2 + $0x6c] sm:$0xff]
  %v186 = vld [vmem:[%s2 + $0x74] sm:$0xff]
  %v187 = vld [vmem:[%s2 + $0x7c] sm:$0xff]
  %v188 = vld [vmem:[%s2 + $0x84] sm:$0xff]
  %v189 = vld [vmem:[%s2 + $0x8c] sm:$0xf]
  %v190 = vld [vmem:[%s2 + $0x90] sm:$0xff]
  %v191 = vld [vmem:[%s2 + $0x98] sm:$0xff]
  %v192 = vld [vmem:[%s2 + $0xa0] sm:$0xff]
  %v193 = vld [vmem:[%s2 + $0xa8] sm:$0xff]
  %v194 = vld [vmem:[%s2 + $0xb0] sm:$0xf]
  %v195 = vld [vmem:[%s2 + $0xb4] sm:$0xff]
  %v196 = vld [vmem:[%s2 + $0xbc] sm:$0xff]
  %v197 = vld [vmem:[%s2 + $0xc4] sm:$0xff]
  %v198 = vld [vmem:[%s2 + $0xcc] sm:$0xff]
  %v199 = vld [vmem:[%s2 + $0xd4] sm:$0xf]
  %v200 = vld [vmem:[%s2 + $0xd8] sm:$0xff]
  %v201 = vld [vmem:[%s2 + $0xe0] sm:$0xff]
  %v202 = vld [vmem:[%s2 + $0xe8] sm:$0xff]
  %v203 = vld [vmem:[%s2 + $0xf0] sm:$0xff]
  %v204 = vld [vmem:[%s2 + $0xf8] sm:$0xf]
  %v205 = vld [vmem:[%s2 + $0xfc] sm:$0xff]
  %v206 = vld [vmem:[%s2 + $0x104] sm:$0xff]
  %v207 = vld [vmem:[%s2 + $0x10c] sm:$0xff]
  %v208 = vld [vmem:[%s2 + $0x114] sm:$0xff]
  %v209 = vld [vmem:[%s2 + $0x11c] sm:$0xf]
  %v250 = vunpack.c.l.b16 %v170
  %v251 = vunpack.c.h.b16 %v170
  %v252 = vunpack.c.l.b16 %v171
  %v253 = vunpack.c.h.b16 %v171
  %v254 = vunpack.c.l.b16 %v172
  %v255 = vunpack.c.h.b16 %v172
  %v256 = vunpack.c.l.b16 %v173
  %v257 = vunpack.c.h.b16 %v173
  %v258 = vunpack.c.l.b16 %v174
  %v259 = vunpack.c.l.b16 %v175
  %v260 = vunpack.c.h.b16 %v175
  %v261 = vunpack.c.l.b16 %v176
  %v262 = vunpack.c.h.b16 %v176
  %v263 = vunpack.c.l.b16 %v177
  %v264 = vunpack.c.h.b16 %v177
  %v265 = vunpack.c.l.b16 %v178
  %v266 = vunpack.c.h.b16 %v178
  %v267 = vunpack.c.l.b16 %v179
  %v268 = vunpack.c.l.b16 %v180
  %v269 = vunpack.c.h.b16 %v180
  %v270 = vunpack.c.l.b16 %v181
  %v271 = vunpack.c.h.b16 %v181
  %v272 = vunpack.c.l.b16 %v182
  %v273 = vunpack.c.h.b16 %v182
  %v274 = vunpack.c.l.b16 %v183
  %v275 = vunpack.c.h.b16 %v183
  %v276 = vunpack.c.l.b16 %v184
  %v277 = vunpack.c.l.b16 %v185
  %v278 = vunpack.c.h.b16 %v185
  %v279 = vunpack.c.l.b16 %v186
  %v280 = vunpack.c.h.b16 %v186
  %v281 = vunpack.c.l.b16 %v187
  %v282 = vunpack.c.h.b16 %v187
  %v283 = vunpack.c.l.b16 %v188
  %v284 = vunpack.c.h.b16 %v188
  %v285 = vunpack.c.l.b16 %v189
  %v286 = vunpack.c.l.b16 %v190
  %v287 = vunpack.c.h.b16 %v190
  %v288 = vunpack.c.l.b16 %v191
  %v289 = vunpack.c.h.b16 %v191
  %v290 = vunpack.c.l.b16 %v192
  %v291 = vunpack.c.h.b16 %v192
  %v292 = vunpack.c.l.b16 %v193
  %v293 = vunpack.c.h.b16 %v193
  %v294 = vunpack.c.l.b16 %v194
  %v295 = vunpack.c.l.b16 %v195
  %v296 = vunpack.c.h.b16 %v195
  %v297 = vunpack.c.l.b16 %v196
  %v298 = vunpack.c.h.b16 %v196
  %v299 = vunpack.c.l.b16 %v197
  %v300 = vunpack.c.h.b16 %v197
  %v301 = vunpack.c.l.b16 %v198
  %v302 = vunpack.c.h.b16 %v198
  %v303 = vunpack.c.l.b16 %v199
  %v304 = vunpack.c.l.b16 %v200
  %v305 = vunpack.c.h.b16 %v200
  %v306 = vunpack.c.l.b16 %v201
  %v307 = vunpack.c.h.b16 %v201
  %v308 = vunpack.c.l.b16 %v202
  %v309 = vunpack.c.h.b16 %v202
  %v310 = vunpack.c.l.b16 %v203
  %v311 = vunpack.c.h.b16 %v203
  %v312 = vunpack.c.l.b16 %v204
  %v313 = vunpack.c.l.b16 %v205
  %v314 = vunpack.c.h.b16 %v205
  %v315 = vunpack.c.l.b16 %v206
  %v316 = vunpack.c.h.b16 %v206
  %v317 = vunpack.c.l.b16 %v207
  %v318 = vunpack.c.h.b16 %v207
  %v319 = vunpack.c.l.b16 %v208
  %v320 = vunpack.c.h.b16 %v208
  %v321 = vunpack.c.l.b16 %v209
  %v322 = vpack.c.b16 %v259, %v250
  %v323 = vpack.c.b16 %v260, %v251
  %v324 = vpack.c.b16 %v261, %v252
  %v325 = vpack.c.b16 %v262, %v253
  %v326 = vpack.c.b16 %v263, %v254
  %v327 = vpack.c.b16 %v264, %v255
  %v328 = vpack.c.b16 %v265, %v256
  %v329 = vpack.c.b16 %v266, %v257
  %v330 = vpack.c.b16 %v267, %v258
  %v331 = vpack.c.b16 %v277, %v268
  %v332 = vpack.c.b16 %v278, %v269
  %v333 = vpack.c.b16 %v279, %v270
  %v334 = vpack.c.b16 %v280, %v271
  %v335 = vpack.c.b16 %v281, %v272
  %v336 = vpack.c.b16 %v282, %v273
  %v337 = vpack.c.b16 %v283, %v274
  %v338 = vpack.c.b16 %v284, %v275
  %v339 = vpack.c.b16 %v285, %v276
  %v340 = vpack.c.b16 %v295, %v286
  %v341 = vpack.c.b16 %v296, %v287
  %v342 = vpack.c.b16 %v297, %v288
  %v343 = vpack.c.b16 %v298, %v289
  %v344 = vpack.c.b16 %v299, %v290
  %v345 = vpack.c.b16 %v300, %v291
  %v346 = vpack.c.b16 %v301, %v292
  %v347 = vpack.c.b16 %v302, %v293
  %v348 = vpack.c.b16 %v303, %v294
  %v349 = vpack.c.b16 %v313, %v304
  %v350 = vpack.c.b16 %v314, %v305
  %v351 = vpack.c.b16 %v315, %v306
  %v352 = vpack.c.b16 %v316, %v307
  %v353 = vpack.c.b16 %v317, %v308
  %v354 = vpack.c.b16 %v318, %v309
  %v355 = vpack.c.b16 %v319, %v310
  %v356 = vpack.c.b16 %v320, %v311
  %v357 = vpack.c.b16 %v321, %v312
  %vm394 = vcmask 523264
  %v396 = vsel %vm394, %v148, 0
  %v399 = vsel %vm394, %v149, 0
  %v402 = vsel %vm394, %v150, 0
  %v405 = vsel %vm394, %v151, 0
  %v408 = vsel %vm394, %v152, 0
  %v411 = vsel %vm394, %v153, 0
  %v414 = vsel %vm394, %v154, 0
  %v417 = vsel %vm394, %v155, 0
  %v420 = vsel %vm394, %v156, 0
  %v423 = vsel %vm394, %v157, 0
  %v426 = vsel %vm394, %v158, 0
  %v429 = vsel %vm394, %v159, 0
  %v432 = vsel %vm394, %v160, 0
  %v435 = vsel %vm394, %v161, 0
  %v438 = vsel %vm394, %v162, 0
  %v441 = vsel %vm394, %v163, 0
  %v444 = vsel %vm394, %v164, 0
  %v447 = vsel %vm394, %v165, 0
  %v450 = vsel %vm394, %v166, 0
  %v453 = vsel %vm394, %v167, 0
  %v456 = vsel %vm394, %v168, 0
  %v459 = vsel %vm394, %v169, 0
  %461 = vmatpush.bf16.msra.mxu0 0
  %462 = vmatpush.bf16.msra.mxu0 0
  %463 = vmatpush.bf16.msra.mxu0 0
  %464 = vmatpush.bf16.msra.mxu0 0
  %465 = vmatpush.bf16.msra.mxu0 %v349
  %466 = vmatpush.bf16.msra.mxu0 %v340
  %467 = vmatpush.bf16.msra.mxu0 %v331
  %468 = vmatpush.bf16.msra.mxu0 %v322
  %469 = vmatmul.bf16.gmra.mxu0 %v396
  %v470 = vpop.f32.mrf.mxu0
  %v471 = vadd.f32 0.0, %v470
  %v472 = vpop.f32.mrf.mxu0
  %v473 = vadd.f32 0.0, %v472
  %474 = vmatmul.bf16.gmra.mxu0 %v399
  %v475 = vpop.f32.mrf.mxu0
  %v476 = vadd.f32 0.0, %v475
  %v477 = vpop.f32.mrf.mxu0
  %v478 = vadd.f32 0.0, %v477
  %479 = vmatmul.bf16.gmra.mxu0 %v402
  %v480 = vpop.f32.mrf.mxu0
  %v481 = vadd.f32 0.0, %v480
  %v482 = vpop.f32.mrf.mxu0
  %v483 = vadd.f32 0.0, %v482
  %484 = vmatmul.bf16.gmra.mxu0 %v405
  %v485 = vpop.f32.mrf.mxu0
  %v486 = vadd.f32 0.0, %v485
  %v487 = vpop.f32.mrf.mxu0
  %v488 = vadd.f32 0.0, %v487
  %489 = vmatmul.bf16.gmra.mxu0 %v408
  %v490 = vpop.f32.mrf.mxu0
  %v491 = vadd.f32 0.0, %v490
  %v492 = vpop.f32.mrf.mxu0
  %v493 = vadd.f32 0.0, %v492
  %494 = vmatmul.bf16.gmra.mxu0 %v411
  %v495 = vpop.f32.mrf.mxu0
  %v496 = vadd.f32 0.0, %v495
  %v497 = vpop.f32.mrf.mxu0
  %v498 = vadd.f32 0.0, %v497
  %499 = vmatmul.bf16.gmra.mxu0 %v414
  %v500 = vpop.f32.mrf.mxu0
  %v501 = vadd.f32 0.0, %v500
  %v502 = vpop.f32.mrf.mxu0
  %v503 = vadd.f32 0.0, %v502
  %504 = vmatmul.bf16.gmra.mxu0 %v417
  %v505 = vpop.f32.mrf.mxu0
  %v506 = vadd.f32 0.0, %v505
  %v507 = vpop.f32.mrf.mxu0
  %v508 = vadd.f32 0.0, %v507
  %509 = vmatmul.bf16.gmra.mxu0 %v420
  %v510 = vpop.f32.mrf.mxu0
  %v511 = vadd.f32 0.0, %v510
  %v512 = vpop.f32.mrf.mxu0
  %v513 = vadd.f32 0.0, %v512
  %514 = vmatmul.bf16.gmra.mxu0 %v423
  %v515 = vpop.f32.mrf.mxu0
  %v516 = vadd.f32 0.0, %v515
  %v517 = vpop.f32.mrf.mxu0
  %v518 = vadd.f32 0.0, %v517
  %519 = vmatmul.bf16.gmra.mxu0 %v426
  %v520 = vpop.f32.mrf.mxu0
  %v521 = vadd.f32 0.0, %v520
  %v522 = vpop.f32.mrf.mxu0
  %v523 = vadd.f32 0.0, %v522
  %524 = vmatmul.bf16.gmra.mxu0 %v429
  %v525 = vpop.f32.mrf.mxu0
  %v526 = vadd.f32 0.0, %v525
  %v527 = vpop.f32.mrf.mxu0
  %v528 = vadd.f32 0.0, %v527
  %529 = vmatmul.bf16.gmra.mxu0 %v432
  %v530 = vpop.f32.mrf.mxu0
  %v531 = vadd.f32 0.0, %v530
  %v532 = vpop.f32.mrf.mxu0
  %v533 = vadd.f32 0.0, %v532
  %534 = vmatmul.bf16.gmra.mxu0 %v435
  %v535 = vpop.f32.mrf.mxu0
  %v536 = vadd.f32 0.0, %v535
  %v537 = vpop.f32.mrf.mxu0
  %v538 = vadd.f32 0.0, %v537
  %539 = vmatmul.bf16.gmra.mxu0 %v438
  %v540 = vpop.f32.mrf.mxu0
  %v541 = vadd.f32 0.0, %v540
  %v542 = vpop.f32.mrf.mxu0
  %v543 = vadd.f32 0.0, %v542
  %544 = vmatmul.bf16.gmra.mxu0 %v441
  %v545 = vpop.f32.mrf.mxu0
  %v546 = vadd.f32 0.0, %v545
  %v547 = vpop.f32.mrf.mxu0
  %v548 = vadd.f32 0.0, %v547
  %549 = vmatmul.bf16.gmra.mxu0 %v444
  %v550 = vpop.f32.mrf.mxu0
  %v551 = vadd.f32 0.0, %v550
  %v552 = vpop.f32.mrf.mxu0
  %v553 = vadd.f32 0.0, %v552
  %554 = vmatmul.bf16.gmra.mxu0 %v447
  %v555 = vpop.f32.mrf.mxu0
  %v556 = vadd.f32 0.0, %v555
  %v557 = vpop.f32.mrf.mxu0
  %v558 = vadd.f32 0.0, %v557
  %559 = vmatmul.bf16.gmra.mxu0 %v450
  %v560 = vpop.f32.mrf.mxu0
  %v561 = vadd.f32 0.0, %v560
  %v562 = vpop.f32.mrf.mxu0
  %v563 = vadd.f32 0.0, %v562
  %564 = vmatmul.bf16.gmra.mxu0 %v453
  %v565 = vpop.f32.mrf.mxu0
  %v566 = vadd.f32 0.0, %v565
  %v567 = vpop.f32.mrf.mxu0
  %v568 = vadd.f32 0.0, %v567
  %569 = vmatmul.bf16.gmra.mxu0 %v456
  %v570 = vpop.f32.mrf.mxu0
  %v571 = vadd.f32 0.0, %v570
  %v572 = vpop.f32.mrf.mxu0
  %v573 = vadd.f32 0.0, %v572
  %574 = vmatmul.bf16.gmra.mxu0 %v459
  %v575 = vpop.f32.mrf.mxu0
  %v576 = vadd.f32 0.0, %v575
  %v577 = vpop.f32.mrf.mxu0
  %578 = vdwg.mxu0
  %579 = vmatpush.bf16.msra.mxu0 0
  %580 = vmatpush.bf16.msra.mxu0 0
  %581 = vmatpush.bf16.msra.mxu0 0
  %582 = vmatpush.bf16.msra.mxu0 0
  %583 = vmatpush.bf16.msra.mxu0 %v350
  %584 = vmatpush.bf16.msra.mxu0 %v341
  %585 = vmatpush.bf16.msra.mxu0 %v332
  %586 = vmatpush.bf16.msra.mxu0 %v323
  %587 = vmatmul.bf16.gmra.mxu0 %v396
  %v588 = vpop.f32.mrf.mxu0
  %v589 = vadd.f32 0.0, %v588
  %v590 = vpop.f32.mrf.mxu0
  %v591 = vadd.f32 0.0, %v590
  %592 = vmatmul.bf16.gmra.mxu0 %v399
  %v593 = vpop.f32.mrf.mxu0
  %v594 = vadd.f32 0.0, %v593
  %v595 = vpop.f32.mrf.mxu0
  %v596 = vadd.f32 0.0, %v595
  %597 = vmatmul.bf16.gmra.mxu0 %v402
  %v598 = vpop.f32.mrf.mxu0
  %v599 = vadd.f32 0.0, %v598
  %v600 = vpop.f32.mrf.mxu0
  %v601 = vadd.f32 0.0, %v600
  %602 = vmatmul.bf16.gmra.mxu0 %v405
  %v603 = vpop.f32.mrf.mxu0
  %v604 = vadd.f32 0.0, %v603
  %v605 = vpop.f32.mrf.mxu0
  %v606 = vadd.f32 0.0, %v605
  %607 = vmatmul.bf16.gmra.mxu0 %v408
  %v608 = vpop.f32.mrf.mxu0
  %v609 = vadd.f32 0.0, %v608
  %v610 = vpop.f32.mrf.mxu0
  %v611 = vadd.f32 0.0, %v610
  %612 = vmatmul.bf16.gmra.mxu0 %v411
  %v613 = vpop.f32.mrf.mxu0
  %v614 = vadd.f32 0.0, %v613
  %v615 = vpop.f32.mrf.mxu0
  %v616 = vadd.f32 0.0, %v615
  %617 = vmatmul.bf16.gmra.mxu0 %v414
  %v618 = vpop.f32.mrf.mxu0
  %v619 = vadd.f32 0.0, %v618
  %v620 = vpop.f32.mrf.mxu0
  %v621 = vadd.f32 0.0, %v620
  %622 = vmatmul.bf16.gmra.mxu0 %v417
  %v623 = vpop.f32.mrf.mxu0
  %v624 = vadd.f32 0.0, %v623
  %v625 = vpop.f32.mrf.mxu0
  %v626 = vadd.f32 0.0, %v625
  %627 = vmatmul.bf16.gmra.mxu0 %v420
  %v628 = vpop.f32.mrf.mxu0
  %v629 = vadd.f32 0.0, %v628
  %v630 = vpop.f32.mrf.mxu0
  %v631 = vadd.f32 0.0, %v630
  %632 = vmatmul.bf16.gmra.mxu0 %v423
  %v633 = vpop.f32.mrf.mxu0
  %v634 = vadd.f32 0.0, %v633
  %v635 = vpop.f32.mrf.mxu0
  %v636 = vadd.f32 0.0, %v635
  %637 = vmatmul.bf16.gmra.mxu0 %v426
  %v638 = vpop.f32.mrf.mxu0
  %v639 = vadd.f32 0.0, %v638
  %v640 = vpop.f32.mrf.mxu0
  %v641 = vadd.f32 0.0, %v640
  %642 = vmatmul.bf16.gmra.mxu0 %v429
  %v643 = vpop.f32.mrf.mxu0
  %v644 = vadd.f32 0.0, %v643
  %v645 = vpop.f32.mrf.mxu0
  %v646 = vadd.f32 0.0, %v645
  %647 = vmatmul.bf16.gmra.mxu0 %v432
  %v648 = vpop.f32.mrf.mxu0
  %v649 = vadd.f32 0.0, %v648
  %v650 = vpop.f32.mrf.mxu0
  %v651 = vadd.f32 0.0, %v650
  %652 = vmatmul.bf16.gmra.mxu0 %v435
  %v653 = vpop.f32.mrf.mxu0
  %v654 = vadd.f32 0.0, %v653
  %v655 = vpop.f32.mrf.mxu0
  %v656 = vadd.f32 0.0, %v655
  %657 = vmatmul.bf16.gmra.mxu0 %v438
  %v658 = vpop.f32.mrf.mxu0
  %v659 = vadd.f32 0.0, %v658
  %v660 = vpop.f32.mrf.mxu0
  %v661 = vadd.f32 0.0, %v660
  %662 = vmatmul.bf16.gmra.mxu0 %v441
  %v663 = vpop.f32.mrf.mxu0
  %v664 = vadd.f32 0.0, %v663
  %v665 = vpop.f32.mrf.mxu0
  %v666 = vadd.f32 0.0, %v665
  %667 = vmatmul.bf16.gmra.mxu0 %v444
  %v668 = vpop.f32.mrf.mxu0
  %v669 = vadd.f32 0.0, %v668
  %v670 = vpop.f32.mrf.mxu0
  %v671 = vadd.f32 0.0, %v670
  %672 = vmatmul.bf16.gmra.mxu0 %v447
  %v673 = vpop.f32.mrf.mxu0
  %v674 = vadd.f32 0.0, %v673
  %v675 = vpop.f32.mrf.mxu0
  %v676 = vadd.f32 0.0, %v675
  %677 = vmatmul.bf16.gmra.mxu0 %v450
  %v678 = vpop.f32.mrf.mxu0
  %v679 = vadd.f32 0.0, %v678
  %v680 = vpop.f32.mrf.mxu0
  %v681 = vadd.f32 0.0, %v680
  %682 = vmatmul.bf16.gmra.mxu0 %v453
  %v683 = vpop.f32.mrf.mxu0
  %v684 = vadd.f32 0.0, %v683
  %v685 = vpop.f32.mrf.mxu0
  %v686 = vadd.f32 0.0, %v685
  %687 = vmatmul.bf16.gmra.mxu0 %v456
  %v688 = vpop.f32.mrf.mxu0
  %v689 = vadd.f32 0.0, %v688
  %v690 = vpop.f32.mrf.mxu0
  %v691 = vadd.f32 0.0, %v690
  %692 = vmatmul.bf16.gmra.mxu0 %v459
  %v693 = vpop.f32.mrf.mxu0
  %v694 = vadd.f32 0.0, %v693
  %v695 = vpop.f32.mrf.mxu0
  %696 = vdwg.mxu0
  %697 = vmatpush.bf16.msra.mxu0 0
  %698 = vmatpush.bf16.msra.mxu0 0
  %699 = vmatpush.bf16.msra.mxu0 0
  %700 = vmatpush.bf16.msra.mxu0 0
  %701 = vmatpush.bf16.msra.mxu0 %v351
  %702 = vmatpush.bf16.msra.mxu0 %v342
  %703 = vmatpush.bf16.msra.mxu0 %v333
  %704 = vmatpush.bf16.msra.mxu0 %v324
  %705 = vmatmul.bf16.gmra.mxu0 %v396
  %v706 = vpop.f32.mrf.mxu0
  %v707 = vadd.f32 0.0, %v706
  %v708 = vpop.f32.mrf.mxu0
  %v709 = vadd.f32 0.0, %v708
  %710 = vmatmul.bf16.gmra.mxu0 %v399
  %v711 = vpop.f32.mrf.mxu0
  %v712 = vadd.f32 0.0, %v711
  %v713 = vpop.f32.mrf.mxu0
  %v714 = vadd.f32 0.0, %v713
  %715 = vmatmul.bf16.gmra.mxu0 %v402
  %v716 = vpop.f32.mrf.mxu0
  %v717 = vadd.f32 0.0, %v716
  %v718 = vpop.f32.mrf.mxu0
  %v719 = vadd.f32 0.0, %v718
  %720 = vmatmul.bf16.gmra.mxu0 %v405
  %v721 = vpop.f32.mrf.mxu0
  %v722 = vadd.f32 0.0, %v721
  %v723 = vpop.f32.mrf.mxu0
  %v724 = vadd.f32 0.0, %v723
  %725 = vmatmul.bf16.gmra.mxu0 %v408
  %v726 = vpop.f32.mrf.mxu0
  %v727 = vadd.f32 0.0, %v726
  %v728 = vpop.f32.mrf.mxu0
  %v729 = vadd.f32 0.0, %v728
  %730 = vmatmul.bf16.gmra.mxu0 %v411
  %v731 = vpop.f32.mrf.mxu0
  %v732 = vadd.f32 0.0, %v731
  %v733 = vpop.f32.mrf.mxu0
  %v734 = vadd.f32 0.0, %v733
  %735 = vmatmul.bf16.gmra.mxu0 %v414
  %v736 = vpop.f32.mrf.mxu0
  %v737 = vadd.f32 0.0, %v736
  %v738 = vpop.f32.mrf.mxu0
  %v739 = vadd.f32 0.0, %v738
  %740 = vmatmul.bf16.gmra.mxu0 %v417
  %v741 = vpop.f32.mrf.mxu0
  %v742 = vadd.f32 0.0, %v741
  %v743 = vpop.f32.mrf.mxu0
  %v744 = vadd.f32 0.0, %v743
  %745 = vmatmul.bf16.gmra.mxu0 %v420
  %v746 = vpop.f32.mrf.mxu0
  %v747 = vadd.f32 0.0, %v746
  %v748 = vpop.f32.mrf.mxu0
  %v749 = vadd.f32 0.0, %v748
  %750 = vmatmul.bf16.gmra.mxu0 %v423
  %v751 = vpop.f32.mrf.mxu0
  %v752 = vadd.f32 0.0, %v751
  %v753 = vpop.f32.mrf.mxu0
  %v754 = vadd.f32 0.0, %v753
  %755 = vmatmul.bf16.gmra.mxu0 %v426
  %v756 = vpop.f32.mrf.mxu0
  %v757 = vadd.f32 0.0, %v756
  %v758 = vpop.f32.mrf.mxu0
  %v759 = vadd.f32 0.0, %v758
  %760 = vmatmul.bf16.gmra.mxu0 %v429
  %v761 = vpop.f32.mrf.mxu0
  %v762 = vadd.f32 0.0, %v761
  %v763 = vpop.f32.mrf.mxu0
  %v764 = vadd.f32 0.0, %v763
  %765 = vmatmul.bf16.gmra.mxu0 %v432
  %v766 = vpop.f32.mrf.mxu0
  %v767 = vadd.f32 0.0, %v766
  %v768 = vpop.f32.mrf.mxu0
  %v769 = vadd.f32 0.0, %v768
  %770 = vmatmul.bf16.gmra.mxu0 %v435
  %v771 = vpop.f32.mrf.mxu0
  %v772 = vadd.f32 0.0, %v771
  %v773 = vpop.f32.mrf.mxu0
  %v774 = vadd.f32 0.0, %v773
  %775 = vmatmul.bf16.gmra.mxu0 %v438
  %v776 = vpop.f32.mrf.mxu0
  %v777 = vadd.f32 0.0, %v776
  %v778 = vpop.f32.mrf.mxu0
  %v779 = vadd.f32 0.0, %v778
  %780 = vmatmul.bf16.gmra.mxu0 %v441
  %v781 = vpop.f32.mrf.mxu0
  %v782 = vadd.f32 0.0, %v781
  %v783 = vpop.f32.mrf.mxu0
  %v784 = vadd.f32 0.0, %v783
  %785 = vmatmul.bf16.gmra.mxu0 %v444
  %v786 = vpop.f32.mrf.mxu0
  %v787 = vadd.f32 0.0, %v786
  %v788 = vpop.f32.mrf.mxu0
  %v789 = vadd.f32 0.0, %v788
  %790 = vmatmul.bf16.gmra.mxu0 %v447
  %v791 = vpop.f32.mrf.mxu0
  %v792 = vadd.f32 0.0, %v791
  %v793 = vpop.f32.mrf.mxu0
  %v794 = vadd.f32 0.0, %v793
  %795 = vmatmul.bf16.gmra.mxu0 %v450
  %v796 = vpop.f32.mrf.mxu0
  %v797 = vadd.f32 0.0, %v796
  %v798 = vpop.f32.mrf.mxu0
  %v799 = vadd.f32 0.0, %v798
  %800 = vmatmul.bf16.gmra.mxu0 %v453
  %v801 = vpop.f32.mrf.mxu0
  %v802 = vadd.f32 0.0, %v801
  %v803 = vpop.f32.mrf.mxu0
  %v804 = vadd.f32 0.0, %v803
  %805 = vmatmul.bf16.gmra.mxu0 %v456
  %v806 = vpop.f32.mrf.mxu0
  %v807 = vadd.f32 0.0, %v806
  %v808 = vpop.f32.mrf.mxu0
  %v809 = vadd.f32 0.0, %v808
  %810 = vmatmul.bf16.gmra.mxu0 %v459
  %v811 = vpop.f32.mrf.mxu0
  %v812 = vadd.f32 0.0, %v811
  %v813 = vpop.f32.mrf.mxu0
  %814 = vdwg.mxu0
  %815 = vmatpush.bf16.msra.mxu0 0
  %816 = vmatpush.bf16.msra.mxu0 0
  %817 = vmatpush.bf16.msra.mxu0 0
  %818 = vmatpush.bf16.msra.mxu0 0
  %819 = vmatpush.bf16.msra.mxu0 %v352
  %820 = vmatpush.bf16.msra.mxu0 %v343
  %821 = vmatpush.bf16.msra.mxu0 %v334
  %822 = vmatpush.bf16.msra.mxu0 %v325
  %823 = vmatmul.bf16.gmra.mxu0 %v396
  %v824 = vpop.f32.mrf.mxu0
  %v825 = vadd.f32 0.0, %v824
  %v826 = vpop.f32.mrf.mxu0
  %v827 = vadd.f32 0.0, %v826
  %828 = vmatmul.bf16.gmra.mxu0 %v399
  %v829 = vpop.f32.mrf.mxu0
  %v830 = vadd.f32 0.0, %v829
  %v831 = vpop.f32.mrf.mxu0
  %v832 = vadd.f32 0.0, %v831
  %833 = vmatmul.bf16.gmra.mxu0 %v402
  %v834 = vpop.f32.mrf.mxu0
  %v835 = vadd.f32 0.0, %v834
  %v836 = vpop.f32.mrf.mxu0
  %v837 = vadd.f32 0.0, %v836
  %838 = vmatmul.bf16.gmra.mxu0 %v405
  %v839 = vpop.f32.mrf.mxu0
  %v840 = vadd.f32 0.0, %v839
  %v841 = vpop.f32.mrf.mxu0
  %v842 = vadd.f32 0.0, %v841
  %843 = vmatmul.bf16.gmra.mxu0 %v408
  %v844 = vpop.f32.mrf.mxu0
  %v845 = vadd.f32 0.0, %v844
  %v846 = vpop.f32.mrf.mxu0
  %v847 = vadd.f32 0.0, %v846
  %848 = vmatmul.bf16.gmra.mxu0 %v411
  %v849 = vpop.f32.mrf.mxu0
  %v850 = vadd.f32 0.0, %v849
  %v851 = vpop.f32.mrf.mxu0
  %v852 = vadd.f32 0.0, %v851
  %853 = vmatmul.bf16.gmra.mxu0 %v414
  %v854 = vpop.f32.mrf.mxu0
  %v855 = vadd.f32 0.0, %v854
  %v856 = vpop.f32.mrf.mxu0
  %v857 = vadd.f32 0.0, %v856
  %858 = vmatmul.bf16.gmra.mxu0 %v417
  %v859 = vpop.f32.mrf.mxu0
  %v860 = vadd.f32 0.0, %v859
  %v861 = vpop.f32.mrf.mxu0
  %v862 = vadd.f32 0.0, %v861
  %863 = vmatmul.bf16.gmra.mxu0 %v420
  %v864 = vpop.f32.mrf.mxu0
  %v865 = vadd.f32 0.0, %v864
  %v866 = vpop.f32.mrf.mxu0
  %v867 = vadd.f32 0.0, %v866
  %868 = vmatmul.bf16.gmra.mxu0 %v423
  %v869 = vpop.f32.mrf.mxu0
  %v870 = vadd.f32 0.0, %v869
  %v871 = vpop.f32.mrf.mxu0
  %v872 = vadd.f32 0.0, %v871
  %873 = vmatmul.bf16.gmra.mxu0 %v426
  %v874 = vpop.f32.mrf.mxu0
  %v875 = vadd.f32 0.0, %v874
  %v876 = vpop.f32.mrf.mxu0
  %v877 = vadd.f32 0.0, %v876
  %878 = vmatmul.bf16.gmra.mxu0 %v429
  %v879 = vpop.f32.mrf.mxu0
  %v880 = vadd.f32 0.0, %v879
  %v881 = vpop.f32.mrf.mxu0
  %v882 = vadd.f32 0.0, %v881
  %883 = vmatmul.bf16.gmra.mxu0 %v432
  %v884 = vpop.f32.mrf.mxu0
  %v885 = vadd.f32 0.0, %v884
  %v886 = vpop.f32.mrf.mxu0
  %v887 = vadd.f32 0.0, %v886
  %888 = vmatmul.bf16.gmra.mxu0 %v435
  %v889 = vpop.f32.mrf.mxu0
  %v890 = vadd.f32 0.0, %v889
  %v891 = vpop.f32.mrf.mxu0
  %v892 = vadd.f32 0.0, %v891
  %893 = vmatmul.bf16.gmra.mxu0 %v438
  %v894 = vpop.f32.mrf.mxu0
  %v895 = vadd.f32 0.0, %v894
  %v896 = vpop.f32.mrf.mxu0
  %v897 = vadd.f32 0.0, %v896
  %898 = vmatmul.bf16.gmra.mxu0 %v441
  %v899 = vpop.f32.mrf.mxu0
  %v900 = vadd.f32 0.0, %v899
  %v901 = vpop.f32.mrf.mxu0
  %v902 = vadd.f32 0.0, %v901
  %903 = vmatmul.bf16.gmra.mxu0 %v444
  %v904 = vpop.f32.mrf.mxu0
  %v905 = vadd.f32 0.0, %v904
  %v906 = vpop.f32.mrf.mxu0
  %v907 = vadd.f32 0.0, %v906
  %908 = vmatmul.bf16.gmra.mxu0 %v447
  %v909 = vpop.f32.mrf.mxu0
  %v910 = vadd.f32 0.0, %v909
  %v911 = vpop.f32.mrf.mxu0
  %v912 = vadd.f32 0.0, %v911
  %913 = vmatmul.bf16.gmra.mxu0 %v450
  %v914 = vpop.f32.mrf.mxu0
  %v915 = vadd.f32 0.0, %v914
  %v916 = vpop.f32.mrf.mxu0
  %v917 = vadd.f32 0.0, %v916
  %918 = vmatmul.bf16.gmra.mxu0 %v453
  %v919 = vpop.f32.mrf.mxu0
  %v920 = vadd.f32 0.0, %v919
  %v921 = vpop.f32.mrf.mxu0
  %v922 = vadd.f32 0.0, %v921
  %923 = vmatmul.bf16.gmra.mxu0 %v456
  %v924 = vpop.f32.mrf.mxu0
  %v925 = vadd.f32 0.0, %v924
  %v926 = vpop.f32.mrf.mxu0
  %v927 = vadd.f32 0.0, %v926
  %928 = vmatmul.bf16.gmra.mxu0 %v459
  %v929 = vpop.f32.mrf.mxu0
  %v930 = vadd.f32 0.0, %v929
  %v931 = vpop.f32.mrf.mxu0
  %932 = vdwg.mxu0
  %933 = vmatpush.bf16.msra.mxu0 0
  %934 = vmatpush.bf16.msra.mxu0 0
  %935 = vmatpush.bf16.msra.mxu0 0
  %936 = vmatpush.bf16.msra.mxu0 0
  %937 = vmatpush.bf16.msra.mxu0 %v353
  %938 = vmatpush.bf16.msra.mxu0 %v344
  %939 = vmatpush.bf16.msra.mxu0 %v335
  %940 = vmatpush.bf16.msra.mxu0 %v326
  %941 = vmatmul.bf16.gmra.mxu0 %v396
  %v942 = vpop.f32.mrf.mxu0
  %v943 = vadd.f32 0.0, %v942
  %v944 = vpop.f32.mrf.mxu0
  %v945 = vadd.f32 0.0, %v944
  %946 = vmatmul.bf16.gmra.mxu0 %v399
  %v947 = vpop.f32.mrf.mxu0
  %v948 = vadd.f32 0.0, %v947
  %v949 = vpop.f32.mrf.mxu0
  %v950 = vadd.f32 0.0, %v949
  %951 = vmatmul.bf16.gmra.mxu0 %v402
  %v952 = vpop.f32.mrf.mxu0
  %v953 = vadd.f32 0.0, %v952
  %v954 = vpop.f32.mrf.mxu0
  %v955 = vadd.f32 0.0, %v954
  %956 = vmatmul.bf16.gmra.mxu0 %v405
  %v957 = vpop.f32.mrf.mxu0
  %v958 = vadd.f32 0.0, %v957
  %v959 = vpop.f32.mrf.mxu0
  %v960 = vadd.f32 0.0, %v959
  %961 = vmatmul.bf16.gmra.mxu0 %v408
  %v962 = vpop.f32.mrf.mxu0
  %v963 = vadd.f32 0.0, %v962
  %v964 = vpop.f32.mrf.mxu0
  %v965 = vadd.f32 0.0, %v964
  %966 = vmatmul.bf16.gmra.mxu0 %v411
  %v967 = vpop.f32.mrf.mxu0
  %v968 = vadd.f32 0.0, %v967
  %v969 = vpop.f32.mrf.mxu0
  %v970 = vadd.f32 0.0, %v969
  %971 = vmatmul.bf16.gmra.mxu0 %v414
  %v972 = vpop.f32.mrf.mxu0
  %v973 = vadd.f32 0.0, %v972
  %v974 = vpop.f32.mrf.mxu0
  %v975 = vadd.f32 0.0, %v974
  %976 = vmatmul.bf16.gmra.mxu0 %v417
  %v977 = vpop.f32.mrf.mxu0
  %v978 = vadd.f32 0.0, %v977
  %v979 = vpop.f32.mrf.mxu0
  %v980 = vadd.f32 0.0, %v979
  %981 = vmatmul.bf16.gmra.mxu0 %v420
  %v982 = vpop.f32.mrf.mxu0
  %v983 = vadd.f32 0.0, %v982
  %v984 = vpop.f32.mrf.mxu0
  %v985 = vadd.f32 0.0, %v984
  %986 = vmatmul.bf16.gmra.mxu0 %v423
  %v987 = vpop.f32.mrf.mxu0
  %v988 = vadd.f32 0.0, %v987
  %v989 = vpop.f32.mrf.mxu0
  %v990 = vadd.f32 0.0, %v989
  %991 = vmatmul.bf16.gmra.mxu0 %v426
  %v992 = vpop.f32.mrf.mxu0
  %v993 = vadd.f32 0.0, %v992
  %v994 = vpop.f32.mrf.mxu0
  %v995 = vadd.f32 0.0, %v994
  %996 = vmatmul.bf16.gmra.mxu0 %v429
  %v997 = vpop.f32.mrf.mxu0
  %v998 = vadd.f32 0.0, %v997
  %v999 = vpop.f32.mrf.mxu0
  %v1000 = vadd.f32 0.0, %v999
  %1001 = vmatmul.bf16.gmra.mxu0 %v432
  %v1002 = vpop.f32.mrf.mxu0
  %v1003 = vadd.f32 0.0, %v1002
  %v1004 = vpop.f32.mrf.mxu0
  %v1005 = vadd.f32 0.0, %v1004
  %1006 = vmatmul.bf16.gmra.mxu0 %v435
  %v1007 = vpop.f32.mrf.mxu0
  %v1008 = vadd.f32 0.0, %v1007
  %v1009 = vpop.f32.mrf.mxu0
  %v1010 = vadd.f32 0.0, %v1009
  %1011 = vmatmul.bf16.gmra.mxu0 %v438
  %v1012 = vpop.f32.mrf.mxu0
  %v1013 = vadd.f32 0.0, %v1012
  %v1014 = vpop.f32.mrf.mxu0
  %v1015 = vadd.f32 0.0, %v1014
  %1016 = vmatmul.bf16.gmra.mxu0 %v441
  %v1017 = vpop.f32.mrf.mxu0
  %v1018 = vadd.f32 0.0, %v1017
  %v1019 = vpop.f32.mrf.mxu0
  %v1020 = vadd.f32 0.0, %v1019
  %1021 = vmatmul.bf16.gmra.mxu0 %v444
  %v1022 = vpop.f32.mrf.mxu0
  %v1023 = vadd.f32 0.0, %v1022
  %v1024 = vpop.f32.mrf.mxu0
  %v1025 = vadd.f32 0.0, %v1024
  %1026 = vmatmul.bf16.gmra.mxu0 %v447
  %v1027 = vpop.f32.mrf.mxu0
  %v1028 = vadd.f32 0.0, %v1027
  %v1029 = vpop.f32.mrf.mxu0
  %v1030 = vadd.f32 0.0, %v1029
  %1031 = vmatmul.bf16.gmra.mxu0 %v450
  %v1032 = vpop.f32.mrf.mxu0
  %v1033 = vadd.f32 0.0, %v1032
  %v1034 = vpop.f32.mrf.mxu0
  %v1035 = vadd.f32 0.0, %v1034
  %1036 = vmatmul.bf16.gmra.mxu0 %v453
  %v1037 = vpop.f32.mrf.mxu0
  %v1038 = vadd.f32 0.0, %v1037
  %v1039 = vpop.f32.mrf.mxu0
  %v1040 = vadd.f32 0.0, %v1039
  %1041 = vmatmul.bf16.gmra.mxu0 %v456
  %v1042 = vpop.f32.mrf.mxu0
  %v1043 = vadd.f32 0.0, %v1042
  %v1044 = vpop.f32.mrf.mxu0
  %v1045 = vadd.f32 0.0, %v1044
  %1046 = vmatmul.bf16.gmra.mxu0 %v459
  %v1047 = vpop.f32.mrf.mxu0
  %v1048 = vadd.f32 0.0, %v1047
  %v1049 = vpop.f32.mrf.mxu0
  %1050 = vdwg.mxu0
  %1051 = vmatpush.bf16.msra.mxu0 0
  %1052 = vmatpush.bf16.msra.mxu0 0
  %1053 = vmatpush.bf16.msra.mxu0 0
  %1054 = vmatpush.bf16.msra.mxu0 0
  %1055 = vmatpush.bf16.msra.mxu0 %v354
  %1056 = vmatpush.bf16.msra.mxu0 %v345
  %1057 = vmatpush.bf16.msra.mxu0 %v336
  %1058 = vmatpush.bf16.msra.mxu0 %v327
  %1059 = vmatmul.bf16.gmra.mxu0 %v396
  %v1060 = vpop.f32.mrf.mxu0
  %v1061 = vadd.f32 0.0, %v1060
  %v1062 = vpop.f32.mrf.mxu0
  %v1063 = vadd.f32 0.0, %v1062
  %1064 = vmatmul.bf16.gmra.mxu0 %v399
  %v1065 = vpop.f32.mrf.mxu0
  %v1066 = vadd.f32 0.0, %v1065
  %v1067 = vpop.f32.mrf.mxu0
  %v1068 = vadd.f32 0.0, %v1067
  %1069 = vmatmul.bf16.gmra.mxu0 %v402
  %v1070 = vpop.f32.mrf.mxu0
  %v1071 = vadd.f32 0.0, %v1070
  %v1072 = vpop.f32.mrf.mxu0
  %v1073 = vadd.f32 0.0, %v1072
  %1074 = vmatmul.bf16.gmra.mxu0 %v405
  %v1075 = vpop.f32.mrf.mxu0
  %v1076 = vadd.f32 0.0, %v1075
  %v1077 = vpop.f32.mrf.mxu0
  %v1078 = vadd.f32 0.0, %v1077
  %1079 = vmatmul.bf16.gmra.mxu0 %v408
  %v1080 = vpop.f32.mrf.mxu0
  %v1081 = vadd.f32 0.0, %v1080
  %v1082 = vpop.f32.mrf.mxu0
  %v1083 = vadd.f32 0.0, %v1082
  %1084 = vmatmul.bf16.gmra.mxu0 %v411
  %v1085 = vpop.f32.mrf.mxu0
  %v1086 = vadd.f32 0.0, %v1085
  %v1087 = vpop.f32.mrf.mxu0
  %v1088 = vadd.f32 0.0, %v1087
  %1089 = vmatmul.bf16.gmra.mxu0 %v414
  %v1090 = vpop.f32.mrf.mxu0
  %v1091 = vadd.f32 0.0, %v1090
  %v1092 = vpop.f32.mrf.mxu0
  %v1093 = vadd.f32 0.0, %v1092
  %1094 = vmatmul.bf16.gmra.mxu0 %v417
  %v1095 = vpop.f32.mrf.mxu0
  %v1096 = vadd.f32 0.0, %v1095
  %v1097 = vpop.f32.mrf.mxu0
  %v1098 = vadd.f32 0.0, %v1097
  %1099 = vmatmul.bf16.gmra.mxu0 %v420
  %v1100 = vpop.f32.mrf.mxu0
  %v1101 = vadd.f32 0.0, %v1100
  %v1102 = vpop.f32.mrf.mxu0
  %v1103 = vadd.f32 0.0, %v1102
  %1104 = vmatmul.bf16.gmra.mxu0 %v423
  %v1105 = vpop.f32.mrf.mxu0
  %v1106 = vadd.f32 0.0, %v1105
  %v1107 = vpop.f32.mrf.mxu0
  %v1108 = vadd.f32 0.0, %v1107
  %1109 = vmatmul.bf16.gmra.mxu0 %v426
  %v1110 = vpop.f32.mrf.mxu0
  %v1111 = vadd.f32 0.0, %v1110
  %v1112 = vpop.f32.mrf.mxu0
  %v1113 = vadd.f32 0.0, %v1112
  %1114 = vmatmul.bf16.gmra.mxu0 %v429
  %v1115 = vpop.f32.mrf.mxu0
  %v1116 = vadd.f32 0.0, %v1115
  %v1117 = vpop.f32.mrf.mxu0
  %v1118 = vadd.f32 0.0, %v1117
  %1119 = vmatmul.bf16.gmra.mxu0 %v432
  %v1120 = vpop.f32.mrf.mxu0
  %v1121 = vadd.f32 0.0, %v1120
  %v1122 = vpop.f32.mrf.mxu0
  %v1123 = vadd.f32 0.0, %v1122
  %1124 = vmatmul.bf16.gmra.mxu0 %v435
  %v1125 = vpop.f32.mrf.mxu0
  %v1126 = vadd.f32 0.0, %v1125
  %v1127 = vpop.f32.mrf.mxu0
  %v1128 = vadd.f32 0.0, %v1127
  %1129 = vmatmul.bf16.gmra.mxu0 %v438
  %v1130 = vpop.f32.mrf.mxu0
  %v1131 = vadd.f32 0.0, %v1130
  %v1132 = vpop.f32.mrf.mxu0
  %v1133 = vadd.f32 0.0, %v1132
  %1134 = vmatmul.bf16.gmra.mxu0 %v441
  %v1135 = vpop.f32.mrf.mxu0
  %v1136 = vadd.f32 0.0, %v1135
  %v1137 = vpop.f32.mrf.mxu0
  %v1138 = vadd.f32 0.0, %v1137
  %1139 = vmatmul.bf16.gmra.mxu0 %v444
  %v1140 = vpop.f32.mrf.mxu0
  %v1141 = vadd.f32 0.0, %v1140
  %v1142 = vpop.f32.mrf.mxu0
  %v1143 = vadd.f32 0.0, %v1142
  %1144 = vmatmul.bf16.gmra.mxu0 %v447
  %v1145 = vpop.f32.mrf.mxu0
  %v1146 = vadd.f32 0.0, %v1145
  %v1147 = vpop.f32.mrf.mxu0
  %v1148 = vadd.f32 0.0, %v1147
  %1149 = vmatmul.bf16.gmra.mxu0 %v450
  %v1150 = vpop.f32.mrf.mxu0
  %v1151 = vadd.f32 0.0, %v1150
  %v1152 = vpop.f32.mrf.mxu0
  %v1153 = vadd.f32 0.0, %v1152
  %1154 = vmatmul.bf16.gmra.mxu0 %v453
  %v1155 = vpop.f32.mrf.mxu0
  %v1156 = vadd.f32 0.0, %v1155
  %v1157 = vpop.f32.mrf.mxu0
  %v1158 = vadd.f32 0.0, %v1157
  %1159 = vmatmul.bf16.gmra.mxu0 %v456
  %v1160 = vpop.f32.mrf.mxu0
  %v1161 = vadd.f32 0.0, %v1160
  %v1162 = vpop.f32.mrf.mxu0
  %v1163 = vadd.f32 0.0, %v1162
  %1164 = vmatmul.bf16.gmra.mxu0 %v459
  %v1165 = vpop.f32.mrf.mxu0
  %v1166 = vadd.f32 0.0, %v1165
  %v1167 = vpop.f32.mrf.mxu0
  %1168 = vdwg.mxu0
  %1169 = vmatpush.bf16.msra.mxu0 0
  %1170 = vmatpush.bf16.msra.mxu0 0
  %1171 = vmatpush.bf16.msra.mxu0 0
  %1172 = vmatpush.bf16.msra.mxu0 0
  %1173 = vmatpush.bf16.msra.mxu0 %v355
  %1174 = vmatpush.bf16.msra.mxu0 %v346
  %1175 = vmatpush.bf16.msra.mxu0 %v337
  %1176 = vmatpush.bf16.msra.mxu0 %v328
  %1177 = vmatmul.bf16.gmra.mxu0 %v396
  %v1178 = vpop.f32.mrf.mxu0
  %v1179 = vadd.f32 0.0, %v1178
  %v1180 = vpop.f32.mrf.mxu0
  %v1181 = vadd.f32 0.0, %v1180
  %1182 = vmatmul.bf16.gmra.mxu0 %v399
  %v1183 = vpop.f32.mrf.mxu0
  %v1184 = vadd.f32 0.0, %v1183
  %v1185 = vpop.f32.mrf.mxu0
  %v1186 = vadd.f32 0.0, %v1185
  %1187 = vmatmul.bf16.gmra.mxu0 %v402
  %v1188 = vpop.f32.mrf.mxu0
  %v1189 = vadd.f32 0.0, %v1188
  %v1190 = vpop.f32.mrf.mxu0
  %v1191 = vadd.f32 0.0, %v1190
  %1192 = vmatmul.bf16.gmra.mxu0 %v405
  %v1193 = vpop.f32.mrf.mxu0
  %v1194 = vadd.f32 0.0, %v1193
  %v1195 = vpop.f32.mrf.mxu0
  %v1196 = vadd.f32 0.0, %v1195
  %1197 = vmatmul.bf16.gmra.mxu0 %v408
  %v1198 = vpop.f32.mrf.mxu0
  %v1199 = vadd.f32 0.0, %v1198
  %v1200 = vpop.f32.mrf.mxu0
  %v1201 = vadd.f32 0.0, %v1200
  %1202 = vmatmul.bf16.gmra.mxu0 %v411
  %v1203 = vpop.f32.mrf.mxu0
  %v1204 = vadd.f32 0.0, %v1203
  %v1205 = vpop.f32.mrf.mxu0
  %v1206 = vadd.f32 0.0, %v1205
  %1207 = vmatmul.bf16.gmra.mxu0 %v414
  %v1208 = vpop.f32.mrf.mxu0
  %v1209 = vadd.f32 0.0, %v1208
  %v1210 = vpop.f32.mrf.mxu0
  %v1211 = vadd.f32 0.0, %v1210
  %1212 = vmatmul.bf16.gmra.mxu0 %v417
  %v1213 = vpop.f32.mrf.mxu0
  %v1214 = vadd.f32 0.0, %v1213
  %v1215 = vpop.f32.mrf.mxu0
  %v1216 = vadd.f32 0.0, %v1215
  %1217 = vmatmul.bf16.gmra.mxu0 %v420
  %v1218 = vpop.f32.mrf.mxu0
  %v1219 = vadd.f32 0.0, %v1218
  %v1220 = vpop.f32.mrf.mxu0
  %v1221 = vadd.f32 0.0, %v1220
  %1222 = vmatmul.bf16.gmra.mxu0 %v423
  %v1223 = vpop.f32.mrf.mxu0
  %v1224 = vadd.f32 0.0, %v1223
  %v1225 = vpop.f32.mrf.mxu0
  %v1226 = vadd.f32 0.0, %v1225
  %1227 = vmatmul.bf16.gmra.mxu0 %v426
  %v1228 = vpop.f32.mrf.mxu0
  %v1229 = vadd.f32 0.0, %v1228
  %v1230 = vpop.f32.mrf.mxu0
  %v1231 = vadd.f32 0.0, %v1230
  %1232 = vmatmul.bf16.gmra.mxu0 %v429
  %v1233 = vpop.f32.mrf.mxu0
  %v1234 = vadd.f32 0.0, %v1233
  %v1235 = vpop.f32.mrf.mxu0
  %v1236 = vadd.f32 0.0, %v1235
  %1237 = vmatmul.bf16.gmra.mxu0 %v432
  %v1238 = vpop.f32.mrf.mxu0
  %v1239 = vadd.f32 0.0, %v1238
  %v1240 = vpop.f32.mrf.mxu0
  %v1241 = vadd.f32 0.0, %v1240
  %1242 = vmatmul.bf16.gmra.mxu0 %v435
  %v1243 = vpop.f32.mrf.mxu0
  %v1244 = vadd.f32 0.0, %v1243
  %v1245 = vpop.f32.mrf.mxu0
  %v1246 = vadd.f32 0.0, %v1245
  %1247 = vmatmul.bf16.gmra.mxu0 %v438
  %v1248 = vpop.f32.mrf.mxu0
  %v1249 = vadd.f32 0.0, %v1248
  %v1250 = vpop.f32.mrf.mxu0
  %v1251 = vadd.f32 0.0, %v1250
  %1252 = vmatmul.bf16.gmra.mxu0 %v441
  %v1253 = vpop.f32.mrf.mxu0
  %v1254 = vadd.f32 0.0, %v1253
  %v1255 = vpop.f32.mrf.mxu0
  %v1256 = vadd.f32 0.0, %v1255
  %1257 = vmatmul.bf16.gmra.mxu0 %v444
  %v1258 = vpop.f32.mrf.mxu0
  %v1259 = vadd.f32 0.0, %v1258
  %v1260 = vpop.f32.mrf.mxu0
  %v1261 = vadd.f32 0.0, %v1260
  %1262 = vmatmul.bf16.gmra.mxu0 %v447
  %v1263 = vpop.f32.mrf.mxu0
  %v1264 = vadd.f32 0.0, %v1263
  %v1265 = vpop.f32.mrf.mxu0
  %v1266 = vadd.f32 0.0, %v1265
  %1267 = vmatmul.bf16.gmra.mxu0 %v450
  %v1268 = vpop.f32.mrf.mxu0
  %v1269 = vadd.f32 0.0, %v1268
  %v1270 = vpop.f32.mrf.mxu0
  %v1271 = vadd.f32 0.0, %v1270
  %1272 = vmatmul.bf16.gmra.mxu0 %v453
  %v1273 = vpop.f32.mrf.mxu0
  %v1274 = vadd.f32 0.0, %v1273
  %v1275 = vpop.f32.mrf.mxu0
  %v1276 = vadd.f32 0.0, %v1275
  %1277 = vmatmul.bf16.gmra.mxu0 %v456
  %v1278 = vpop.f32.mrf.mxu0
  %v1279 = vadd.f32 0.0, %v1278
  %v1280 = vpop.f32.mrf.mxu0
  %v1281 = vadd.f32 0.0, %v1280
  %1282 = vmatmul.bf16.gmra.mxu0 %v459
  %v1283 = vpop.f32.mrf.mxu0
  %v1284 = vadd.f32 0.0, %v1283
  %v1285 = vpop.f32.mrf.mxu0
  %1286 = vdwg.mxu0
  %1287 = vmatpush.bf16.msra.mxu0 0
  %1288 = vmatpush.bf16.msra.mxu0 0
  %1289 = vmatpush.bf16.msra.mxu0 0
  %1290 = vmatpush.bf16.msra.mxu0 0
  %1291 = vmatpush.bf16.msra.mxu0 %v356
  %1292 = vmatpush.bf16.msra.mxu0 %v347
  %1293 = vmatpush.bf16.msra.mxu0 %v338
  %1294 = vmatpush.bf16.msra.mxu0 %v329
  %1295 = vmatmul.bf16.gmra.mxu0 %v396
  %v1296 = vpop.f32.mrf.mxu0
  %v1297 = vadd.f32 0.0, %v1296
  %v1298 = vpop.f32.mrf.mxu0
  %v1299 = vadd.f32 0.0, %v1298
  %1300 = vmatmul.bf16.gmra.mxu0 %v399
  %v1301 = vpop.f32.mrf.mxu0
  %v1302 = vadd.f32 0.0, %v1301
  %v1303 = vpop.f32.mrf.mxu0
  %v1304 = vadd.f32 0.0, %v1303
  %1305 = vmatmul.bf16.gmra.mxu0 %v402
  %v1306 = vpop.f32.mrf.mxu0
  %v1307 = vadd.f32 0.0, %v1306
  %v1308 = vpop.f32.mrf.mxu0
  %v1309 = vadd.f32 0.0, %v1308
  %1310 = vmatmul.bf16.gmra.mxu0 %v405
  %v1311 = vpop.f32.mrf.mxu0
  %v1312 = vadd.f32 0.0, %v1311
  %v1313 = vpop.f32.mrf.mxu0
  %v1314 = vadd.f32 0.0, %v1313
  %1315 = vmatmul.bf16.gmra.mxu0 %v408
  %v1316 = vpop.f32.mrf.mxu0
  %v1317 = vadd.f32 0.0, %v1316
  %v1318 = vpop.f32.mrf.mxu0
  %v1319 = vadd.f32 0.0, %v1318
  %1320 = vmatmul.bf16.gmra.mxu0 %v411
  %v1321 = vpop.f32.mrf.mxu0
  %v1322 = vadd.f32 0.0, %v1321
  %v1323 = vpop.f32.mrf.mxu0
  %v1324 = vadd.f32 0.0, %v1323
  %1325 = vmatmul.bf16.gmra.mxu0 %v414
  %v1326 = vpop.f32.mrf.mxu0
  %v1327 = vadd.f32 0.0, %v1326
  %v1328 = vpop.f32.mrf.mxu0
  %v1329 = vadd.f32 0.0, %v1328
  %1330 = vmatmul.bf16.gmra.mxu0 %v417
  %v1331 = vpop.f32.mrf.mxu0
  %v1332 = vadd.f32 0.0, %v1331
  %v1333 = vpop.f32.mrf.mxu0
  %v1334 = vadd.f32 0.0, %v1333
  %1335 = vmatmul.bf16.gmra.mxu0 %v420
  %v1336 = vpop.f32.mrf.mxu0
  %v1337 = vadd.f32 0.0, %v1336
  %v1338 = vpop.f32.mrf.mxu0
  %v1339 = vadd.f32 0.0, %v1338
  %1340 = vmatmul.bf16.gmra.mxu0 %v423
  %v1341 = vpop.f32.mrf.mxu0
  %v1342 = vadd.f32 0.0, %v1341
  %v1343 = vpop.f32.mrf.mxu0
  %v1344 = vadd.f32 0.0, %v1343
  %1345 = vmatmul.bf16.gmra.mxu0 %v426
  %v1346 = vpop.f32.mrf.mxu0
  %v1347 = vadd.f32 0.0, %v1346
  %v1348 = vpop.f32.mrf.mxu0
  %v1349 = vadd.f32 0.0, %v1348
  %1350 = vmatmul.bf16.gmra.mxu0 %v429
  %v1351 = vpop.f32.mrf.mxu0
  %v1352 = vadd.f32 0.0, %v1351
  %v1353 = vpop.f32.mrf.mxu0
  %v1354 = vadd.f32 0.0, %v1353
  %1355 = vmatmul.bf16.gmra.mxu0 %v432
  %v1356 = vpop.f32.mrf.mxu0
  %v1357 = vadd.f32 0.0, %v1356
  %v1358 = vpop.f32.mrf.mxu0
  %v1359 = vadd.f32 0.0, %v1358
  %1360 = vmatmul.bf16.gmra.mxu0 %v435
  %v1361 = vpop.f32.mrf.mxu0
  %v1362 = vadd.f32 0.0, %v1361
  %v1363 = vpop.f32.mrf.mxu0
  %v1364 = vadd.f32 0.0, %v1363
  %1365 = vmatmul.bf16.gmra.mxu0 %v438
  %v1366 = vpop.f32.mrf.mxu0
  %v1367 = vadd.f32 0.0, %v1366
  %v1368 = vpop.f32.mrf.mxu0
  %v1369 = vadd.f32 0.0, %v1368
  %1370 = vmatmul.bf16.gmra.mxu0 %v441
  %v1371 = vpop.f32.mrf.mxu0
  %v1372 = vadd.f32 0.0, %v1371
  %v1373 = vpop.f32.mrf.mxu0
  %v1374 = vadd.f32 0.0, %v1373
  %1375 = vmatmul.bf16.gmra.mxu0 %v444
  %v1376 = vpop.f32.mrf.mxu0
  %v1377 = vadd.f32 0.0, %v1376
  %v1378 = vpop.f32.mrf.mxu0
  %v1379 = vadd.f32 0.0, %v1378
  %1380 = vmatmul.bf16.gmra.mxu0 %v447
  %v1381 = vpop.f32.mrf.mxu0
  %v1382 = vadd.f32 0.0, %v1381
  %v1383 = vpop.f32.mrf.mxu0
  %v1384 = vadd.f32 0.0, %v1383
  %1385 = vmatmul.bf16.gmra.mxu0 %v450
  %v1386 = vpop.f32.mrf.mxu0
  %v1387 = vadd.f32 0.0, %v1386
  %v1388 = vpop.f32.mrf.mxu0
  %v1389 = vadd.f32 0.0, %v1388
  %1390 = vmatmul.bf16.gmra.mxu0 %v453
  %v1391 = vpop.f32.mrf.mxu0
  %v1392 = vadd.f32 0.0, %v1391
  %v1393 = vpop.f32.mrf.mxu0
  %v1394 = vadd.f32 0.0, %v1393
  %1395 = vmatmul.bf16.gmra.mxu0 %v456
  %v1396 = vpop.f32.mrf.mxu0
  %v1397 = vadd.f32 0.0, %v1396
  %v1398 = vpop.f32.mrf.mxu0
  %v1399 = vadd.f32 0.0, %v1398
  %1400 = vmatmul.bf16.gmra.mxu0 %v459
  %v1401 = vpop.f32.mrf.mxu0
  %v1402 = vadd.f32 0.0, %v1401
  %v1403 = vpop.f32.mrf.mxu0
  %1404 = vdwg.mxu0
  %1405 = vmatpush.bf16.msra.mxu0 0
  %1406 = vmatpush.bf16.msra.mxu0 0
  %1407 = vmatpush.bf16.msra.mxu0 0
  %1408 = vmatpush.bf16.msra.mxu0 0
  %1409 = vmatpush.bf16.msra.mxu0 %v357
  %1410 = vmatpush.bf16.msra.mxu0 %v348
  %1411 = vmatpush.bf16.msra.mxu0 %v339
  %1412 = vmatpush.bf16.msra.mxu0 %v330
  %1413 = vmatmul.bf16.gmra.mxu0 %v396
  %v1414 = vpop.f32.mrf.mxu0
  %v1415 = vadd.f32 0.0, %v1414
  %v1416 = vpop.f32.mrf.mxu0
  %v1417 = vadd.f32 0.0, %v1416
  %1418 = vmatmul.bf16.gmra.mxu0 %v399
  %v1419 = vpop.f32.mrf.mxu0
  %v1420 = vadd.f32 0.0, %v1419
  %v1421 = vpop.f32.mrf.mxu0
  %v1422 = vadd.f32 0.0, %v1421
  %1423 = vmatmul.bf16.gmra.mxu0 %v402
  %v1424 = vpop.f32.mrf.mxu0
  %v1425 = vadd.f32 0.0, %v1424
  %v1426 = vpop.f32.mrf.mxu0
  %v1427 = vadd.f32 0.0, %v1426
  %1428 = vmatmul.bf16.gmra.mxu0 %v405
  %v1429 = vpop.f32.mrf.mxu0
  %v1430 = vadd.f32 0.0, %v1429
  %v1431 = vpop.f32.mrf.mxu0
  %v1432 = vadd.f32 0.0, %v1431
  %1433 = vmatmul.bf16.gmra.mxu0 %v408
  %v1434 = vpop.f32.mrf.mxu0
  %v1435 = vadd.f32 0.0, %v1434
  %v1436 = vpop.f32.mrf.mxu0
  %v1437 = vadd.f32 0.0, %v1436
  %1438 = vmatmul.bf16.gmra.mxu0 %v411
  %v1439 = vpop.f32.mrf.mxu0
  %v1440 = vadd.f32 0.0, %v1439
  %v1441 = vpop.f32.mrf.mxu0
  %v1442 = vadd.f32 0.0, %v1441
  %1443 = vmatmul.bf16.gmra.mxu0 %v414
  %v1444 = vpop.f32.mrf.mxu0
  %v1445 = vadd.f32 0.0, %v1444
  %v1446 = vpop.f32.mrf.mxu0
  %v1447 = vadd.f32 0.0, %v1446
  %1448 = vmatmul.bf16.gmra.mxu0 %v417
  %v1449 = vpop.f32.mrf.mxu0
  %v1450 = vadd.f32 0.0, %v1449
  %v1451 = vpop.f32.mrf.mxu0
  %v1452 = vadd.f32 0.0, %v1451
  %1453 = vmatmul.bf16.gmra.mxu0 %v420
  %v1454 = vpop.f32.mrf.mxu0
  %v1455 = vadd.f32 0.0, %v1454
  %v1456 = vpop.f32.mrf.mxu0
  %v1457 = vadd.f32 0.0, %v1456
  %1458 = vmatmul.bf16.gmra.mxu0 %v423
  %v1459 = vpop.f32.mrf.mxu0
  %v1460 = vadd.f32 0.0, %v1459
  %v1461 = vpop.f32.mrf.mxu0
  %v1462 = vadd.f32 0.0, %v1461
  %1463 = vmatmul.bf16.gmra.mxu0 %v426
  %v1464 = vpop.f32.mrf.mxu0
  %v1465 = vadd.f32 0.0, %v1464
  %v1466 = vpop.f32.mrf.mxu0
  %v1467 = vadd.f32 0.0, %v1466
  %1468 = vmatmul.bf16.gmra.mxu0 %v429
  %v1469 = vpop.f32.mrf.mxu0
  %v1470 = vadd.f32 0.0, %v1469
  %v1471 = vpop.f32.mrf.mxu0
  %v1472 = vadd.f32 0.0, %v1471
  %1473 = vmatmul.bf16.gmra.mxu0 %v432
  %v1474 = vpop.f32.mrf.mxu0
  %v1475 = vadd.f32 0.0, %v1474
  %v1476 = vpop.f32.mrf.mxu0
  %v1477 = vadd.f32 0.0, %v1476
  %1478 = vmatmul.bf16.gmra.mxu0 %v435
  %v1479 = vpop.f32.mrf.mxu0
  %v1480 = vadd.f32 0.0, %v1479
  %v1481 = vpop.f32.mrf.mxu0
  %v1482 = vadd.f32 0.0, %v1481
  %1483 = vmatmul.bf16.gmra.mxu0 %v438
  %v1484 = vpop.f32.mrf.mxu0
  %v1485 = vadd.f32 0.0, %v1484
  %v1486 = vpop.f32.mrf.mxu0
  %v1487 = vadd.f32 0.0, %v1486
  %1488 = vmatmul.bf16.gmra.mxu0 %v441
  %v1489 = vpop.f32.mrf.mxu0
  %v1490 = vadd.f32 0.0, %v1489
  %v1491 = vpop.f32.mrf.mxu0
  %v1492 = vadd.f32 0.0, %v1491
  %1493 = vmatmul.bf16.gmra.mxu0 %v444
  %v1494 = vpop.f32.mrf.mxu0
  %v1495 = vadd.f32 0.0, %v1494
  %v1496 = vpop.f32.mrf.mxu0
  %v1497 = vadd.f32 0.0, %v1496
  %1498 = vmatmul.bf16.gmra.mxu0 %v447
  %v1499 = vpop.f32.mrf.mxu0
  %v1500 = vadd.f32 0.0, %v1499
  %v1501 = vpop.f32.mrf.mxu0
  %v1502 = vadd.f32 0.0, %v1501
  %1503 = vmatmul.bf16.gmra.mxu0 %v450
  %v1504 = vpop.f32.mrf.mxu0
  %v1505 = vadd.f32 0.0, %v1504
  %v1506 = vpop.f32.mrf.mxu0
  %v1507 = vadd.f32 0.0, %v1506
  %1508 = vmatmul.bf16.gmra.mxu0 %v453
  %v1509 = vpop.f32.mrf.mxu0
  %v1510 = vadd.f32 0.0, %v1509
  %v1511 = vpop.f32.mrf.mxu0
  %v1512 = vadd.f32 0.0, %v1511
  %1513 = vmatmul.bf16.gmra.mxu0 %v456
  %v1514 = vpop.f32.mrf.mxu0
  %v1515 = vadd.f32 0.0, %v1514
  %v1516 = vpop.f32.mrf.mxu0
  %v1517 = vadd.f32 0.0, %v1516
  %1518 = vmatmul.bf16.gmra.mxu0 %v459
  %v1519 = vpop.f32.mrf.mxu0
  %v1520 = vadd.f32 0.0, %v1519
  %v1521 = vpop.f32.mrf.mxu0
  %1522 = vdwg.mxu0
  %1523 = vst [vmem:[%s3] sm:$0xff] %v471
  %1524 = vst [vmem:[%s3 + $0x8] sm:$0xff] %v589
  %1525 = vst [vmem:[%s3 + $0x10] sm:$0xff] %v707
  %1526 = vst [vmem:[%s3 + $0x18] sm:$0xff] %v825
  %1527 = vst [vmem:[%s3 + $0x20] sm:$0xff] %v943
  %1528 = vst [vmem:[%s3 + $0x28] sm:$0xff] %v1061
  %1529 = vst [vmem:[%s3 + $0x30] sm:$0xff] %v1179
  %1530 = vst [vmem:[%s3 + $0x38] sm:$0xff] %v1297
  %1531 = vst [vmem:[%s3 + $0x40] sm:$0xff] %v1415
  %1532 = vst [vmem:[%s3 + $0x48] sm:$0xff] %v473
  %1533 = vst [vmem:[%s3 + $0x50] sm:$0xff] %v591
  %1534 = vst [vmem:[%s3 + $0x58] sm:$0xff] %v709
  %1535 = vst [vmem:[%s3 + $0x60] sm:$0xff] %v827
  %1536 = vst [vmem:[%s3 + $0x68] sm:$0xff] %v945
  %1537 = vst [vmem:[%s3 + $0x70] sm:$0xff] %v1063
  %1538 = vst [vmem:[%s3 + $0x78] sm:$0xff] %v1181
  %1539 = vst [vmem:[%s3 + $0x80] sm:$0xff] %v1299
  %1540 = vst [vmem:[%s3 + $0x88] sm:$0xff] %v1417
  %1541 = vst [vmem:[%s3 + $0x90] sm:$0xff] %v476
  %1542 = vst [vmem:[%s3 + $0x98] sm:$0xff] %v594
  %1543 = vst [vmem:[%s3 + $0xa0] sm:$0xff] %v712
  %1544 = vst [vmem:[%s3 + $0xa8] sm:$0xff] %v830
  %1545 = vst [vmem:[%s3 + $0xb0] sm:$0xff] %v948
  %1546 = vst [vmem:[%s3 + $0xb8] sm:$0xff] %v1066
  %1547 = vst [vmem:[%s3 + $0xc0] sm:$0xff] %v1184
  %1548 = vst [vmem:[%s3 + $0xc8] sm:$0xff] %v1302
  %1549 = vst [vmem:[%s3 + $0xd0] sm:$0xff] %v1420
  %1550 = vst [vmem:[%s3 + $0xd8] sm:$0xff] %v478
  %1551 = vst [vmem:[%s3 + $0xe0] sm:$0xff] %v596
  %1552 = vst [vmem:[%s3 + $0xe8] sm:$0xff] %v714
  %1553 = vst [vmem:[%s3 + $0xf0] sm:$0xff] %v832
  %1554 = vst [vmem:[%s3 + $0xf8] sm:$0xff] %v950
  %1555 = vst [vmem:[%s3 + $0x100] sm:$0xff] %v1068
  %1556 = vst [vmem:[%s3 + $0x108] sm:$0xff] %v1186
  %1557 = vst [vmem:[%s3 + $0x110] sm:$0xff] %v1304
  %1558 = vst [vmem:[%s3 + $0x118] sm:$0xff] %v1422
  %1559 = vst [vmem:[%s3 + $0x120] sm:$0xff] %v481
  %1560 = vst [vmem:[%s3 + $0x128] sm:$0xff] %v599
  %1561 = vst [vmem:[%s3 + $0x130] sm:$0xff] %v717
  %1562 = vst [vmem:[%s3 + $0x138] sm:$0xff] %v835
  %1563 = vst [vmem:[%s3 + $0x140] sm:$0xff] %v953
  %1564 = vst [vmem:[%s3 + $0x148] sm:$0xff] %v1071
  %1565 = vst [vmem:[%s3 + $0x150] sm:$0xff] %v1189
  %1566 = vst [vmem:[%s3 + $0x158] sm:$0xff] %v1307
  %1567 = vst [vmem:[%s3 + $0x160] sm:$0xff] %v1425
  %1568 = vst [vmem:[%s3 + $0x168] sm:$0xff] %v483
  %1569 = vst [vmem:[%s3 + $0x170] sm:$0xff] %v601
  %1570 = vst [vmem:[%s3 + $0x178] sm:$0xff] %v719
  %1571 = vst [vmem:[%s3 + $0x180] sm:$0xff] %v837
  %1572 = vst [vmem:[%s3 + $0x188] sm:$0xff] %v955
  %1573 = vst [vmem:[%s3 + $0x190] sm:$0xff] %v1073
  %1574 = vst [vmem:[%s3 + $0x198] sm:$0xff] %v1191
  %1575 = vst [vmem:[%s3 + $0x1a0] sm:$0xff] %v1309
  %1576 = vst [vmem:[%s3 + $0x1a8] sm:$0xff] %v1427
  %1577 = vst [vmem:[%s3 + $0x1b0] sm:$0xff] %v486
  %1578 = vst [vmem:[%s3 + $0x1b8] sm:$0xff] %v604
  %1579 = vst [vmem:[%s3 + $0x1c0] sm:$0xff] %v722
  %1580 = vst [vmem:[%s3 + $0x1c8] sm:$0xff] %v840
  %1581 = vst [vmem:[%s3 + $0x1d0] sm:$0xff] %v958
  %1582 = vst [vmem:[%s3 + $0x1d8] sm:$0xff] %v1076
  %1583 = vst [vmem:[%s3 + $0x1e0] sm:$0xff] %v1194
  %1584 = vst [vmem:[%s3 + $0x1e8] sm:$0xff] %v1312
  %1585 = vst [vmem:[%s3 + $0x1f0] sm:$0xff] %v1430
  %1586 = vst [vmem:[%s3 + $0x1f8] sm:$0xff] %v488
  %1587 = vst [vmem:[%s3 + $0x200] sm:$0xff] %v606
  %1588 = vst [vmem:[%s3 + $0x208] sm:$0xff] %v724
  %1589 = vst [vmem:[%s3 + $0x210] sm:$0xff] %v842
  %1590 = vst [vmem:[%s3 + $0x218] sm:$0xff] %v960
  %1591 = vst [vmem:[%s3 + $0x220] sm:$0xff] %v1078
  %1592 = vst [vmem:[%s3 + $0x228] sm:$0xff] %v1196
  %1593 = vst [vmem:[%s3 + $0x230] sm:$0xff] %v1314
  %1594 = vst [vmem:[%s3 + $0x238] sm:$0xff] %v1432
  %1595 = vst [vmem:[%s3 + $0x240] sm:$0xff] %v491
  %1596 = vst [vmem:[%s3 + $0x248] sm:$0xff] %v609
  %1597 = vst [vmem:[%s3 + $0x250] sm:$0xff] %v727
  %1598 = vst [vmem:[%s3 + $0x258] sm:$0xff] %v845
  %1599 = vst [vmem:[%s3 + $0x260] sm:$0xff] %v963
  %1600 = vst [vmem:[%s3 + $0x268] sm:$0xff] %v1081
  %1601 = vst [vmem:[%s3 + $0x270] sm:$0xff] %v1199
  %1602 = vst [vmem:[%s3 + $0x278] sm:$0xff] %v1317
  %1603 = vst [vmem:[%s3 + $0x280] sm:$0xff] %v1435
  %1604 = vst [vmem:[%s3 + $0x288] sm:$0xff] %v493
  %1605 = vst [vmem:[%s3 + $0x290] sm:$0xff] %v611
  %1606 = vst [vmem:[%s3 + $0x298] sm:$0xff] %v729
  %1607 = vst [vmem:[%s3 + $0x2a0] sm:$0xff] %v847
  %1608 = vst [vmem:[%s3 + $0x2a8] sm:$0xff] %v965
  %1609 = vst [vmem:[%s3 + $0x2b0] sm:$0xff] %v1083
  %1610 = vst [vmem:[%s3 + $0x2b8] sm:$0xff] %v1201
  %1611 = vst [vmem:[%s3 + $0x2c0] sm:$0xff] %v1319
  %1612 = vst [vmem:[%s3 + $0x2c8] sm:$0xff] %v1437
  %1613 = vst [vmem:[%s3 + $0x2d0] sm:$0xff] %v496
  %1614 = vst [vmem:[%s3 + $0x2d8] sm:$0xff] %v614
  %1615 = vst [vmem:[%s3 + $0x2e0] sm:$0xff] %v732
  %1616 = vst [vmem:[%s3 + $0x2e8] sm:$0xff] %v850
  %1617 = vst [vmem:[%s3 + $0x2f0] sm:$0xff] %v968
  %1618 = vst [vmem:[%s3 + $0x2f8] sm:$0xff] %v1086
  %1619 = vst [vmem:[%s3 + $0x300] sm:$0xff] %v1204
  %1620 = vst [vmem:[%s3 + $0x308] sm:$0xff] %v1322
  %1621 = vst [vmem:[%s3 + $0x310] sm:$0xff] %v1440
  %1622 = vst [vmem:[%s3 + $0x318] sm:$0xff] %v498
  %1623 = vst [vmem:[%s3 + $0x320] sm:$0xff] %v616
  %1624 = vst [vmem:[%s3 + $0x328] sm:$0xff] %v734
  %1625 = vst [vmem:[%s3 + $0x330] sm:$0xff] %v852
  %1626 = vst [vmem:[%s3 + $0x338] sm:$0xff] %v970
  %1627 = vst [vmem:[%s3 + $0x340] sm:$0xff] %v1088
  %1628 = vst [vmem:[%s3 + $0x348] sm:$0xff] %v1206
  %1629 = vst [vmem:[%s3 + $0x350] sm:$0xff] %v1324
  %1630 = vst [vmem:[%s3 + $0x358] sm:$0xff] %v1442
  %1631 = vst [vmem:[%s3 + $0x360] sm:$0xff] %v501
  %1632 = vst [vmem:[%s3 + $0x368] sm:$0xff] %v619
  %1633 = vst [vmem:[%s3 + $0x370] sm:$0xff] %v737
  %1634 = vst [vmem:[%s3 + $0x378] sm:$0xff] %v855
  %1635 = vst [vmem:[%s3 + $0x380] sm:$0xff] %v973
  %1636 = vst [vmem:[%s3 + $0x388] sm:$0xff] %v1091
  %1637 = vst [vmem:[%s3 + $0x390] sm:$0xff] %v1209
  %1638 = vst [vmem:[%s3 + $0x398] sm:$0xff] %v1327
  %1639 = vst [vmem:[%s3 + $0x3a0] sm:$0xff] %v1445
  %1640 = vst [vmem:[%s3 + $0x3a8] sm:$0xff] %v503
  %1641 = vst [vmem:[%s3 + $0x3b0] sm:$0xff] %v621
  %1642 = vst [vmem:[%s3 + $0x3b8] sm:$0xff] %v739
  %1643 = vst [vmem:[%s3 + $0x3c0] sm:$0xff] %v857
  %1644 = vst [vmem:[%s3 + $0x3c8] sm:$0xff] %v975
  %1645 = vst [vmem:[%s3 + $0x3d0] sm:$0xff] %v1093
  %1646 = vst [vmem:[%s3 + $0x3d8] sm:$0xff] %v1211
  %1647 = vst [vmem:[%s3 + $0x3e0] sm:$0xff] %v1329
  %1648 = vst [vmem:[%s3 + $0x3e8] sm:$0xff] %v1447
  %1649 = vst [vmem:[%s3 + $0x3f0] sm:$0xff] %v506
  %1650 = vst [vmem:[%s3 + $0x3f8] sm:$0xff] %v624
  %1651 = vst [vmem:[%s3 + $0x400] sm:$0xff] %v742
  %1652 = vst [vmem:[%s3 + $0x408] sm:$0xff] %v860
  %1653 = vst [vmem:[%s3 + $0x410] sm:$0xff] %v978
  %1654 = vst [vmem:[%s3 + $0x418] sm:$0xff] %v1096
  %1655 = vst [vmem:[%s3 + $0x420] sm:$0xff] %v1214
  %1656 = vst [vmem:[%s3 + $0x428] sm:$0xff] %v1332
  %1657 = vst [vmem:[%s3 + $0x430] sm:$0xff] %v1450
  %1658 = vst [vmem:[%s3 + $0x438] sm:$0xff] %v508
  %1659 = vst [vmem:[%s3 + $0x440] sm:$0xff] %v626
  %1660 = vst [vmem:[%s3 + $0x448] sm:$0xff] %v744
  %1661 = vst [vmem:[%s3 + $0x450] sm:$0xff] %v862
  %1662 = vst [vmem:[%s3 + $0x458] sm:$0xff] %v980
  %1663 = vst [vmem:[%s3 + $0x460] sm:$0xff] %v1098
  %1664 = vst [vmem:[%s3 + $0x468] sm:$0xff] %v1216
  %1665 = vst [vmem:[%s3 + $0x470] sm:$0xff] %v1334
  %1666 = vst [vmem:[%s3 + $0x478] sm:$0xff] %v1452
  %1667 = vst [vmem:[%s3 + $0x480] sm:$0xff] %v511
  %1668 = vst [vmem:[%s3 + $0x488] sm:$0xff] %v629
  %1669 = vst [vmem:[%s3 + $0x490] sm:$0xff] %v747
  %1670 = vst [vmem:[%s3 + $0x498] sm:$0xff] %v865
  %1671 = vst [vmem:[%s3 + $0x4a0] sm:$0xff] %v983
  %1672 = vst [vmem:[%s3 + $0x4a8] sm:$0xff] %v1101
  %1673 = vst [vmem:[%s3 + $0x4b0] sm:$0xff] %v1219
  %1674 = vst [vmem:[%s3 + $0x4b8] sm:$0xff] %v1337
  %1675 = vst [vmem:[%s3 + $0x4c0] sm:$0xff] %v1455
  %1676 = vst [vmem:[%s3 + $0x4c8] sm:$0xff] %v513
  %1677 = vst [vmem:[%s3 + $0x4d0] sm:$0xff] %v631
  %1678 = vst [vmem:[%s3 + $0x4d8] sm:$0xff] %v749
  %1679 = vst [vmem:[%s3 + $0x4e0] sm:$0xff] %v867
  %1680 = vst [vmem:[%s3 + $0x4e8] sm:$0xff] %v985
  %1681 = vst [vmem:[%s3 + $0x4f0] sm:$0xff] %v1103
  %1682 = vst [vmem:[%s3 + $0x4f8] sm:$0xff] %v1221
  %1683 = vst [vmem:[%s3 + $0x500] sm:$0xff] %v1339
  %1684 = vst [vmem:[%s3 + $0x508] sm:$0xff] %v1457
  %1685 = vst [vmem:[%s3 + $0x510] sm:$0xff] %v516
  %1686 = vst [vmem:[%s3 + $0x518] sm:$0xff] %v634
  %1687 = vst [vmem:[%s3 + $0x520] sm:$0xff] %v752
  %1688 = vst [vmem:[%s3 + $0x528] sm:$0xff] %v870
  %1689 = vst [vmem:[%s3 + $0x530] sm:$0xff] %v988
  %1690 = vst [vmem:[%s3 + $0x538] sm:$0xff] %v1106
  %1691 = vst [vmem:[%s3 + $0x540] sm:$0xff] %v1224
  %1692 = vst [vmem:[%s3 + $0x548] sm:$0xff] %v1342
  %1693 = vst [vmem:[%s3 + $0x550] sm:$0xff] %v1460
  %1694 = vst [vmem:[%s3 + $0x558] sm:$0xff] %v518
  %1695 = vst [vmem:[%s3 + $0x560] sm:$0xff] %v636
  %1696 = vst [vmem:[%s3 + $0x568] sm:$0xff] %v754
  %1697 = vst [vmem:[%s3 + $0x570] sm:$0xff] %v872
  %1698 = vst [vmem:[%s3 + $0x578] sm:$0xff] %v990
  %1699 = vst [vmem:[%s3 + $0x580] sm:$0xff] %v1108
  %1700 = vst [vmem:[%s3 + $0x588] sm:$0xff] %v1226
  %1701 = vst [vmem:[%s3 + $0x590] sm:$0xff] %v1344
  %1702 = vst [vmem:[%s3 + $0x598] sm:$0xff] %v1462
  %1703 = vst [vmem:[%s3 + $0x5a0] sm:$0xff] %v521
  %1704 = vst [vmem:[%s3 + $0x5a8] sm:$0xff] %v639
  %1705 = vst [vmem:[%s3 + $0x5b0] sm:$0xff] %v757
  %1706 = vst [vmem:[%s3 + $0x5b8] sm:$0xff] %v875
  %1707 = vst [vmem:[%s3 + $0x5c0] sm:$0xff] %v993
  %1708 = vst [vmem:[%s3 + $0x5c8] sm:$0xff] %v1111
  %1709 = vst [vmem:[%s3 + $0x5d0] sm:$0xff] %v1229
  %1710 = vst [vmem:[%s3 + $0x5d8] sm:$0xff] %v1347
  %1711 = vst [vmem:[%s3 + $0x5e0] sm:$0xff] %v1465
  %1712 = vst [vmem:[%s3 + $0x5e8] sm:$0xff] %v523
  %1713 = vst [vmem:[%s3 + $0x5f0] sm:$0xff] %v641
  %1714 = vst [vmem:[%s3 + $0x5f8] sm:$0xff] %v759
  %1715 = vst [vmem:[%s3 + $0x600] sm:$0xff] %v877
  %1716 = vst [vmem:[%s3 + $0x608] sm:$0xff] %v995
  %1717 = vst [vmem:[%s3 + $0x610] sm:$0xff] %v1113
  %1718 = vst [vmem:[%s3 + $0x618] sm:$0xff] %v1231
  %1719 = vst [vmem:[%s3 + $0x620] sm:$0xff] %v1349
  %1720 = vst [vmem:[%s3 + $0x628] sm:$0xff] %v1467
  %1721 = vst [vmem:[%s3 + $0x630] sm:$0xff] %v526
  %1722 = vst [vmem:[%s3 + $0x638] sm:$0xff] %v644
  %1723 = vst [vmem:[%s3 + $0x640] sm:$0xff] %v762
  %1724 = vst [vmem:[%s3 + $0x648] sm:$0xff] %v880
  %1725 = vst [vmem:[%s3 + $0x650] sm:$0xff] %v998
  %1726 = vst [vmem:[%s3 + $0x658] sm:$0xff] %v1116
  %1727 = vst [vmem:[%s3 + $0x660] sm:$0xff] %v1234
  %1728 = vst [vmem:[%s3 + $0x668] sm:$0xff] %v1352
  %1729 = vst [vmem:[%s3 + $0x670] sm:$0xff] %v1470
  %1730 = vst [vmem:[%s3 + $0x678] sm:$0xff] %v528
  %1731 = vst [vmem:[%s3 + $0x680] sm:$0xff] %v646
  %1732 = vst [vmem:[%s3 + $0x688] sm:$0xff] %v764
  %1733 = vst [vmem:[%s3 + $0x690] sm:$0xff] %v882
  %1734 = vst [vmem:[%s3 + $0x698] sm:$0xff] %v1000
  %1735 = vst [vmem:[%s3 + $0x6a0] sm:$0xff] %v1118
  %1736 = vst [vmem:[%s3 + $0x6a8] sm:$0xff] %v1236
  %1737 = vst [vmem:[%s3 + $0x6b0] sm:$0xff] %v1354
  %1738 = vst [vmem:[%s3 + $0x6b8] sm:$0xff] %v1472
  %1739 = vst [vmem:[%s3 + $0x6c0] sm:$0xff] %v531
  %1740 = vst [vmem:[%s3 + $0x6c8] sm:$0xff] %v649
  %1741 = vst [vmem:[%s3 + $0x6d0] sm:$0xff] %v767
  %1742 = vst [vmem:[%s3 + $0x6d8] sm:$0xff] %v885
  %1743 = vst [vmem:[%s3 + $0x6e0] sm:$0xff] %v1003
  %1744 = vst [vmem:[%s3 + $0x6e8] sm:$0xff] %v1121
  %1745 = vst [vmem:[%s3 + $0x6f0] sm:$0xff] %v1239
  %1746 = vst [vmem:[%s3 + $0x6f8] sm:$0xff] %v1357
  %1747 = vst [vmem:[%s3 + $0x700] sm:$0xff] %v1475
  %1748 = vst [vmem:[%s3 + $0x708] sm:$0xff] %v533
  %1749 = vst [vmem:[%s3 + $0x710] sm:$0xff] %v651
  %1750 = vst [vmem:[%s3 + $0x718] sm:$0xff] %v769
  %1751 = vst [vmem:[%s3 + $0x720] sm:$0xff] %v887
  %1752 = vst [vmem:[%s3 + $0x728] sm:$0xff] %v1005
  %1753 = vst [vmem:[%s3 + $0x730] sm:$0xff] %v1123
  %1754 = vst [vmem:[%s3 + $0x738] sm:$0xff] %v1241
  %1755 = vst [vmem:[%s3 + $0x740] sm:$0xff] %v1359
  %1756 = vst [vmem:[%s3 + $0x748] sm:$0xff] %v1477
  %1757 = vst [vmem:[%s3 + $0x750] sm:$0xff] %v536
  %1758 = vst [vmem:[%s3 + $0x758] sm:$0xff] %v654
  %1759 = vst [vmem:[%s3 + $0x760] sm:$0xff] %v772
  %1760 = vst [vmem:[%s3 + $0x768] sm:$0xff] %v890
  %1761 = vst [vmem:[%s3 + $0x770] sm:$0xff] %v1008
  %1762 = vst [vmem:[%s3 + $0x778] sm:$0xff] %v1126
  %1763 = vst [vmem:[%s3 + $0x780] sm:$0xff] %v1244
  %1764 = vst [vmem:[%s3 + $0x788] sm:$0xff] %v1362
  %1765 = vst [vmem:[%s3 + $0x790] sm:$0xff] %v1480
  %1766 = vst [vmem:[%s3 + $0x798] sm:$0xff] %v538
  %1767 = vst [vmem:[%s3 + $0x7a0] sm:$0xff] %v656
  %1768 = vst [vmem:[%s3 + $0x7a8] sm:$0xff] %v774
  %1769 = vst [vmem:[%s3 + $0x7b0] sm:$0xff] %v892
  %1770 = vst [vmem:[%s3 + $0x7b8] sm:$0xff] %v1010
  %1771 = vst [vmem:[%s3 + $0x7c0] sm:$0xff] %v1128
  %1772 = vst [vmem:[%s3 + $0x7c8] sm:$0xff] %v1246
  %1773 = vst [vmem:[%s3 + $0x7d0] sm:$0xff] %v1364
  %1774 = vst [vmem:[%s3 + $0x7d8] sm:$0xff] %v1482
  %1775 = vst [vmem:[%s3 + $0x7e0] sm:$0xff] %v541
  %1776 = vst [vmem:[%s3 + $0x7e8] sm:$0xff] %v659
  %1777 = vst [vmem:[%s3 + $0x7f0] sm:$0xff] %v777
  %1778 = vst [vmem:[%s3 + $0x7f8] sm:$0xff] %v895
  %1779 = vst [vmem:[%s3 + $0x800] sm:$0xff] %v1013
  %1780 = vst [vmem:[%s3 + $0x808] sm:$0xff] %v1131
  %1781 = vst [vmem:[%s3 + $0x810] sm:$0xff] %v1249
  %1782 = vst [vmem:[%s3 + $0x818] sm:$0xff] %v1367
  %1783 = vst [vmem:[%s3 + $0x820] sm:$0xff] %v1485
  %1784 = vst [vmem:[%s3 + $0x828] sm:$0xff] %v543
  %1785 = vst [vmem:[%s3 + $0x830] sm:$0xff] %v661
  %1786 = vst [vmem:[%s3 + $0x838] sm:$0xff] %v779
  %1787 = vst [vmem:[%s3 + $0x840] sm:$0xff] %v897
  %1788 = vst [vmem:[%s3 + $0x848] sm:$0xff] %v1015
  %1789 = vst [vmem:[%s3 + $0x850] sm:$0xff] %v1133
  %1790 = vst [vmem:[%s3 + $0x858] sm:$0xff] %v1251
  %1791 = vst [vmem:[%s3 + $0x860] sm:$0xff] %v1369
  %1792 = vst [vmem:[%s3 + $0x868] sm:$0xff] %v1487
  %1793 = vst [vmem:[%s3 + $0x870] sm:$0xff] %v546
  %1794 = vst [vmem:[%s3 + $0x878] sm:$0xff] %v664
  %1795 = vst [vmem:[%s3 + $0x880] sm:$0xff] %v782
  %1796 = vst [vmem:[%s3 + $0x888] sm:$0xff] %v900
  %1797 = vst [vmem:[%s3 + $0x890] sm:$0xff] %v1018
  %1798 = vst [vmem:[%s3 + $0x898] sm:$0xff] %v1136
  %1799 = vst [vmem:[%s3 + $0x8a0] sm:$0xff] %v1254
  %1800 = vst [vmem:[%s3 + $0x8a8] sm:$0xff] %v1372
  %1801 = vst [vmem:[%s3 + $0x8b0] sm:$0xff] %v1490
  %1802 = vst [vmem:[%s3 + $0x8b8] sm:$0xff] %v548
  %1803 = vst [vmem:[%s3 + $0x8c0] sm:$0xff] %v666
  %1804 = vst [vmem:[%s3 + $0x8c8] sm:$0xff] %v784
  %1805 = vst [vmem:[%s3 + $0x8d0] sm:$0xff] %v902
  %1806 = vst [vmem:[%s3 + $0x8d8] sm:$0xff] %v1020
  %1807 = vst [vmem:[%s3 + $0x8e0] sm:$0xff] %v1138
  %1808 = vst [vmem:[%s3 + $0x8e8] sm:$0xff] %v1256
  %1809 = vst [vmem:[%s3 + $0x8f0] sm:$0xff] %v1374
  %1810 = vst [vmem:[%s3 + $0x8f8] sm:$0xff] %v1492
  %1811 = vst [vmem:[%s3 + $0x900] sm:$0xff] %v551
  %1812 = vst [vmem:[%s3 + $0x908] sm:$0xff] %v669
  %1813 = vst [vmem:[%s3 + $0x910] sm:$0xff] %v787
  %1814 = vst [vmem:[%s3 + $0x918] sm:$0xff] %v905
  %1815 = vst [vmem:[%s3 + $0x920] sm:$0xff] %v1023
  %1816 = vst [vmem:[%s3 + $0x928] sm:$0xff] %v1141
  %1817 = vst [vmem:[%s3 + $0x930] sm:$0xff] %v1259
  %1818 = vst [vmem:[%s3 + $0x938] sm:$0xff] %v1377
  %1819 = vst [vmem:[%s3 + $0x940] sm:$0xff] %v1495
  %1820 = vst [vmem:[%s3 + $0x948] sm:$0xff] %v553
  %1821 = vst [vmem:[%s3 + $0x950] sm:$0xff] %v671
  %1822 = vst [vmem:[%s3 + $0x958] sm:$0xff] %v789
  %1823 = vst [vmem:[%s3 + $0x960] sm:$0xff] %v907
  %1824 = vst [vmem:[%s3 + $0x968] sm:$0xff] %v1025
  %1825 = vst [vmem:[%s3 + $0x970] sm:$0xff] %v1143
  %1826 = vst [vmem:[%s3 + $0x978] sm:$0xff] %v1261
  %1827 = vst [vmem:[%s3 + $0x980] sm:$0xff] %v1379
  %1828 = vst [vmem:[%s3 + $0x988] sm:$0xff] %v1497
  %1829 = vst [vmem:[%s3 + $0x990] sm:$0xff] %v556
  %1830 = vst [vmem:[%s3 + $0x998] sm:$0xff] %v674
  %1831 = vst [vmem:[%s3 + $0x9a0] sm:$0xff] %v792
  %1832 = vst [vmem:[%s3 + $0x9a8] sm:$0xff] %v910
  %1833 = vst [vmem:[%s3 + $0x9b0] sm:$0xff] %v1028
  %1834 = vst [vmem:[%s3 + $0x9b8] sm:$0xff] %v1146
  %1835 = vst [vmem:[%s3 + $0x9c0] sm:$0xff] %v1264
  %1836 = vst [vmem:[%s3 + $0x9c8] sm:$0xff] %v1382
  %1837 = vst [vmem:[%s3 + $0x9d0] sm:$0xff] %v1500
  %1838 = vst [vmem:[%s3 + $0x9d8] sm:$0xff] %v558
  %1839 = vst [vmem:[%s3 + $0x9e0] sm:$0xff] %v676
  %1840 = vst [vmem:[%s3 + $0x9e8] sm:$0xff] %v794
  %1841 = vst [vmem:[%s3 + $0x9f0] sm:$0xff] %v912
  %1842 = vst [vmem:[%s3 + $0x9f8] sm:$0xff] %v1030
  %1843 = vst [vmem:[%s3 + $0xa00] sm:$0xff] %v1148
  %1844 = vst [vmem:[%s3 + $0xa08] sm:$0xff] %v1266
  %1845 = vst [vmem:[%s3 + $0xa10] sm:$0xff] %v1384
  %1846 = vst [vmem:[%s3 + $0xa18] sm:$0xff] %v1502
  %1847 = vst [vmem:[%s3 + $0xa20] sm:$0xff] %v561
  %1848 = vst [vmem:[%s3 + $0xa28] sm:$0xff] %v679
  %1849 = vst [vmem:[%s3 + $0xa30] sm:$0xff] %v797
  %1850 = vst [vmem:[%s3 + $0xa38] sm:$0xff] %v915
  %1851 = vst [vmem:[%s3 + $0xa40] sm:$0xff] %v1033
  %1852 = vst [vmem:[%s3 + $0xa48] sm:$0xff] %v1151
  %1853 = vst [vmem:[%s3 + $0xa50] sm:$0xff] %v1269
  %1854 = vst [vmem:[%s3 + $0xa58] sm:$0xff] %v1387
  %1855 = vst [vmem:[%s3 + $0xa60] sm:$0xff] %v1505
  %1856 = vst [vmem:[%s3 + $0xa68] sm:$0xff] %v563
  %1857 = vst [vmem:[%s3 + $0xa70] sm:$0xff] %v681
  %1858 = vst [vmem:[%s3 + $0xa78] sm:$0xff] %v799
  %1859 = vst [vmem:[%s3 + $0xa80] sm:$0xff] %v917
  %1860 = vst [vmem:[%s3 + $0xa88] sm:$0xff] %v1035
  %1861 = vst [vmem:[%s3 + $0xa90] sm:$0xff] %v1153
  %1862 = vst [vmem:[%s3 + $0xa98] sm:$0xff] %v1271
  %1863 = vst [vmem:[%s3 + $0xaa0] sm:$0xff] %v1389
  %1864 = vst [vmem:[%s3 + $0xaa8] sm:$0xff] %v1507
  %1865 = vst [vmem:[%s3 + $0xab0] sm:$0xff] %v566
  %1866 = vst [vmem:[%s3 + $0xab8] sm:$0xff] %v684
  %1867 = vst [vmem:[%s3 + $0xac0] sm:$0xff] %v802
  %1868 = vst [vmem:[%s3 + $0xac8] sm:$0xff] %v920
  %1869 = vst [vmem:[%s3 + $0xad0] sm:$0xff] %v1038
  %1870 = vst [vmem:[%s3 + $0xad8] sm:$0xff] %v1156
  %1871 = vst [vmem:[%s3 + $0xae0] sm:$0xff] %v1274
  %1872 = vst [vmem:[%s3 + $0xae8] sm:$0xff] %v1392
  %1873 = vst [vmem:[%s3 + $0xaf0] sm:$0xff] %v1510
  %1874 = vst [vmem:[%s3 + $0xaf8] sm:$0xff] %v568
  %1875 = vst [vmem:[%s3 + $0xb00] sm:$0xff] %v686
  %1876 = vst [vmem:[%s3 + $0xb08] sm:$0xff] %v804
  %1877 = vst [vmem:[%s3 + $0xb10] sm:$0xff] %v922
  %1878 = vst [vmem:[%s3 + $0xb18] sm:$0xff] %v1040
  %1879 = vst [vmem:[%s3 + $0xb20] sm:$0xff] %v1158
  %1880 = vst [vmem:[%s3 + $0xb28] sm:$0xff] %v1276
  %1881 = vst [vmem:[%s3 + $0xb30] sm:$0xff] %v1394
  %1882 = vst [vmem:[%s3 + $0xb38] sm:$0xff] %v1512
  %1883 = vst [vmem:[%s3 + $0xb40] sm:$0xff] %v571
  %1884 = vst [vmem:[%s3 + $0xb48] sm:$0xff] %v689
  %1885 = vst [vmem:[%s3 + $0xb50] sm:$0xff] %v807
  %1886 = vst [vmem:[%s3 + $0xb58] sm:$0xff] %v925
  %1887 = vst [vmem:[%s3 + $0xb60] sm:$0xff] %v1043
  %1888 = vst [vmem:[%s3 + $0xb68] sm:$0xff] %v1161
  %1889 = vst [vmem:[%s3 + $0xb70] sm:$0xff] %v1279
  %1890 = vst [vmem:[%s3 + $0xb78] sm:$0xff] %v1397
  %1891 = vst [vmem:[%s3 + $0xb80] sm:$0xff] %v1515
  %1892 = vst [vmem:[%s3 + $0xb88] sm:$0xff] %v573
  %1893 = vst [vmem:[%s3 + $0xb90] sm:$0xff] %v691
  %1894 = vst [vmem:[%s3 + $0xb98] sm:$0xff] %v809
  %1895 = vst [vmem:[%s3 + $0xba0] sm:$0xff] %v927
  %1896 = vst [vmem:[%s3 + $0xba8] sm:$0xff] %v1045
  %1897 = vst [vmem:[%s3 + $0xbb0] sm:$0xff] %v1163
  %1898 = vst [vmem:[%s3 + $0xbb8] sm:$0xff] %v1281
  %1899 = vst [vmem:[%s3 + $0xbc0] sm:$0xff] %v1399
  %1900 = vst [vmem:[%s3 + $0xbc8] sm:$0xff] %v1517
  %1901 = vst [vmem:[%s3 + $0xbd0] sm:$0xff] %v576
  %1902 = vst [vmem:[%s3 + $0xbd8] sm:$0xff] %v694
  %1903 = vst [vmem:[%s3 + $0xbe0] sm:$0xff] %v812
  %1904 = vst [vmem:[%s3 + $0xbe8] sm:$0xff] %v930
  %1905 = vst [vmem:[%s3 + $0xbf0] sm:$0xff] %v1048
  %1906 = vst [vmem:[%s3 + $0xbf8] sm:$0xff] %v1166
  %1907 = vst [vmem:[%s3 + $0xc00] sm:$0xff] %v1284
  %1908 = vst [vmem:[%s3 + $0xc08] sm:$0xff] %v1402
  %1909 = vst [vmem:[%s3 + $0xc10] sm:$0xff] %v1520
  // Predicated region
  $region14: #{decoder_forward.6} parent=0 // pred_check
    _
  $region15: #{decoder_forward.6} parent=0 // pred_check_branch
    %1911 = sbr.rel (0) target = $region17
  $region16: #{decoder_forward.6} parent=0 // pred_region
    _
  $region17: #{decoder_forward.6} parent=0 // pred_fallthru
    _
  // Predicated region
  $region18: #{decoder_forward.6} parent=0 // pred_check
    _
  $region19: #{decoder_forward.6} parent=0 // pred_check_branch
    %1913 = sbr.rel (0) target = $region21
  $region20: #{decoder_forward.6} parent=0 // pred_region
    _
  $region21: #{decoder_forward.6} parent=0 // pred_fallthru
    _

// kernel: decoder_forward.7
$region0: #{decoder_forward.7}
  #allocation0 [shape = 'u32[]', space=smem, size = 0x4, offset = 0x4, fixed_abs, tag = 'smem constant byte address 0x4 - core index']
  #allocation1 [shape = 'u32[72,128]{1,0:T(1,128)}', space=vmem, size = 0x9000, scoped, tag = 'internal scratch']
  %s0 = inlined_call_operand.vmem [shape: f32[1920,32], index: 0, kind: input, shape index: {}]
  %s1 = inlined_call_operand.vmem [shape: f32[1,32], index: 1, kind: input, shape index: {}]
  %s2 = inlined_call_operand.vmem [shape: bf16[32,128], index: 2, kind: input, shape index: {}]
  %s3 = inlined_call_operand.vmem [shape: f32[1920,128], index: 3, kind: output, shape index: {}]
  %s4 = sld [smem:[#allocation0]]
  $region45: #{decoder_forward.7} parent=0
    _
  %s6 = ssub.s32 1, %s4
  %s7 = scalar_select 0, %s6, %s4
  loop: start=0, step=1, limit=7
  $region2: #{decoder_forward.7} parent=0 // loop_pre_header
    _
  $region3: #{decoder_forward.7} parent=0 // loop_header
    %s9 = sphi 0, %s13
    %p10 = scmp.ge.s32.totalorder %s9, 7
    %s19 = sphi 0, %s21
    %s22 = sphi 0, %s19
    %s23 = sphi 0, %s22
    %s39 = sphi 0, %s23
    %s43 = sphi 0, %s43
    %s45 = sphi 0, %s43
    %s46 = sphi 0, %s45
    %s60 = sphi 0, %s46
    %s64 = sphi 0, %s64
    %s66 = sphi 0, %s64
    %s67 = sphi 0, %s66
    %s81 = sphi 0, %s67
    %s87 = sphi 0, %s89
    %s90 = sphi 0, %s87
    %s91 = sphi 0, %s90
    %s107 = sphi 0, %s91
  $region4: #{decoder_forward.7} parent=0 // loop_header_branch
    %12 = sbr.rel (%p10) target = $region8
  $region5: #{decoder_forward.7} parent=0 // loop_body
    %s14 = ssub.s32 %s9, 1
    %s15 = ssub.s32 %s9, 2
    %s16 = sadd.s32 %s9, 1
    %s17 = ssub.s32 %s9, %s16
    %p18 = scmp.eq.s32.totalorder %s17, 0
    %s20 = sadd.s32 %s19, 1
    %s21 = scalar_select %p18, %s19, %s20
    %p24 = pneg %p18
    %p25 = scmp.eq.s32.totalorder %s9, 4
    %p26 = por %p24, %p25
    %p27 = scmp.ne.s32.totalorder %s19, %s22
    %p28 = scmp.eq.s32.totalorder %s9, 0
    %p29 = por %p27, %p28
    %p30 = scmp.ne.s32.totalorder %s19, %s22
    %p31 = scmp.eq.s32.totalorder %s14, 4
    %p32 = por %p30, %p31
    %p33 = scmp.ne.s32.totalorder %s22, %s23
    %p34 = scmp.eq.s32.totalorder %s14, 0
    %p35 = por %p33, %p34
    %p36 = scmp.ne.s32.totalorder %s22, %s23
    %p37 = scmp.eq.s32.totalorder %s15, 4
    %p38 = por %p36, %p37
    %p40 = scmp.ne.s32.totalorder %s23, %s39
    %p41 = scmp.eq.s32.totalorder %s15, 0
    %p42 = por %p40, %p41
    %s44 = sadd.s32 %s43, 1
    %p47 = scmp.eq.s32.totalorder %s9, 4
    %p48 = scmp.ne.s32.totalorder %s43, %s45
    %p49 = scmp.eq.s32.totalorder %s9, 0
    %p50 = por %p48, %p49
    %p51 = scmp.ne.s32.totalorder %s43, %s45
    %p52 = scmp.eq.s32.totalorder %s14, 4
    %p53 = por %p51, %p52
    %p54 = scmp.ne.s32.totalorder %s45, %s46
    %p55 = scmp.eq.s32.totalorder %s14, 0
    %p56 = por %p54, %p55
    %p57 = scmp.ne.s32.totalorder %s45, %s46
    %p58 = scmp.eq.s32.totalorder %s15, 4
    %p59 = por %p57, %p58
    %p61 = scmp.ne.s32.totalorder %s46, %s60
    %p62 = scmp.eq.s32.totalorder %s15, 0
    %p63 = por %p61, %p62
    %s65 = sadd.s32 %s64, 1
    %p68 = scmp.eq.s32.totalorder %s9, 4
    %p69 = scmp.ne.s32.totalorder %s64, %s66
    %p70 = scmp.eq.s32.totalorder %s9, 0
    %p71 = por %p69, %p70
    %p72 = scmp.ne.s32.totalorder %s64, %s66
    %p73 = scmp.eq.s32.totalorder %s14, 4
    %p74 = por %p72, %p73
    %p75 = scmp.ne.s32.totalorder %s66, %s67
    %p76 = scmp.eq.s32.totalorder %s14, 0
    %p77 = por %p75, %p76
    %p78 = scmp.ne.s32.totalorder %s66, %s67
    %p79 = scmp.eq.s32.totalorder %s15, 4
    %p80 = por %p78, %p79
    %p82 = scmp.ne.s32.totalorder %s67, %s81
    %p83 = scmp.eq.s32.totalorder %s15, 0
    %p84 = por %p82, %p83
    %s85 = ssub.s32 %s9, %s16
    %p86 = scmp.eq.s32.totalorder %s85, 0
    %s88 = sadd.s32 %s87, 1
    %s89 = scalar_select %p86, %s87, %s88
    %p92 = pneg %p86
    %p93 = scmp.eq.s32.totalorder %s9, 4
    %p94 = por %p92, %p93
    %p95 = scmp.ne.s32.totalorder %s87, %s90
    %p96 = scmp.eq.s32.totalorder %s9, 0
    %p97 = por %p95, %p96
    %p98 = scmp.ne.s32.totalorder %s87, %s90
    %p99 = scmp.eq.s32.totalorder %s14, 4
    %p100 = por %p98, %p99
    %p101 = scmp.ne.s32.totalorder %s90, %s91
    %p102 = scmp.eq.s32.totalorder %s14, 0
    %p103 = por %p101, %p102
    %p104 = scmp.ne.s32.totalorder %s90, %s91
    %p105 = scmp.eq.s32.totalorder %s15, 4
    %p106 = por %p104, %p105
    %p108 = scmp.ne.s32.totalorder %s91, %s107
    %p109 = scmp.eq.s32.totalorder %s15, 0
    %p110 = por %p108, %p109
    %p111 = scmp.le.s32.totalorder 1, %s9
    %p112 = scmp.lt.s32.totalorder %s9, 6
    %p113 = pnand %p111, %p112
    %p114 = pneg %p113
    // Predicated region
    $region9: #{decoder_forward.7} parent=5 // pred_check
      _
    $region10: #{decoder_forward.7} parent=5 // pred_check_branch
      %116 = sbr.rel (%p113) target = $region12
    $region11: #{decoder_forward.7} parent=5 // pred_region
      %s117 = ssub.s32 %s9, 1
      // Predicated region
      $region13: #{decoder_forward.7} parent=11 // pred_check
        %p118 = pneg %p56
      $region14: #{decoder_forward.7} parent=11 // pred_check_branch
        %120 = sbr.rel (%p118) target = $region16
      $region15: #{decoder_forward.7} parent=11 // pred_region
        _
      $region16: #{decoder_forward.7} parent=11 // pred_fallthru
        _
      // Predicated region
      $region17: #{decoder_forward.7} parent=11 // pred_check
        %p121 = pneg %p77
      $region18: #{decoder_forward.7} parent=11 // pred_check_branch
        %123 = sbr.rel (%p121) target = $region20
      $region19: #{decoder_forward.7} parent=11 // pred_region
        _
      $region20: #{decoder_forward.7} parent=11 // pred_fallthru
        _
    $region12: #{decoder_forward.7} parent=5 // pred_fallthru
      _
    %p124 = scmp.lt.s32.totalorder %s9, 5
    // Predicated region
    $region21: #{decoder_forward.7} parent=5 // pred_check
      %p125 = pneg %p124
    $region22: #{decoder_forward.7} parent=5 // pred_check_branch
      %127 = sbr.rel (%p125) target = $region24
    $region23: #{decoder_forward.7} parent=5 // pred_region
      // Predicated region
      $region25: #{decoder_forward.7} parent=23 // pred_check
        %p128 = pneg %p29
      $region26: #{decoder_forward.7} parent=23 // pred_check_branch
        %130 = sbr.rel (%p128) target = $region28
      $region27: #{decoder_forward.7} parent=23 // pred_region
        %s131 = smul.u32 48, %s9
        %p132 = scmp.lt.s32.totalorder %s131, 239
        %s133 = scalar_select %p132, %s131, 239
        %s134 = smul.addr %s133, 8
        %s135 = scalar_lea.vmem %s0, %s134
        %s136 = smul.u32 48, %s9
      $region28: #{decoder_forward.7} parent=23 // pred_fallthru
        _
    $region24: #{decoder_forward.7} parent=5 // pred_fallthru
      _
    %p137 = scmp.le.s32.totalorder 1, %s9
    %p138 = scmp.lt.s32.totalorder %s9, 6
    %p139 = pnand %p137, %p138
    %p140 = pneg %p139
    // Predicated region
    $region29: #{decoder_forward.7} parent=5 // pred_check
      _
    $region30: #{decoder_forward.7} parent=5 // pred_check_branch
      %142 = sbr.rel (%p139) target = $region32
    $region31: #{decoder_forward.7} parent=5 // pred_region
      %s143 = ssub.s32 %s9, 1
      %s144 = smul.u32 48, %s14
      %p145 = scmp.lt.s32.totalorder %s144, 239
      %s146 = scalar_select %p145, %s144, 239
      %s147 = smul.addr %s146, 8
      %s148 = scalar_lea.vmem %s0, %s147
      %p149 = pneg %p35
      %p150 = pneg %p32
      %p151 = pneg %p56
      %p152 = pneg %p53
      %p153 = pneg %p77
      %p154 = pneg %p74
      %p155 = pneg %p103
      %p156 = pneg %p100
      %s157 = smul.u32 48, %s14
      %p158 = scmp.lt.s32.totalorder %s157, 239
      %s159 = scalar_select %p158, %s157, 239
      %s160 = smul.addr %s159, 8
      %s161 = scalar_lea.vmem %s3, %s160
      %s162 = smul.u32 48, %s14
      %p163 = scmp.lt.s32.totalorder %s162, 239
      %s164 = scalar_select %p163, %s162, 239
      %s165 = smul.addr %s164, 8
      %s166 = scalar_lea.vmem %s0, %s165
      %s167 = smul.u32 48, %s14
      %s168 = smul.u32 48, %s14
      %p169 = scmp.lt.s32.totalorder %s168, 239
      %s170 = scalar_select %p169, %s168, 239
      %s171 = smul.addr %s170, 8
      %s172 = scalar_lea.vmem %s3, %s171
      %s173 = smul.u32 48, %s14
      %v175 = vld [vmem:[%s166] sm:$0xff]
      %v176 = vld [vmem:[%s166 + $0x8] sm:$0xff]
      %v177 = vld [vmem:[%s166 + $0x10] sm:$0xff]
      %v178 = vld [vmem:[%s166 + $0x18] sm:$0xff]
      %v179 = vld [vmem:[%s166 + $0x20] sm:$0xff]
      %v180 = vld [vmem:[%s166 + $0x28] sm:$0xff]
      %v181 = vld [vmem:[%s166 + $0x30] sm:$0xff]
      %v182 = vld [vmem:[%s166 + $0x38] sm:$0xff]
      %v183 = vld [vmem:[%s166 + $0x40] sm:$0xff]
      %v184 = vld [vmem:[%s166 + $0x48] sm:$0xff]
      %v185 = vld [vmem:[%s166 + $0x50] sm:$0xff]
      %v186 = vld [vmem:[%s166 + $0x58] sm:$0xff]
      %v187 = vld [vmem:[%s166 + $0x60] sm:$0xff]
      %v188 = vld [vmem:[%s166 + $0x68] sm:$0xff]
      %v189 = vld [vmem:[%s166 + $0x70] sm:$0xff]
      %v190 = vld [vmem:[%s166 + $0x78] sm:$0xff]
      %v191 = vld [vmem:[%s166 + $0x80] sm:$0xff]
      %v192 = vld [vmem:[%s166 + $0x88] sm:$0xff]
      %v193 = vld [vmem:[%s166 + $0x90] sm:$0xff]
      %v194 = vld [vmem:[%s166 + $0x98] sm:$0xff]
      %v195 = vld [vmem:[%s166 + $0xa0] sm:$0xff]
      %v196 = vld [vmem:[%s166 + $0xa8] sm:$0xff]
      %v197 = vld [vmem:[%s166 + $0xb0] sm:$0xff]
      %v198 = vld [vmem:[%s166 + $0xb8] sm:$0xff]
      %v199 = vld [vmem:[%s166 + $0xc0] sm:$0xff]
      %v200 = vld [vmem:[%s166 + $0xc8] sm:$0xff]
      %v201 = vld [vmem:[%s166 + $0xd0] sm:$0xff]
      %v202 = vld [vmem:[%s166 + $0xd8] sm:$0xff]
      %v203 = vld [vmem:[%s166 + $0xe0] sm:$0xff]
      %v204 = vld [vmem:[%s166 + $0xe8] sm:$0xff]
      %v205 = vld [vmem:[%s166 + $0xf0] sm:$0xff]
      %v206 = vld [vmem:[%s166 + $0xf8] sm:$0xff]
      %v207 = vld [vmem:[%s166 + $0x100] sm:$0xff]
      %v208 = vld [vmem:[%s166 + $0x108] sm:$0xff]
      %v209 = vld [vmem:[%s166 + $0x110] sm:$0xff]
      %v210 = vld [vmem:[%s166 + $0x118] sm:$0xff]
      %v211 = vld [vmem:[%s166 + $0x120] sm:$0xff]
      %v212 = vld [vmem:[%s166 + $0x128] sm:$0xff]
      %v213 = vld [vmem:[%s166 + $0x130] sm:$0xff]
      %v214 = vld [vmem:[%s166 + $0x138] sm:$0xff]
      %v215 = vld [vmem:[%s166 + $0x140] sm:$0xff]
      %v216 = vld [vmem:[%s166 + $0x148] sm:$0xff]
      %v217 = vld [vmem:[%s166 + $0x150] sm:$0xff]
      %v218 = vld [vmem:[%s166 + $0x158] sm:$0xff]
      %v219 = vld [vmem:[%s166 + $0x160] sm:$0xff]
      %v220 = vld [vmem:[%s166 + $0x168] sm:$0xff]
      %v221 = vld [vmem:[%s166 + $0x170] sm:$0xff]
      %v222 = vld [vmem:[%s166 + $0x178] sm:$0xff]
      %v223 = vld [vmem:[%s1] sm:$0x1]
      %v225 = vperm.slane %v223, 0
      %v227 = vadd.f32 %v175, %v225
      %v228 = vadd.f32 %v176, %v225
      %v229 = vadd.f32 %v177, %v225
      %v230 = vadd.f32 %v178, %v225
      %v231 = vadd.f32 %v179, %v225
      %v232 = vadd.f32 %v180, %v225
      %v233 = vadd.f32 %v181, %v225
      %v234 = vadd.f32 %v182, %v225
      %v235 = vadd.f32 %v183, %v225
      %v236 = vadd.f32 %v184, %v225
      %v237 = vadd.f32 %v185, %v225
      %v238 = vadd.f32 %v186, %v225
      %v239 = vadd.f32 %v187, %v225
      %v240 = vadd.f32 %v188, %v225
      %v241 = vadd.f32 %v189, %v225
      %v242 = vadd.f32 %v190, %v225
      %v243 = vadd.f32 %v191, %v225
      %v244 = vadd.f32 %v192, %v225
      %v245 = vadd.f32 %v193, %v225
      %v246 = vadd.f32 %v194, %v225
      %v247 = vadd.f32 %v195, %v225
      %v248 = vadd.f32 %v196, %v225
      %v249 = vadd.f32 %v197, %v225
      %v250 = vadd.f32 %v198, %v225
      %v251 = vadd.f32 %v199, %v225
      %v252 = vadd.f32 %v200, %v225
      %v253 = vadd.f32 %v201, %v225
      %v254 = vadd.f32 %v202, %v225
      %v255 = vadd.f32 %v203, %v225
      %v256 = vadd.f32 %v204, %v225
      %v257 = vadd.f32 %v205, %v225
      %v258 = vadd.f32 %v206, %v225
      %v259 = vadd.f32 %v207, %v225
      %v260 = vadd.f32 %v208, %v225
      %v261 = vadd.f32 %v209, %v225
      %v262 = vadd.f32 %v210, %v225
      %v263 = vadd.f32 %v211, %v225
      %v264 = vadd.f32 %v212, %v225
      %v265 = vadd.f32 %v213, %v225
      %v266 = vadd.f32 %v214, %v225
      %v267 = vadd.f32 %v215, %v225
      %v268 = vadd.f32 %v216, %v225
      %v269 = vadd.f32 %v217, %v225
      %v270 = vadd.f32 %v218, %v225
      %v271 = vadd.f32 %v219, %v225
      %v272 = vadd.f32 %v220, %v225
      %v273 = vadd.f32 %v221, %v225
      %v274 = vadd.f32 %v222, %v225
      %v275 = vmax.f32 %v227, 0.0
      %v276 = vmax.f32 %v228, 0.0
      %v277 = vmax.f32 %v229, 0.0
      %v278 = vmax.f32 %v230, 0.0
      %v279 = vmax.f32 %v231, 0.0
      %v280 = vmax.f32 %v232, 0.0
      %v281 = vmax.f32 %v233, 0.0
      %v282 = vmax.f32 %v234, 0.0
      %v283 = vmax.f32 %v235, 0.0
      %v284 = vmax.f32 %v236, 0.0
      %v285 = vmax.f32 %v237, 0.0
      %v286 = vmax.f32 %v238, 0.0
      %v287 = vmax.f32 %v239, 0.0
      %v288 = vmax.f32 %v240, 0.0
      %v289 = vmax.f32 %v241, 0.0
      %v290 = vmax.f32 %v242, 0.0
      %v291 = vmax.f32 %v243, 0.0
      %v292 = vmax.f32 %v244, 0.0
      %v293 = vmax.f32 %v245, 0.0
      %v294 = vmax.f32 %v246, 0.0
      %v295 = vmax.f32 %v247, 0.0
      %v296 = vmax.f32 %v248, 0.0
      %v297 = vmax.f32 %v249, 0.0
      %v298 = vmax.f32 %v250, 0.0
      %v299 = vmax.f32 %v251, 0.0
      %v300 = vmax.f32 %v252, 0.0
      %v301 = vmax.f32 %v253, 0.0
      %v302 = vmax.f32 %v254, 0.0
      %v303 = vmax.f32 %v255, 0.0
      %v304 = vmax.f32 %v256, 0.0
      %v305 = vmax.f32 %v257, 0.0
      %v306 = vmax.f32 %v258, 0.0
      %v307 = vmax.f32 %v259, 0.0
      %v308 = vmax.f32 %v260, 0.0
      %v309 = vmax.f32 %v261, 0.0
      %v310 = vmax.f32 %v262, 0.0
      %v311 = vmax.f32 %v263, 0.0
      %v312 = vmax.f32 %v264, 0.0
      %v313 = vmax.f32 %v265, 0.0
      %v314 = vmax.f32 %v266, 0.0
      %v315 = vmax.f32 %v267, 0.0
      %v316 = vmax.f32 %v268, 0.0
      %v317 = vmax.f32 %v269, 0.0
      %v318 = vmax.f32 %v270, 0.0
      %v319 = vmax.f32 %v271, 0.0
      %v320 = vmax.f32 %v272, 0.0
      %v321 = vmax.f32 %v273, 0.0
      %v322 = vmax.f32 %v274, 0.0
      %v323 = vpack.c.bf16 %v276, %v275
      %v324 = vpack.c.bf16 %v278, %v277
      %v325 = vpack.c.bf16 %v280, %v279
      %v326 = vpack.c.bf16 %v282, %v281
      %v327 = vpack.c.bf16 %v284, %v283
      %v328 = vpack.c.bf16 %v286, %v285
      %v329 = vpack.c.bf16 %v288, %v287
      %v330 = vpack.c.bf16 %v290, %v289
      %v331 = vpack.c.bf16 %v292, %v291
      %v332 = vpack.c.bf16 %v294, %v293
      %v333 = vpack.c.bf16 %v296, %v295
      %v334 = vpack.c.bf16 %v298, %v297
      %v335 = vpack.c.bf16 %v300, %v299
      %v336 = vpack.c.bf16 %v302, %v301
      %v337 = vpack.c.bf16 %v304, %v303
      %v338 = vpack.c.bf16 %v306, %v305
      %v339 = vpack.c.bf16 %v308, %v307
      %v340 = vpack.c.bf16 %v310, %v309
      %v341 = vpack.c.bf16 %v312, %v311
      %v342 = vpack.c.bf16 %v314, %v313
      %v343 = vpack.c.bf16 %v316, %v315
      %v344 = vpack.c.bf16 %v318, %v317
      %v345 = vpack.c.bf16 %v320, %v319
      %v346 = vpack.c.bf16 %v322, %v321
      %v347 = vld [vmem:[%s2] sm:$0xf]
      %v348 = vld [vmem:[%s2 + $0x4] sm:$0xf]
      %v349 = vld [vmem:[%s2 + $0x8] sm:$0xf]
      %v350 = vld [vmem:[%s2 + $0xc] sm:$0xf]
      %v355 = vunpack.c.l.b16 %v347
      %v356 = vunpack.c.l.b16 %v348
      %v357 = vunpack.c.l.b16 %v349
      %v358 = vunpack.c.l.b16 %v350
      %v359 = vpack.c.b16 %v356, %v355
      %v360 = vpack.c.b16 %v358, %v357
      %vm363 = vcmask 261120
      %v365 = vsel %vm363, %v323, 0
      %v368 = vsel %vm363, %v324, 0
      %v371 = vsel %vm363, %v325, 0
      %v374 = vsel %vm363, %v326, 0
      %v377 = vsel %vm363, %v327, 0
      %v380 = vsel %vm363, %v328, 0
      %v383 = vsel %vm363, %v329, 0
      %v386 = vsel %vm363, %v330, 0
      %v389 = vsel %vm363, %v331, 0
      %v392 = vsel %vm363, %v332, 0
      %v395 = vsel %vm363, %v333, 0
      %v398 = vsel %vm363, %v334, 0
      %v401 = vsel %vm363, %v335, 0
      %v404 = vsel %vm363, %v336, 0
      %v407 = vsel %vm363, %v337, 0
      %v410 = vsel %vm363, %v338, 0
      %v413 = vsel %vm363, %v339, 0
      %v416 = vsel %vm363, %v340, 0
      %v419 = vsel %vm363, %v341, 0
      %v422 = vsel %vm363, %v342, 0
      %v425 = vsel %vm363, %v343, 0
      %v428 = vsel %vm363, %v344, 0
      %v431 = vsel %vm363, %v345, 0
      %v434 = vsel %vm363, %v346, 0
      %436 = vmatpush.bf16.msra.mxu0 0
      %437 = vmatpush.bf16.msra.mxu0 0
      %438 = vmatpush.bf16.msra.mxu0 0
      %439 = vmatpush.bf16.msra.mxu0 0
      %440 = vmatpush.bf16.msra.mxu0 0
      %441 = vmatpush.bf16.msra.mxu0 0
      %442 = vmatpush.bf16.msra.mxu0 %v360
      %443 = vmatpush.bf16.msra.mxu0 %v359
      %444 = vmatmul.bf16.gmra.mxu0 %v365
      %v445 = vpop.f32.mrf.mxu0
      %v446 = vadd.f32 0.0, %v445
      %v447 = vpop.f32.mrf.mxu0
      %v448 = vadd.f32 0.0, %v447
      %449 = vmatmul.bf16.gmra.mxu0 %v368
      %v450 = vpop.f32.mrf.mxu0
      %v451 = vadd.f32 0.0, %v450
      %v452 = vpop.f32.mrf.mxu0
      %v453 = vadd.f32 0.0, %v452
      %454 = vmatmul.bf16.gmra.mxu0 %v371
      %v455 = vpop.f32.mrf.mxu0
      %v456 = vadd.f32 0.0, %v455
      %v457 = vpop.f32.mrf.mxu0
      %v458 = vadd.f32 0.0, %v457
      %459 = vmatmul.bf16.gmra.mxu0 %v374
      %v460 = vpop.f32.mrf.mxu0
      %v461 = vadd.f32 0.0, %v460
      %v462 = vpop.f32.mrf.mxu0
      %v463 = vadd.f32 0.0, %v462
      %464 = vmatmul.bf16.gmra.mxu0 %v377
      %v465 = vpop.f32.mrf.mxu0
      %v466 = vadd.f32 0.0, %v465
      %v467 = vpop.f32.mrf.mxu0
      %v468 = vadd.f32 0.0, %v467
      %469 = vmatmul.bf16.gmra.mxu0 %v380
      %v470 = vpop.f32.mrf.mxu0
      %v471 = vadd.f32 0.0, %v470
      %v472 = vpop.f32.mrf.mxu0
      %v473 = vadd.f32 0.0, %v472
      %474 = vmatmul.bf16.gmra.mxu0 %v383
      %v475 = vpop.f32.mrf.mxu0
      %v476 = vadd.f32 0.0, %v475
      %v477 = vpop.f32.mrf.mxu0
      %v478 = vadd.f32 0.0, %v477
      %479 = vmatmul.bf16.gmra.mxu0 %v386
      %v480 = vpop.f32.mrf.mxu0
      %v481 = vadd.f32 0.0, %v480
      %v482 = vpop.f32.mrf.mxu0
      %v483 = vadd.f32 0.0, %v482
      %484 = vmatmul.bf16.gmra.mxu0 %v389
      %v485 = vpop.f32.mrf.mxu0
      %v486 = vadd.f32 0.0, %v485
      %v487 = vpop.f32.mrf.mxu0
      %v488 = vadd.f32 0.0, %v487
      %489 = vmatmul.bf16.gmra.mxu0 %v392
      %v490 = vpop.f32.mrf.mxu0
      %v491 = vadd.f32 0.0, %v490
      %v492 = vpop.f32.mrf.mxu0
      %v493 = vadd.f32 0.0, %v492
      %494 = vmatmul.bf16.gmra.mxu0 %v395
      %v495 = vpop.f32.mrf.mxu0
      %v496 = vadd.f32 0.0, %v495
      %v497 = vpop.f32.mrf.mxu0
      %v498 = vadd.f32 0.0, %v497
      %499 = vmatmul.bf16.gmra.mxu0 %v398
      %v500 = vpop.f32.mrf.mxu0
      %v501 = vadd.f32 0.0, %v500
      %v502 = vpop.f32.mrf.mxu0
      %v503 = vadd.f32 0.0, %v502
      %504 = vmatmul.bf16.gmra.mxu0 %v401
      %v505 = vpop.f32.mrf.mxu0
      %v506 = vadd.f32 0.0, %v505
      %v507 = vpop.f32.mrf.mxu0
      %v508 = vadd.f32 0.0, %v507
      %509 = vmatmul.bf16.gmra.mxu0 %v404
      %v510 = vpop.f32.mrf.mxu0
      %v511 = vadd.f32 0.0, %v510
      %v512 = vpop.f32.mrf.mxu0
      %v513 = vadd.f32 0.0, %v512
      %514 = vmatmul.bf16.gmra.mxu0 %v407
      %v515 = vpop.f32.mrf.mxu0
      %v516 = vadd.f32 0.0, %v515
      %v517 = vpop.f32.mrf.mxu0
      %v518 = vadd.f32 0.0, %v517
      %519 = vmatmul.bf16.gmra.mxu0 %v410
      %v520 = vpop.f32.mrf.mxu0
      %v521 = vadd.f32 0.0, %v520
      %v522 = vpop.f32.mrf.mxu0
      %v523 = vadd.f32 0.0, %v522
      %524 = vmatmul.bf16.gmra.mxu0 %v413
      %v525 = vpop.f32.mrf.mxu0
      %v526 = vadd.f32 0.0, %v525
      %v527 = vpop.f32.mrf.mxu0
      %v528 = vadd.f32 0.0, %v527
      %529 = vmatmul.bf16.gmra.mxu0 %v416
      %v530 = vpop.f32.mrf.mxu0
      %v531 = vadd.f32 0.0, %v530
      %v532 = vpop.f32.mrf.mxu0
      %v533 = vadd.f32 0.0, %v532
      %534 = vmatmul.bf16.gmra.mxu0 %v419
      %v535 = vpop.f32.mrf.mxu0
      %v536 = vadd.f32 0.0, %v535
      %v537 = vpop.f32.mrf.mxu0
      %v538 = vadd.f32 0.0, %v537
      %539 = vmatmul.bf16.gmra.mxu0 %v422
      %v540 = vpop.f32.mrf.mxu0
      %v541 = vadd.f32 0.0, %v540
      %v542 = vpop.f32.mrf.mxu0
      %v543 = vadd.f32 0.0, %v542
      %544 = vmatmul.bf16.gmra.mxu0 %v425
      %v545 = vpop.f32.mrf.mxu0
      %v546 = vadd.f32 0.0, %v545
      %v547 = vpop.f32.mrf.mxu0
      %v548 = vadd.f32 0.0, %v547
      %549 = vmatmul.bf16.gmra.mxu0 %v428
      %v550 = vpop.f32.mrf.mxu0
      %v551 = vadd.f32 0.0, %v550
      %v552 = vpop.f32.mrf.mxu0
      %v553 = vadd.f32 0.0, %v552
      %554 = vmatmul.bf16.gmra.mxu0 %v431
      %v555 = vpop.f32.mrf.mxu0
      %v556 = vadd.f32 0.0, %v555
      %v557 = vpop.f32.mrf.mxu0
      %v558 = vadd.f32 0.0, %v557
      %559 = vmatmul.bf16.gmra.mxu0 %v434
      %v560 = vpop.f32.mrf.mxu0
      %v561 = vadd.f32 0.0, %v560
      %v562 = vpop.f32.mrf.mxu0
      %v563 = vadd.f32 0.0, %v562
      %564 = vdwg.mxu0
      %565 = vst [vmem:[%s172] sm:$0xff] %v446
      %566 = vst [vmem:[%s172 + $0x8] sm:$0xff] %v448
      %567 = vst [vmem:[%s172 + $0x10] sm:$0xff] %v451
      %568 = vst [vmem:[%s172 + $0x18] sm:$0xff] %v453
      %569 = vst [vmem:[%s172 + $0x20] sm:$0xff] %v456
      %570 = vst [vmem:[%s172 + $0x28] sm:$0xff] %v458
      %571 = vst [vmem:[%s172 + $0x30] sm:$0xff] %v461
      %572 = vst [vmem:[%s172 + $0x38] sm:$0xff] %v463
      %573 = vst [vmem:[%s172 + $0x40] sm:$0xff] %v466
      %574 = vst [vmem:[%s172 + $0x48] sm:$0xff] %v468
      %575 = vst [vmem:[%s172 + $0x50] sm:$0xff] %v471
      %576 = vst [vmem:[%s172 + $0x58] sm:$0xff] %v473
      %577 = vst [vmem:[%s172 + $0x60] sm:$0xff] %v476
      %578 = vst [vmem:[%s172 + $0x68] sm:$0xff] %v478
      %579 = vst [vmem:[%s172 + $0x70] sm:$0xff] %v481
      %580 = vst [vmem:[%s172 + $0x78] sm:$0xff] %v483
      %581 = vst [vmem:[%s172 + $0x80] sm:$0xff] %v486
      %582 = vst [vmem:[%s172 + $0x88] sm:$0xff] %v488
      %583 = vst [vmem:[%s172 + $0x90] sm:$0xff] %v491
      %584 = vst [vmem:[%s172 + $0x98] sm:$0xff] %v493
      %585 = vst [vmem:[%s172 + $0xa0] sm:$0xff] %v496
      %586 = vst [vmem:[%s172 + $0xa8] sm:$0xff] %v498
      %587 = vst [vmem:[%s172 + $0xb0] sm:$0xff] %v501
      %588 = vst [vmem:[%s172 + $0xb8] sm:$0xff] %v503
      %589 = vst [vmem:[%s172 + $0xc0] sm:$0xff] %v506
      %590 = vst [vmem:[%s172 + $0xc8] sm:$0xff] %v508
      %591 = vst [vmem:[%s172 + $0xd0] sm:$0xff] %v511
      %592 = vst [vmem:[%s172 + $0xd8] sm:$0xff] %v513
      %593 = vst [vmem:[%s172 + $0xe0] sm:$0xff] %v516
      %594 = vst [vmem:[%s172 + $0xe8] sm:$0xff] %v518
      %595 = vst [vmem:[%s172 + $0xf0] sm:$0xff] %v521
      %596 = vst [vmem:[%s172 + $0xf8] sm:$0xff] %v523
      %597 = vst [vmem:[%s172 + $0x100] sm:$0xff] %v526
      %598 = vst [vmem:[%s172 + $0x108] sm:$0xff] %v528
      %599 = vst [vmem:[%s172 + $0x110] sm:$0xff] %v531
      %600 = vst [vmem:[%s172 + $0x118] sm:$0xff] %v533
      %601 = vst [vmem:[%s172 + $0x120] sm:$0xff] %v536
      %602 = vst [vmem:[%s172 + $0x128] sm:$0xff] %v538
      %603 = vst [vmem:[%s172 + $0x130] sm:$0xff] %v541
      %604 = vst [vmem:[%s172 + $0x138] sm:$0xff] %v543
      %605 = vst [vmem:[%s172 + $0x140] sm:$0xff] %v546
      %606 = vst [vmem:[%s172 + $0x148] sm:$0xff] %v548
      %607 = vst [vmem:[%s172 + $0x150] sm:$0xff] %v551
      %608 = vst [vmem:[%s172 + $0x158] sm:$0xff] %v553
      %609 = vst [vmem:[%s172 + $0x160] sm:$0xff] %v556
      %610 = vst [vmem:[%s172 + $0x168] sm:$0xff] %v558
      %611 = vst [vmem:[%s172 + $0x170] sm:$0xff] %v561
      %612 = vst [vmem:[%s172 + $0x178] sm:$0xff] %v563
      %s613 = smul.u32 48, %s14
      %p614 = scmp.lt.s32.totalorder %s613, 239
      %s615 = scalar_select %p614, %s613, 239
      %s616 = smul.addr %s615, 8
      %s617 = scalar_lea.vmem %s3, %s616
      // Predicated region
      $region33: #{decoder_forward.7} parent=31 // pred_check
        %p618 = pneg %p100
      $region34: #{decoder_forward.7} parent=31 // pred_check_branch
        %620 = sbr.rel (%p618) target = $region36
      $region35: #{decoder_forward.7} parent=31 // pred_region
        %s621 = smul.u32 48, %s14
      $region36: #{decoder_forward.7} parent=31 // pred_fallthru
        _
    $region32: #{decoder_forward.7} parent=5 // pred_fallthru
      _
    %p622 = scmp.le.s32.totalorder 2, %s9
    // Predicated region
    $region37: #{decoder_forward.7} parent=5 // pred_check
      %p623 = pneg %p622
    $region38: #{decoder_forward.7} parent=5 // pred_check_branch
      %625 = sbr.rel (%p623) target = $region40
    $region39: #{decoder_forward.7} parent=5 // pred_region
      %s626 = ssub.s32 %s9, 2
      // Predicated region
      $region41: #{decoder_forward.7} parent=39 // pred_check
        %p627 = pneg %p106
      $region42: #{decoder_forward.7} parent=39 // pred_check_branch
        %629 = sbr.rel (%p627) target = $region44
      $region43: #{decoder_forward.7} parent=39 // pred_region
        %s630 = smul.u32 48, %s15
        %p631 = scmp.lt.s32.totalorder %s630, 239
        %s632 = scalar_select %p631, %s630, 239
        %s633 = smul.addr %s632, 8
        %s634 = scalar_lea.vmem %s3, %s633
      $region44: #{decoder_forward.7} parent=39 // pred_fallthru
        _
    $region40: #{decoder_forward.7} parent=5 // pred_fallthru
      _
  $region6: #{decoder_forward.7} parent=0 // loop_footer
    %s13 = sadd.s32 1, %s9
  $region7: #{decoder_forward.7} parent=0 // loop_footer_branch
    %8 = sbr.rel target = $region3
  $region8: #{decoder_forward.7} parent=0 // loop_exit
    _

</llo_original>
